<compile_context>
chip_gen: v7x
topology: tpu7x:2x2x1
jax: 0.10.0
libtpu: 0.0.40
codegen_flags: <defaults>
</compile_context>

<pallas_src>
import functools
import math

import jax
import jax.numpy as jnp
from jax.experimental import pallas as pl
from jax.experimental.pallas import tpu as pltpu


# ----------------------------- in-kernel helpers -----------------------------

def _layer_norm(x, gamma, beta, eps=1e-6):
    # x: (T, D) f32; gamma/beta: (1, D) f32
    mean = jnp.mean(x, axis=-1, keepdims=True)
    var = jnp.mean((x - mean) ** 2, axis=-1, keepdims=True)
    return (x - mean) * jax.lax.rsqrt(var + eps) * gamma + beta


def _softmax_rows(s):
    # numerically-stable row softmax; divide goes to the EUP (approx reciprocal)
    m = jnp.max(s, axis=-1, keepdims=True)
    e = jnp.exp(s - m)
    return e * pl.reciprocal(jnp.sum(e, axis=-1, keepdims=True), approx=True)


def _heads_attention(q_all, k_all, v_all, bias, wo_ref, num_heads):
    """Per-head scaled dot-product attention + accumulated output projection.

    q_all: (T, H*d_k) f32    k_all/v_all: (S, H*d_k) f32
    bias : additive mask bias broadcastable to (T, S)  (0 or -1e9)
    wo_ref: (1, H, d_k, D) bf16 — per-head output projection (accumulated, no concat)
    """
    T = q_all.shape[0]
    D = wo_ref.shape[-1]
    d_k = wo_ref.shape[-2]
    scale = 1.0 / math.sqrt(d_k)

    out = jnp.zeros((T, D), jnp.float32)
    for h in range(num_heads):  # static unroll (H is small)
        sl = slice(h * d_k, (h + 1) * d_k)
        q_h = q_all[:, sl]                                  # (T, d_k)
        k_h = k_all[:, sl]                                  # (S, d_k)
        v_h = v_all[:, sl]                                  # (S, d_k)

        # scores: contract over d_k without an explicit transpose of k_h
        s = jax.lax.dot_general(
            q_h, k_h, (((1,), (1,)), ((), ())),
            preferred_element_type=jnp.float32) * scale + bias   # (T, S)
        p = _softmax_rows(s)

        ctx = jnp.dot(p.astype(jnp.bfloat16), v_h.astype(jnp.bfloat16),
                      preferred_element_type=jnp.float32)         # (T, d_k)
        out = out + jnp.dot(ctx.astype(jnp.bfloat16), wo_ref[0, h],
                            preferred_element_type=jnp.float32)   # accum, no concat
    return out


# ------------------------------ fused Pallas kernel ---------------------------

def fused_decoder_kernel(
    tgt_ref, src_ref, tbias_ref, sbias_ref,
    wqkv_self_ref, bqkv_self_ref, wo_self_ref, bo_self_ref,
    wq_cross_ref, bq_cross_ref, wkv_cross_ref, bkv_cross_ref,
    wo_cross_ref, bo_cross_ref,
    ln_g_ref, ln_b_ref,
    w1_ref, b1_ref, w2_ref, b2_ref,
    fin_g_ref, fin_b_ref,
    out_ref,
    x_vmem,
    *, num_heads):
    layer = pl.program_id(1)
    n_layers = pl.num_programs(1)

    # Load the target activation into VMEM scratch once per batch element.
    @pl.when(layer == 0)
    def _():
        x_vmem[...] = tgt_ref[0]

    x = x_vmem[...]            # (T, D) f32, resident across the layer axis
    src = src_ref[0]           # (S, D) bf16 (only feeds matmuls)
    tbias = tbias_ref[0]       # (T, T) additive bias
    sbias = sbias_ref[0]       # (1, S) additive bias (broadcasts over query rows)
    D = x.shape[-1]

    # ---- masked self-attention + pre-norm residual ----
    y = _layer_norm(x, ln_g_ref[0, 0], ln_b_ref[0, 0])
    qkv = jnp.dot(y.astype(jnp.bfloat16), wqkv_self_ref[0],
                  preferred_element_type=jnp.float32) + bqkv_self_ref[0]   # (T, 3D)
    x = x + _heads_attention(qkv[:, :D], qkv[:, D:2 * D], qkv[:, 2 * D:],
                             tbias, wo_self_ref, num_heads) + bo_self_ref[0]

    # ---- cross-attention (queries from target, K/V from encoder output) ----
    y = _layer_norm(x, ln_g_ref[0, 1], ln_b_ref[0, 1])
    q = jnp.dot(y.astype(jnp.bfloat16), wq_cross_ref[0],
                preferred_element_type=jnp.float32) + bq_cross_ref[0]      # (T, D)
    kv = jnp.dot(src, wkv_cross_ref[0],
                 preferred_element_type=jnp.float32) + bkv_cross_ref[0]    # (S, 2D)
    x = x + _heads_attention(q, kv[:, :D], kv[:, D:],
                             sbias, wo_cross_ref, num_heads) + bo_cross_ref[0]

    # ---- position-wise feed-forward + pre-norm residual ----
    y = _layer_norm(x, ln_g_ref[0, 2], ln_b_ref[0, 2])
    h = jnp.dot(y.astype(jnp.bfloat16), w1_ref[0],
                preferred_element_type=jnp.float32) + b1_ref[0]
    h = jnp.maximum(h, 0.0)
    x = x + jnp.dot(h.astype(jnp.bfloat16), w2_ref[0],
                    preferred_element_type=jnp.float32) + b2_ref[0]

    x_vmem[...] = x

    # ---- final LayerNorm fused as an epilogue on the last layer ----
    @pl.when(layer == n_layers - 1)
    def _():
        out_ref[0] = _layer_norm(x, fin_g_ref[...], fin_b_ref[...])


# ---------------------------------- wrapper -----------------------------------

def decoder_forward(src, target, src_mask, target_mask, params, *, num_heads):
    B, T, D = target.shape
    S = src.shape[1]
    L = params["w_qkv_self"].shape[0]

    # Hoist masks into additive biases once (0 keep / -1e9 masked), drop singleton dims.
    neg = jnp.float32(-1e9)
    tgt_bias = jnp.where(target_mask == 0.0, neg, 0.0).astype(jnp.float32).reshape(B, T, T)
    src_bias = jnp.where(src_mask == 0.0, neg, 0.0).astype(jnp.float32).reshape(B, 1, S)

    # Encoder output only feeds (bf16) matmuls -> cast once, halve its DMA.
    src_bf = src.astype(jnp.bfloat16)

    def act_spec(shape):                           # indexed by batch, reused across layers
        n = len(shape)
        return pl.BlockSpec((1,) + tuple(shape[1:]),
                            lambda b, l, n=n: (b,) + (0,) * (n - 1))

    def layer_spec(shape):                         # indexed by layer (double-buffered)
        n = len(shape)
        return pl.BlockSpec((1,) + tuple(shape[1:]),
                            lambda b, l, n=n: (l,) + (0,) * (n - 1))

    def const_spec(shape):                         # loaded once
        n = len(shape)
        return pl.BlockSpec(tuple(shape), lambda b, l, n=n: (0,) * n)

    kernel = functools.partial(fused_decoder_kernel, num_heads=num_heads)

    return pl.pallas_call(
        kernel,
        out_shape=jax.ShapeDtypeStruct((B, T, D), jnp.float32),
        grid=(B, L),
        in_specs=[
            act_spec((B, T, D)),                       # target
            act_spec((B, S, D)),                       # encoder output (bf16)
            act_spec((B, T, T)),                       # target additive bias
            act_spec((B, 1, S)),                       # source additive bias
            layer_spec(params["w_qkv_self"].shape),
            layer_spec(params["b_qkv_self"].shape),
            layer_spec(params["w_o_self"].shape),
            layer_spec(params["b_o_self"].shape),
            layer_spec(params["w_q_cross"].shape),
            layer_spec(params["b_q_cross"].shape),
            layer_spec(params["w_kv_cross"].shape),
            layer_spec(params["b_kv_cross"].shape),
            layer_spec(params["w_o_cross"].shape),
            layer_spec(params["b_o_cross"].shape),
            layer_spec(params["ln_gamma"].shape),
            layer_spec(params["ln_beta"].shape),
            layer_spec(params["ffn_w1"].shape),
            layer_spec(params["ffn_b1"].shape),
            layer_spec(params["ffn_w2"].shape),
            layer_spec(params["ffn_b2"].shape),
            const_spec(params["final_gamma"].shape),
            const_spec(params["final_beta"].shape),
        ],
        out_specs=pl.BlockSpec((1, T, D), lambda b, l: (b, 0, 0)),
        scratch_shapes=[pltpu.VMEM((T, D), jnp.float32)],
        compiler_params=pltpu.CompilerParams(
            dimension_semantics=("parallel", "arbitrary")),
    )(target, src_bf, tgt_bias, src_bias,
      params["w_qkv_self"], params["b_qkv_self"], params["w_o_self"], params["b_o_self"],
      params["w_q_cross"], params["b_q_cross"], params["w_kv_cross"], params["b_kv_cross"],
      params["w_o_cross"], params["b_o_cross"],
      params["ln_gamma"], params["ln_beta"],
      params["ffn_w1"], params["ffn_b1"], params["ffn_w2"], params["ffn_b2"],
      params["final_gamma"], params["final_beta"])


# ------------------------- deterministic parameter init ----------------------
# Layout notes (mapping from PyTorch nn.Linear weights W with y = x @ W.T):
#   fused QKV (D, 3D)  = concat([Wq.T, Wk.T, Wv.T], axis=1), heads contiguous per block.
#   per-head Wo (H, d_k, D) = Wo.T.reshape(H, d_k, D).

def init_decoder_params(key, num_layers, d_model, num_heads, d_ffn):
    L, H, D = num_layers, num_heads, d_model
    d_k = D // H
    ks = jax.random.split(key, 7)
    s_in = 1.0 / math.sqrt(D)
    s_ffn = 1.0 / math.sqrt(d_ffn)

    def w(k, shape, scale):
        # weights stored in bf16 (MXU-native operands, half the weight DMA bytes)
        return (jax.random.normal(k, shape, jnp.float32) * scale).astype(jnp.bfloat16)

    return {
        "w_qkv_self": w(ks[0], (L, D, 3 * D), s_in),
        "b_qkv_self": jnp.zeros((L, 1, 3 * D), jnp.float32),
        "w_o_self":   w(ks[1], (L, H, d_k, D), s_in),
        "b_o_self":   jnp.zeros((L, 1, D), jnp.float32),
        "w_q_cross":  w(ks[2], (L, D, D), s_in),
        "b_q_cross":  jnp.zeros((L, 1, D), jnp.float32),
        "w_kv_cross": w(ks[3], (L, D, 2 * D), s_in),
        "b_kv_cross": jnp.zeros((L, 1, 2 * D), jnp.float32),
        "w_o_cross":  w(ks[4], (L, H, d_k, D), s_in),
        "b_o_cross":  jnp.zeros((L, 1, D), jnp.float32),
        "ln_gamma":   jnp.ones((L, 3, 1, D), jnp.float32),
        "ln_beta":    jnp.zeros((L, 3, 1, D), jnp.float32),
        "ffn_w1":     w(ks[5], (L, D, d_ffn), s_in),
        "ffn_b1":     jnp.zeros((L, 1, d_ffn), jnp.float32),
        "ffn_w2":     w(ks[6], (L, d_ffn, D), s_ffn),
        "ffn_b2":     jnp.zeros((L, 1, D), jnp.float32),
        "final_gamma": jnp.ones((1, D), jnp.float32),
        "final_beta":  jnp.zeros((1, D), jnp.float32),
    }


# ----------------------------------- main -------------------------------------

if __name__ == "__main__":
    # TransformerConfig-equivalent small shapes
    batch = 2
    src_seq = 8
    tgt_seq = 8
    d_model = 32
    num_heads = 4
    d_ffn = 64
    num_layers = 2

    key = jax.random.PRNGKey(0)
    k_src, k_tgt, k_params = jax.random.split(key, 3)

    src = jax.random.normal(k_src, (batch, src_seq, d_model), jnp.float32)
    target = jax.random.normal(k_tgt, (batch, tgt_seq, d_model), jnp.float32)

    # src mask: (B, 1, 1, S) — mask out the last src position of batch element 1
    src_mask = jnp.ones((batch, 1, 1, src_seq), jnp.float32)
    src_mask = src_mask.at[1, 0, 0, -1].set(0.0)

    # target mask: causal (B, 1, T, T)
    causal = jnp.tril(jnp.ones((tgt_seq, tgt_seq), jnp.float32))
    target_mask = jnp.broadcast_to(causal, (batch, 1, tgt_seq, tgt_seq))

    params = init_decoder_params(k_params, num_layers, d_model, num_heads, d_ffn)

    fwd = jax.jit(functools.partial(decoder_forward, num_heads=num_heads))
    out = fwd(src, target, src_mask, target_mask, params)
    out = jax.block_until_ready(out)

    assert out.shape == (batch, tgt_seq, d_model)
    assert bool(jnp.all(jnp.isfinite(out)))
    # TODO(synk): dropout layers are treated as eval-mode no-ops (inference forward).
    print("KERNEL_OK")
</pallas_src>

<mosaic_0001>
module attributes {stable_mosaic.version = 11 : i64} {
  func.func @fused_decoder_kernel(%arg0: i32, %arg1: i32, %arg2: memref<1x8x32xf32, #tpu.memory_space<vmem>>, %arg3: memref<1x8x32xbf16, #tpu.memory_space<vmem>>, %arg4: memref<1x8x8xf32, #tpu.memory_space<vmem>>, %arg5: memref<1x1x8xf32, #tpu.memory_space<vmem>>, %arg6: memref<1x32x96xbf16, #tpu.memory_space<vmem>>, %arg7: memref<1x1x96xf32, #tpu.memory_space<vmem>>, %arg8: memref<1x4x8x32xbf16, #tpu.memory_space<vmem>>, %arg9: memref<1x1x32xf32, #tpu.memory_space<vmem>>, %arg10: memref<1x32x32xbf16, #tpu.memory_space<vmem>>, %arg11: memref<1x1x32xf32, #tpu.memory_space<vmem>>, %arg12: memref<1x32x64xbf16, #tpu.memory_space<vmem>>, %arg13: memref<1x1x64xf32, #tpu.memory_space<vmem>>, %arg14: memref<1x4x8x32xbf16, #tpu.memory_space<vmem>>, %arg15: memref<1x1x32xf32, #tpu.memory_space<vmem>>, %arg16: memref<1x3x1x32xf32, #tpu.memory_space<vmem>>, %arg17: memref<1x3x1x32xf32, #tpu.memory_space<vmem>>, %arg18: memref<1x32x64xbf16, #tpu.memory_space<vmem>>, %arg19: memref<1x1x64xf32, #tpu.memory_space<vmem>>, %arg20: memref<1x64x32xbf16, #tpu.memory_space<vmem>>, %arg21: memref<1x1x32xf32, #tpu.memory_space<vmem>>, %arg22: memref<1x32xf32, #tpu.memory_space<vmem>>, %arg23: memref<1x32xf32, #tpu.memory_space<vmem>>, %arg24: memref<1x8x32xf32, #tpu.memory_space<vmem>>, %arg25: memref<8x32xf32, #tpu.memory_space<vmem>>) attributes {dimension_semantics = [#tpu.dimension_semantics<parallel>, #tpu.dimension_semantics<arbitrary>], iteration_bounds = array<i64: 2, 2>, scalar_prefetch = 0 : i64, scratch_operands = 1 : i64, tpu.core_type = #tpu.core_type<tc>, window_params = [{transform_indices = @transform_0, window_bounds = array<i64: 1, 8, 32>}, {transform_indices = @transform_1, window_bounds = array<i64: 1, 8, 32>}, {transform_indices = @transform_2, window_bounds = array<i64: 1, 8, 8>}, {transform_indices = @transform_3, window_bounds = array<i64: 1, 1, 8>}, {transform_indices = @transform_4, window_bounds = array<i64: 1, 32, 96>}, {transform_indices = @transform_5, window_bounds = array<i64: 1, 1, 96>}, {transform_indices = @transform_6, window_bounds = array<i64: 1, 4, 8, 32>}, {transform_indices = @transform_7, window_bounds = array<i64: 1, 1, 32>}, {transform_indices = @transform_8, window_bounds = array<i64: 1, 32, 32>}, {transform_indices = @transform_9, window_bounds = array<i64: 1, 1, 32>}, {transform_indices = @transform_10, window_bounds = array<i64: 1, 32, 64>}, {transform_indices = @transform_11, window_bounds = array<i64: 1, 1, 64>}, {transform_indices = @transform_12, window_bounds = array<i64: 1, 4, 8, 32>}, {transform_indices = @transform_13, window_bounds = array<i64: 1, 1, 32>}, {transform_indices = @transform_14, window_bounds = array<i64: 1, 3, 1, 32>}, {transform_indices = @transform_15, window_bounds = array<i64: 1, 3, 1, 32>}, {transform_indices = @transform_16, window_bounds = array<i64: 1, 32, 64>}, {transform_indices = @transform_17, window_bounds = array<i64: 1, 1, 64>}, {transform_indices = @transform_18, window_bounds = array<i64: 1, 64, 32>}, {transform_indices = @transform_19, window_bounds = array<i64: 1, 1, 32>}, {pipeline_mode = #tpu.pipeline_mode<synchronous>, transform_indices = @transform_20, window_bounds = array<i64: 1, 32>}, {pipeline_mode = #tpu.pipeline_mode<synchronous>, transform_indices = @transform_21, window_bounds = array<i64: 1, 32>}, {transform_indices = @transform_22, window_bounds = array<i64: 1, 8, 32>}]} {
    %c0_i32 = arith.constant 0 : i32
    %0 = arith.cmpi eq, %arg1, %c0_i32 : i32
    %1 = arith.extui %0 : i1 to i32
    %c0_i32_0 = arith.constant 0 : i32
    %2 = arith.cmpi ne, %1, %c0_i32_0 : i32
    scf.if %2 {
      %c0_173 = arith.constant 0 : index
      %c0_174 = arith.constant 0 : index
      %c0_175 = arith.constant 0 : index
      %355 = vector.load %arg2[%c0_173, %c0_174, %c0_175] : memref<1x8x32xf32, #tpu.memory_space<vmem>>, vector<1x8x32xf32>
      %356 = vector.shape_cast %355 : vector<1x8x32xf32> to vector<8x32xf32>
      %c0_176 = arith.constant 0 : index
      %c0_177 = arith.constant 0 : index
      %357 = vector.load %arg25[%c0_176, %c0_177] : memref<8x32xf32, #tpu.memory_space<vmem>>, vector<8x32xf32>
      tpu.vector_store %arg25[%c0_176, %c0_177], %356 {strides = array<i32>} : memref<8x32xf32, #tpu.memory_space<vmem>>, vector<8x32xf32>,
    } else {
    }
    %c0 = arith.constant 0 : index
    %c0_1 = arith.constant 0 : index
    %3 = vector.load %arg25[%c0, %c0_1] : memref<8x32xf32, #tpu.memory_space<vmem>>, vector<8x32xf32>
    %c0_2 = arith.constant 0 : index
    %c0_3 = arith.constant 0 : index
    %c0_4 = arith.constant 0 : index
    %4 = vector.load %arg3[%c0_2, %c0_3, %c0_4] : memref<1x8x32xbf16, #tpu.memory_space<vmem>>, vector<1x8x32xbf16>
    %5 = vector.shape_cast %4 : vector<1x8x32xbf16> to vector<8x32xbf16>
    %c0_5 = arith.constant 0 : index
    %c0_6 = arith.constant 0 : index
    %c0_7 = arith.constant 0 : index
    %6 = vector.load %arg4[%c0_5, %c0_6, %c0_7] : memref<1x8x8xf32, #tpu.memory_space<vmem>>, vector<1x8x8xf32>
    %7 = vector.shape_cast %6 : vector<1x8x8xf32> to vector<8x8xf32>
    %c0_8 = arith.constant 0 : index
    %c0_9 = arith.constant 0 : index
    %c0_10 = arith.constant 0 : index
    %8 = vector.load %arg5[%c0_8, %c0_9, %c0_10] : memref<1x1x8xf32, #tpu.memory_space<vmem>>, vector<1x1x8xf32>
    %9 = vector.shape_cast %8 : vector<1x1x8xf32> to vector<1x8xf32>
    %c0_11 = arith.constant 0 : index
    %c0_12 = arith.constant 0 : index
    %c0_13 = arith.constant 0 : index
    %c0_14 = arith.constant 0 : index
    %10 = vector.load %arg16[%c0_11, %c0_12, %c0_13, %c0_14] : memref<1x3x1x32xf32, #tpu.memory_space<vmem>>, vector<1x1x1x32xf32>
    %11 = vector.shape_cast %10 : vector<1x1x1x32xf32> to vector<1x32xf32>
    %c0_15 = arith.constant 0 : index
    %c0_16 = arith.constant 0 : index
    %c0_17 = arith.constant 0 : index
    %c0_18 = arith.constant 0 : index
    %12 = vector.load %arg17[%c0_15, %c0_16, %c0_17, %c0_18] : memref<1x3x1x32xf32, #tpu.memory_space<vmem>>, vector<1x1x1x32xf32>
    %13 = vector.shape_cast %12 : vector<1x1x1x32xf32> to vector<1x32xf32>
    %cst = arith.constant dense<0.000000e+00> : vector<8xf32>
    %14 = vector.multi_reduction <add>, %3, %cst [1] : vector<8x32xf32> to vector<8xf32>
    %15 = vector.shape_cast %14 : vector<8xf32> to vector<8x1xf32>
    %cst_19 = arith.constant 3.200000e+01 : f32
    %16 = vector.broadcast %cst_19 : f32 to vector<8x1xf32>
    %17 = arith.divf %15, %16 : vector<8x1xf32>
    %18 = vector.broadcast %17 : vector<8x1xf32> to vector<8x32xf32>
    %19 = arith.subf %3, %18 : vector<8x32xf32>
    %20 = arith.mulf %19, %19 : vector<8x32xf32>
    %cst_20 = arith.constant dense<0.000000e+00> : vector<8xf32>
    %21 = vector.multi_reduction <add>, %20, %cst_20 [1] : vector<8x32xf32> to vector<8xf32>
    %22 = vector.shape_cast %21 : vector<8xf32> to vector<8x1xf32>
    %cst_21 = arith.constant 3.200000e+01 : f32
    %23 = vector.broadcast %cst_21 : f32 to vector<8x1xf32>
    %24 = arith.divf %22, %23 : vector<8x1xf32>
    %25 = vector.broadcast %17 : vector<8x1xf32> to vector<8x32xf32>
    %26 = arith.subf %3, %25 : vector<8x32xf32>
    %cst_22 = arith.constant 9.99999997E-7 : f32
    %27 = vector.broadcast %cst_22 : f32 to vector<8x1xf32>
    %28 = arith.addf %24, %27 : vector<8x1xf32>
    %29 = math.rsqrt %28 : vector<8x1xf32>
    %30 = vector.broadcast %29 : vector<8x1xf32> to vector<8x32xf32>
    %31 = arith.mulf %26, %30 : vector<8x32xf32>
    %32 = vector.broadcast %11 : vector<1x32xf32> to vector<8x32xf32>
    %33 = arith.mulf %31, %32 : vector<8x32xf32>
    %34 = vector.broadcast %13 : vector<1x32xf32> to vector<8x32xf32>
    %35 = arith.addf %33, %34 : vector<8x32xf32>
    %36 = arith.truncf %35 : vector<8x32xf32> to vector<8x32xbf16>
    %c0_23 = arith.constant 0 : index
    %c0_24 = arith.constant 0 : index
    %c0_25 = arith.constant 0 : index
    %37 = vector.load %arg6[%c0_23, %c0_24, %c0_25] : memref<1x32x96xbf16, #tpu.memory_space<vmem>>, vector<1x32x96xbf16>
    %38 = vector.shape_cast %37 : vector<1x32x96xbf16> to vector<32x96xbf16>
    %cst_26 = arith.constant dense<0.000000e+00> : vector<8x96xf32>
    %39 = tpu.matmul %36, %38, %cst_26 {dimension_numbers = #tpu.dot_dimension_numbers<[1], [0], [0], [1], [0, 0, 1, 1], [], []>} : vector<8x32xbf16>, vector<32x96xbf16>, vector<8x96xf32> -> vector<8x96xf32>
    %c0_27 = arith.constant 0 : index
    %c0_28 = arith.constant 0 : index
    %c0_29 = arith.constant 0 : index
    %40 = vector.load %arg7[%c0_27, %c0_28, %c0_29] : memref<1x1x96xf32, #tpu.memory_space<vmem>>, vector<1x1x96xf32>
    %41 = vector.shape_cast %40 : vector<1x1x96xf32> to vector<1x96xf32>
    %42 = vector.broadcast %41 : vector<1x96xf32> to vector<8x96xf32>
    %43 = arith.addf %39, %42 : vector<8x96xf32>
    %44 = vector.extract_strided_slice %43 {offsets = [0, 0], sizes = [8, 32], strides = [1, 1]} : vector<8x96xf32> to vector<8x32xf32>
    %45 = vector.extract_strided_slice %43 {offsets = [0, 32], sizes = [8, 32], strides = [1, 1]} : vector<8x96xf32> to vector<8x32xf32>
    %46 = vector.extract_strided_slice %43 {offsets = [0, 64], sizes = [8, 32], strides = [1, 1]} : vector<8x96xf32> to vector<8x32xf32>
    %cst_30 = arith.constant 0.000000e+00 : f32
    %47 = vector.broadcast %cst_30 : f32 to vector<8x32xf32>
    %48 = vector.extract_strided_slice %44 {offsets = [0, 0], sizes = [8, 8], strides = [1, 1]} : vector<8x32xf32> to vector<8x8xf32>
    %49 = vector.extract_strided_slice %45 {offsets = [0, 0], sizes = [8, 8], strides = [1, 1]} : vector<8x32xf32> to vector<8x8xf32>
    %50 = vector.extract_strided_slice %46 {offsets = [0, 0], sizes = [8, 8], strides = [1, 1]} : vector<8x32xf32> to vector<8x8xf32>
    %cst_31 = arith.constant dense<0.000000e+00> : vector<8x8xf32>
    %51 = tpu.matmul %48, %49, %cst_31 {dimension_numbers = #tpu.dot_dimension_numbers<[1], [1], [0], [0], [0, 0, 1, 0], [], []>} : vector<8x8xf32>, vector<8x8xf32>, vector<8x8xf32> -> vector<8x8xf32>
    %cst_32 = arith.constant 0.353553385 : f32
    %52 = vector.broadcast %cst_32 : f32 to vector<8x8xf32>
    %53 = arith.mulf %51, %52 : vector<8x8xf32>
    %54 = arith.addf %53, %7 : vector<8x8xf32>
    %cst_33 = arith.constant dense<0xFF800000> : vector<8xf32>
    %55 = vector.multi_reduction <maximumf>, %54, %cst_33 [1] : vector<8x8xf32> to vector<8xf32>
    %56 = vector.shape_cast %55 : vector<8xf32> to vector<8x1xf32>
    %57 = vector.broadcast %56 : vector<8x1xf32> to vector<8x8xf32>
    %58 = arith.subf %54, %57 : vector<8x8xf32>
    %59 = math.exp %58 : vector<8x8xf32>
    %cst_34 = arith.constant dense<0.000000e+00> : vector<8xf32>
    %60 = vector.multi_reduction <add>, %59, %cst_34 [1] : vector<8x8xf32> to vector<8xf32>
    %61 = vector.shape_cast %60 : vector<8xf32> to vector<8x1xf32>
    %62 = tpu.reciprocal %61 {approx = true} : vector<8x1xf32> -> vector<8x1xf32>
    %63 = vector.broadcast %62 : vector<8x1xf32> to vector<8x8xf32>
    %64 = arith.mulf %59, %63 : vector<8x8xf32>
    %65 = arith.truncf %64 : vector<8x8xf32> to vector<8x8xbf16>
    %66 = arith.truncf %50 : vector<8x8xf32> to vector<8x8xbf16>
    %cst_35 = arith.constant dense<0.000000e+00> : vector<8x8xf32>
    %67 = tpu.matmul %65, %66, %cst_35 {dimension_numbers = #tpu.dot_dimension_numbers<[1], [0], [0], [1], [0, 0, 1, 1], [], []>} : vector<8x8xbf16>, vector<8x8xbf16>, vector<8x8xf32> -> vector<8x8xf32>
    %68 = arith.truncf %67 : vector<8x8xf32> to vector<8x8xbf16>
    %c0_36 = arith.constant 0 : index
    %c0_37 = arith.constant 0 : index
    %c0_38 = arith.constant 0 : index
    %c0_39 = arith.constant 0 : index
    %69 = vector.load %arg8[%c0_36, %c0_37, %c0_38, %c0_39] : memref<1x4x8x32xbf16, #tpu.memory_space<vmem>>, vector<1x1x8x32xbf16>
    %70 = vector.shape_cast %69 : vector<1x1x8x32xbf16> to vector<8x32xbf16>
    %cst_40 = arith.constant dense<0.000000e+00> : vector<8x32xf32>
    %71 = tpu.matmul %68, %70, %cst_40 {dimension_numbers = #tpu.dot_dimension_numbers<[1], [0], [0], [1], [0, 0, 1, 1], [], []>} : vector<8x8xbf16>, vector<8x32xbf16>, vector<8x32xf32> -> vector<8x32xf32>
    %72 = arith.addf %47, %71 : vector<8x32xf32>
    %73 = vector.extract_strided_slice %44 {offsets = [0, 8], sizes = [8, 8], strides = [1, 1]} : vector<8x32xf32> to vector<8x8xf32>
    %74 = vector.extract_strided_slice %45 {offsets = [0, 8], sizes = [8, 8], strides = [1, 1]} : vector<8x32xf32> to vector<8x8xf32>
    %75 = vector.extract_strided_slice %46 {offsets = [0, 8], sizes = [8, 8], strides = [1, 1]} : vector<8x32xf32> to vector<8x8xf32>
    %cst_41 = arith.constant dense<0.000000e+00> : vector<8x8xf32>
    %76 = tpu.matmul %73, %74, %cst_41 {dimension_numbers = #tpu.dot_dimension_numbers<[1], [1], [0], [0], [0, 0, 1, 0], [], []>} : vector<8x8xf32>, vector<8x8xf32>, vector<8x8xf32> -> vector<8x8xf32>
    %cst_42 = arith.constant 0.353553385 : f32
    %77 = vector.broadcast %cst_42 : f32 to vector<8x8xf32>
    %78 = arith.mulf %76, %77 : vector<8x8xf32>
    %79 = arith.addf %78, %7 : vector<8x8xf32>
    %cst_43 = arith.constant dense<0xFF800000> : vector<8xf32>
    %80 = vector.multi_reduction <maximumf>, %79, %cst_43 [1] : vector<8x8xf32> to vector<8xf32>
    %81 = vector.shape_cast %80 : vector<8xf32> to vector<8x1xf32>
    %82 = vector.broadcast %81 : vector<8x1xf32> to vector<8x8xf32>
    %83 = arith.subf %79, %82 : vector<8x8xf32>
    %84 = math.exp %83 : vector<8x8xf32>
    %cst_44 = arith.constant dense<0.000000e+00> : vector<8xf32>
    %85 = vector.multi_reduction <add>, %84, %cst_44 [1] : vector<8x8xf32> to vector<8xf32>
    %86 = vector.shape_cast %85 : vector<8xf32> to vector<8x1xf32>
    %87 = tpu.reciprocal %86 {approx = true} : vector<8x1xf32> -> vector<8x1xf32>
    %88 = vector.broadcast %87 : vector<8x1xf32> to vector<8x8xf32>
    %89 = arith.mulf %84, %88 : vector<8x8xf32>
    %90 = arith.truncf %89 : vector<8x8xf32> to vector<8x8xbf16>
    %91 = arith.truncf %75 : vector<8x8xf32> to vector<8x8xbf16>
    %cst_45 = arith.constant dense<0.000000e+00> : vector<8x8xf32>
    %92 = tpu.matmul %90, %91, %cst_45 {dimension_numbers = #tpu.dot_dimension_numbers<[1], [0], [0], [1], [0, 0, 1, 1], [], []>} : vector<8x8xbf16>, vector<8x8xbf16>, vector<8x8xf32> -> vector<8x8xf32>
    %93 = arith.truncf %92 : vector<8x8xf32> to vector<8x8xbf16>
    %c0_46 = arith.constant 0 : index
    %c1 = arith.constant 1 : index
    %c0_47 = arith.constant 0 : index
    %c0_48 = arith.constant 0 : index
    %94 = vector.load %arg8[%c0_46, %c1, %c0_47, %c0_48] : memref<1x4x8x32xbf16, #tpu.memory_space<vmem>>, vector<1x1x8x32xbf16>
    %95 = vector.shape_cast %94 : vector<1x1x8x32xbf16> to vector<8x32xbf16>
    %cst_49 = arith.constant dense<0.000000e+00> : vector<8x32xf32>
    %96 = tpu.matmul %93, %95, %cst_49 {dimension_numbers = #tpu.dot_dimension_numbers<[1], [0], [0], [1], [0, 0, 1, 1], [], []>} : vector<8x8xbf16>, vector<8x32xbf16>, vector<8x32xf32> -> vector<8x32xf32>
    %97 = arith.addf %72, %96 : vector<8x32xf32>
    %98 = vector.extract_strided_slice %44 {offsets = [0, 16], sizes = [8, 8], strides = [1, 1]} : vector<8x32xf32> to vector<8x8xf32>
    %99 = vector.extract_strided_slice %45 {offsets = [0, 16], sizes = [8, 8], strides = [1, 1]} : vector<8x32xf32> to vector<8x8xf32>
    %100 = vector.extract_strided_slice %46 {offsets = [0, 16], sizes = [8, 8], strides = [1, 1]} : vector<8x32xf32> to vector<8x8xf32>
    %cst_50 = arith.constant dense<0.000000e+00> : vector<8x8xf32>
    %101 = tpu.matmul %98, %99, %cst_50 {dimension_numbers = #tpu.dot_dimension_numbers<[1], [1], [0], [0], [0, 0, 1, 0], [], []>} : vector<8x8xf32>, vector<8x8xf32>, vector<8x8xf32> -> vector<8x8xf32>
    %cst_51 = arith.constant 0.353553385 : f32
    %102 = vector.broadcast %cst_51 : f32 to vector<8x8xf32>
    %103 = arith.mulf %101, %102 : vector<8x8xf32>
    %104 = arith.addf %103, %7 : vector<8x8xf32>
    %cst_52 = arith.constant dense<0xFF800000> : vector<8xf32>
    %105 = vector.multi_reduction <maximumf>, %104, %cst_52 [1] : vector<8x8xf32> to vector<8xf32>
    %106 = vector.shape_cast %105 : vector<8xf32> to vector<8x1xf32>
    %107 = vector.broadcast %106 : vector<8x1xf32> to vector<8x8xf32>
    %108 = arith.subf %104, %107 : vector<8x8xf32>
    %109 = math.exp %108 : vector<8x8xf32>
    %cst_53 = arith.constant dense<0.000000e+00> : vector<8xf32>
    %110 = vector.multi_reduction <add>, %109, %cst_53 [1] : vector<8x8xf32> to vector<8xf32>
    %111 = vector.shape_cast %110 : vector<8xf32> to vector<8x1xf32>
    %112 = tpu.reciprocal %111 {approx = true} : vector<8x1xf32> -> vector<8x1xf32>
    %113 = vector.broadcast %112 : vector<8x1xf32> to vector<8x8xf32>
    %114 = arith.mulf %109, %113 : vector<8x8xf32>
    %115 = arith.truncf %114 : vector<8x8xf32> to vector<8x8xbf16>
    %116 = arith.truncf %100 : vector<8x8xf32> to vector<8x8xbf16>
    %cst_54 = arith.constant dense<0.000000e+00> : vector<8x8xf32>
    %117 = tpu.matmul %115, %116, %cst_54 {dimension_numbers = #tpu.dot_dimension_numbers<[1], [0], [0], [1], [0, 0, 1, 1], [], []>} : vector<8x8xbf16>, vector<8x8xbf16>, vector<8x8xf32> -> vector<8x8xf32>
    %118 = arith.truncf %117 : vector<8x8xf32> to vector<8x8xbf16>
    %c0_55 = arith.constant 0 : index
    %c2 = arith.constant 2 : index
    %c0_56 = arith.constant 0 : index
    %c0_57 = arith.constant 0 : index
    %119 = vector.load %arg8[%c0_55, %c2, %c0_56, %c0_57] : memref<1x4x8x32xbf16, #tpu.memory_space<vmem>>, vector<1x1x8x32xbf16>
    %120 = vector.shape_cast %119 : vector<1x1x8x32xbf16> to vector<8x32xbf16>
    %cst_58 = arith.constant dense<0.000000e+00> : vector<8x32xf32>
    %121 = tpu.matmul %118, %120, %cst_58 {dimension_numbers = #tpu.dot_dimension_numbers<[1], [0], [0], [1], [0, 0, 1, 1], [], []>} : vector<8x8xbf16>, vector<8x32xbf16>, vector<8x32xf32> -> vector<8x32xf32>
    %122 = arith.addf %97, %121 : vector<8x32xf32>
    %123 = vector.extract_strided_slice %44 {offsets = [0, 24], sizes = [8, 8], strides = [1, 1]} : vector<8x32xf32> to vector<8x8xf32>
    %124 = vector.extract_strided_slice %45 {offsets = [0, 24], sizes = [8, 8], strides = [1, 1]} : vector<8x32xf32> to vector<8x8xf32>
    %125 = vector.extract_strided_slice %46 {offsets = [0, 24], sizes = [8, 8], strides = [1, 1]} : vector<8x32xf32> to vector<8x8xf32>
    %cst_59 = arith.constant dense<0.000000e+00> : vector<8x8xf32>
    %126 = tpu.matmul %123, %124, %cst_59 {dimension_numbers = #tpu.dot_dimension_numbers<[1], [1], [0], [0], [0, 0, 1, 0], [], []>} : vector<8x8xf32>, vector<8x8xf32>, vector<8x8xf32> -> vector<8x8xf32>
    %cst_60 = arith.constant 0.353553385 : f32
    %127 = vector.broadcast %cst_60 : f32 to vector<8x8xf32>
    %128 = arith.mulf %126, %127 : vector<8x8xf32>
    %129 = arith.addf %128, %7 : vector<8x8xf32>
    %cst_61 = arith.constant dense<0xFF800000> : vector<8xf32>
    %130 = vector.multi_reduction <maximumf>, %129, %cst_61 [1] : vector<8x8xf32> to vector<8xf32>
    %131 = vector.shape_cast %130 : vector<8xf32> to vector<8x1xf32>
    %132 = vector.broadcast %131 : vector<8x1xf32> to vector<8x8xf32>
    %133 = arith.subf %129, %132 : vector<8x8xf32>
    %134 = math.exp %133 : vector<8x8xf32>
    %cst_62 = arith.constant dense<0.000000e+00> : vector<8xf32>
    %135 = vector.multi_reduction <add>, %134, %cst_62 [1] : vector<8x8xf32> to vector<8xf32>
    %136 = vector.shape_cast %135 : vector<8xf32> to vector<8x1xf32>
    %137 = tpu.reciprocal %136 {approx = true} : vector<8x1xf32> -> vector<8x1xf32>
    %138 = vector.broadcast %137 : vector<8x1xf32> to vector<8x8xf32>
    %139 = arith.mulf %134, %138 : vector<8x8xf32>
    %140 = arith.truncf %139 : vector<8x8xf32> to vector<8x8xbf16>
    %141 = arith.truncf %125 : vector<8x8xf32> to vector<8x8xbf16>
    %cst_63 = arith.constant dense<0.000000e+00> : vector<8x8xf32>
    %142 = tpu.matmul %140, %141, %cst_63 {dimension_numbers = #tpu.dot_dimension_numbers<[1], [0], [0], [1], [0, 0, 1, 1], [], []>} : vector<8x8xbf16>, vector<8x8xbf16>, vector<8x8xf32> -> vector<8x8xf32>
    %143 = arith.truncf %142 : vector<8x8xf32> to vector<8x8xbf16>
    %c0_64 = arith.constant 0 : index
    %c3 = arith.constant 3 : index
    %c0_65 = arith.constant 0 : index
    %c0_66 = arith.constant 0 : index
    %144 = vector.load %arg8[%c0_64, %c3, %c0_65, %c0_66] : memref<1x4x8x32xbf16, #tpu.memory_space<vmem>>, vector<1x1x8x32xbf16>
    %145 = vector.shape_cast %144 : vector<1x1x8x32xbf16> to vector<8x32xbf16>
    %cst_67 = arith.constant dense<0.000000e+00> : vector<8x32xf32>
    %146 = tpu.matmul %143, %145, %cst_67 {dimension_numbers = #tpu.dot_dimension_numbers<[1], [0], [0], [1], [0, 0, 1, 1], [], []>} : vector<8x8xbf16>, vector<8x32xbf16>, vector<8x32xf32> -> vector<8x32xf32>
    %147 = arith.addf %122, %146 : vector<8x32xf32>
    %148 = arith.addf %3, %147 : vector<8x32xf32>
    %c0_68 = arith.constant 0 : index
    %c0_69 = arith.constant 0 : index
    %c0_70 = arith.constant 0 : index
    %149 = vector.load %arg9[%c0_68, %c0_69, %c0_70] : memref<1x1x32xf32, #tpu.memory_space<vmem>>, vector<1x1x32xf32>
    %150 = vector.shape_cast %149 : vector<1x1x32xf32> to vector<1x32xf32>
    %151 = vector.broadcast %150 : vector<1x32xf32> to vector<8x32xf32>
    %152 = arith.addf %148, %151 : vector<8x32xf32>
    %c0_71 = arith.constant 0 : index
    %c1_72 = arith.constant 1 : index
    %c0_73 = arith.constant 0 : index
    %c0_74 = arith.constant 0 : index
    %153 = vector.load %arg16[%c0_71, %c1_72, %c0_73, %c0_74] : memref<1x3x1x32xf32, #tpu.memory_space<vmem>>, vector<1x1x1x32xf32>
    %154 = vector.shape_cast %153 : vector<1x1x1x32xf32> to vector<1x32xf32>
    %c0_75 = arith.constant 0 : index
    %c1_76 = arith.constant 1 : index
    %c0_77 = arith.constant 0 : index
    %c0_78 = arith.constant 0 : index
    %155 = vector.load %arg17[%c0_75, %c1_76, %c0_77, %c0_78] : memref<1x3x1x32xf32, #tpu.memory_space<vmem>>, vector<1x1x1x32xf32>
    %156 = vector.shape_cast %155 : vector<1x1x1x32xf32> to vector<1x32xf32>
    %cst_79 = arith.constant dense<0.000000e+00> : vector<8xf32>
    %157 = vector.multi_reduction <add>, %152, %cst_79 [1] : vector<8x32xf32> to vector<8xf32>
    %158 = vector.shape_cast %157 : vector<8xf32> to vector<8x1xf32>
    %cst_80 = arith.constant 3.200000e+01 : f32
    %159 = vector.broadcast %cst_80 : f32 to vector<8x1xf32>
    %160 = arith.divf %158, %159 : vector<8x1xf32>
    %161 = vector.broadcast %160 : vector<8x1xf32> to vector<8x32xf32>
    %162 = arith.subf %152, %161 : vector<8x32xf32>
    %163 = arith.mulf %162, %162 : vector<8x32xf32>
    %cst_81 = arith.constant dense<0.000000e+00> : vector<8xf32>
    %164 = vector.multi_reduction <add>, %163, %cst_81 [1] : vector<8x32xf32> to vector<8xf32>
    %165 = vector.shape_cast %164 : vector<8xf32> to vector<8x1xf32>
    %cst_82 = arith.constant 3.200000e+01 : f32
    %166 = vector.broadcast %cst_82 : f32 to vector<8x1xf32>
    %167 = arith.divf %165, %166 : vector<8x1xf32>
    %168 = vector.broadcast %160 : vector<8x1xf32> to vector<8x32xf32>
    %169 = arith.subf %152, %168 : vector<8x32xf32>
    %cst_83 = arith.constant 9.99999997E-7 : f32
    %170 = vector.broadcast %cst_83 : f32 to vector<8x1xf32>
    %171 = arith.addf %167, %170 : vector<8x1xf32>
    %172 = math.rsqrt %171 : vector<8x1xf32>
    %173 = vector.broadcast %172 : vector<8x1xf32> to vector<8x32xf32>
    %174 = arith.mulf %169, %173 : vector<8x32xf32>
    %175 = vector.broadcast %154 : vector<1x32xf32> to vector<8x32xf32>
    %176 = arith.mulf %174, %175 : vector<8x32xf32>
    %177 = vector.broadcast %156 : vector<1x32xf32> to vector<8x32xf32>
    %178 = arith.addf %176, %177 : vector<8x32xf32>
    %179 = arith.truncf %178 : vector<8x32xf32> to vector<8x32xbf16>
    %c0_84 = arith.constant 0 : index
    %c0_85 = arith.constant 0 : index
    %c0_86 = arith.constant 0 : index
    %180 = vector.load %arg10[%c0_84, %c0_85, %c0_86] : memref<1x32x32xbf16, #tpu.memory_space<vmem>>, vector<1x32x32xbf16>
    %181 = vector.shape_cast %180 : vector<1x32x32xbf16> to vector<32x32xbf16>
    %cst_87 = arith.constant dense<0.000000e+00> : vector<8x32xf32>
    %182 = tpu.matmul %179, %181, %cst_87 {dimension_numbers = #tpu.dot_dimension_numbers<[1], [0], [0], [1], [0, 0, 1, 1], [], []>} : vector<8x32xbf16>, vector<32x32xbf16>, vector<8x32xf32> -> vector<8x32xf32>
    %c0_88 = arith.constant 0 : index
    %c0_89 = arith.constant 0 : index
    %c0_90 = arith.constant 0 : index
    %183 = vector.load %arg11[%c0_88, %c0_89, %c0_90] : memref<1x1x32xf32, #tpu.memory_space<vmem>>, vector<1x1x32xf32>
    %184 = vector.shape_cast %183 : vector<1x1x32xf32> to vector<1x32xf32>
    %185 = vector.broadcast %184 : vector<1x32xf32> to vector<8x32xf32>
    %186 = arith.addf %182, %185 : vector<8x32xf32>
    %c0_91 = arith.constant 0 : index
    %c0_92 = arith.constant 0 : index
    %c0_93 = arith.constant 0 : index
    %187 = vector.load %arg12[%c0_91, %c0_92, %c0_93] : memref<1x32x64xbf16, #tpu.memory_space<vmem>>, vector<1x32x64xbf16>
    %188 = vector.shape_cast %187 : vector<1x32x64xbf16> to vector<32x64xbf16>
    %cst_94 = arith.constant dense<0.000000e+00> : vector<8x64xf32>
    %189 = tpu.matmul %5, %188, %cst_94 {dimension_numbers = #tpu.dot_dimension_numbers<[1], [0], [0], [1], [0, 0, 1, 1], [], []>} : vector<8x32xbf16>, vector<32x64xbf16>, vector<8x64xf32> -> vector<8x64xf32>
    %c0_95 = arith.constant 0 : index
    %c0_96 = arith.constant 0 : index
    %c0_97 = arith.constant 0 : index
    %190 = vector.load %arg13[%c0_95, %c0_96, %c0_97] : memref<1x1x64xf32, #tpu.memory_space<vmem>>, vector<1x1x64xf32>
    %191 = vector.shape_cast %190 : vector<1x1x64xf32> to vector<1x64xf32>
    %192 = vector.broadcast %191 : vector<1x64xf32> to vector<8x64xf32>
    %193 = arith.addf %189, %192 : vector<8x64xf32>
    %194 = vector.extract_strided_slice %193 {offsets = [0, 0], sizes = [8, 32], strides = [1, 1]} : vector<8x64xf32> to vector<8x32xf32>
    %195 = vector.extract_strided_slice %193 {offsets = [0, 32], sizes = [8, 32], strides = [1, 1]} : vector<8x64xf32> to vector<8x32xf32>
    %cst_98 = arith.constant 0.000000e+00 : f32
    %196 = vector.broadcast %cst_98 : f32 to vector<8x32xf32>
    %197 = vector.extract_strided_slice %186 {offsets = [0, 0], sizes = [8, 8], strides = [1, 1]} : vector<8x32xf32> to vector<8x8xf32>
    %198 = vector.extract_strided_slice %194 {offsets = [0, 0], sizes = [8, 8], strides = [1, 1]} : vector<8x32xf32> to vector<8x8xf32>
    %199 = vector.extract_strided_slice %195 {offsets = [0, 0], sizes = [8, 8], strides = [1, 1]} : vector<8x32xf32> to vector<8x8xf32>
    %cst_99 = arith.constant dense<0.000000e+00> : vector<8x8xf32>
    %200 = tpu.matmul %197, %198, %cst_99 {dimension_numbers = #tpu.dot_dimension_numbers<[1], [1], [0], [0], [0, 0, 1, 0], [], []>} : vector<8x8xf32>, vector<8x8xf32>, vector<8x8xf32> -> vector<8x8xf32>
    %cst_100 = arith.constant 0.353553385 : f32
    %201 = vector.broadcast %cst_100 : f32 to vector<8x8xf32>
    %202 = arith.mulf %200, %201 : vector<8x8xf32>
    %203 = vector.broadcast %9 : vector<1x8xf32> to vector<8x8xf32>
    %204 = arith.addf %202, %203 : vector<8x8xf32>
    %cst_101 = arith.constant dense<0xFF800000> : vector<8xf32>
    %205 = vector.multi_reduction <maximumf>, %204, %cst_101 [1] : vector<8x8xf32> to vector<8xf32>
    %206 = vector.shape_cast %205 : vector<8xf32> to vector<8x1xf32>
    %207 = vector.broadcast %206 : vector<8x1xf32> to vector<8x8xf32>
    %208 = arith.subf %204, %207 : vector<8x8xf32>
    %209 = math.exp %208 : vector<8x8xf32>
    %cst_102 = arith.constant dense<0.000000e+00> : vector<8xf32>
    %210 = vector.multi_reduction <add>, %209, %cst_102 [1] : vector<8x8xf32> to vector<8xf32>
    %211 = vector.shape_cast %210 : vector<8xf32> to vector<8x1xf32>
    %212 = tpu.reciprocal %211 {approx = true} : vector<8x1xf32> -> vector<8x1xf32>
    %213 = vector.broadcast %212 : vector<8x1xf32> to vector<8x8xf32>
    %214 = arith.mulf %209, %213 : vector<8x8xf32>
    %215 = arith.truncf %214 : vector<8x8xf32> to vector<8x8xbf16>
    %216 = arith.truncf %199 : vector<8x8xf32> to vector<8x8xbf16>
    %cst_103 = arith.constant dense<0.000000e+00> : vector<8x8xf32>
    %217 = tpu.matmul %215, %216, %cst_103 {dimension_numbers = #tpu.dot_dimension_numbers<[1], [0], [0], [1], [0, 0, 1, 1], [], []>} : vector<8x8xbf16>, vector<8x8xbf16>, vector<8x8xf32> -> vector<8x8xf32>
    %218 = arith.truncf %217 : vector<8x8xf32> to vector<8x8xbf16>
    %c0_104 = arith.constant 0 : index
    %c0_105 = arith.constant 0 : index
    %c0_106 = arith.constant 0 : index
    %c0_107 = arith.constant 0 : index
    %219 = vector.load %arg14[%c0_104, %c0_105, %c0_106, %c0_107] : memref<1x4x8x32xbf16, #tpu.memory_space<vmem>>, vector<1x1x8x32xbf16>
    %220 = vector.shape_cast %219 : vector<1x1x8x32xbf16> to vector<8x32xbf16>
    %cst_108 = arith.constant dense<0.000000e+00> : vector<8x32xf32>
    %221 = tpu.matmul %218, %220, %cst_108 {dimension_numbers = #tpu.dot_dimension_numbers<[1], [0], [0], [1], [0, 0, 1, 1], [], []>} : vector<8x8xbf16>, vector<8x32xbf16>, vector<8x32xf32> -> vector<8x32xf32>
    %222 = arith.addf %196, %221 : vector<8x32xf32>
    %223 = vector.extract_strided_slice %186 {offsets = [0, 8], sizes = [8, 8], strides = [1, 1]} : vector<8x32xf32> to vector<8x8xf32>
    %224 = vector.extract_strided_slice %194 {offsets = [0, 8], sizes = [8, 8], strides = [1, 1]} : vector<8x32xf32> to vector<8x8xf32>
    %225 = vector.extract_strided_slice %195 {offsets = [0, 8], sizes = [8, 8], strides = [1, 1]} : vector<8x32xf32> to vector<8x8xf32>
    %cst_109 = arith.constant dense<0.000000e+00> : vector<8x8xf32>
    %226 = tpu.matmul %223, %224, %cst_109 {dimension_numbers = #tpu.dot_dimension_numbers<[1], [1], [0], [0], [0, 0, 1, 0], [], []>} : vector<8x8xf32>, vector<8x8xf32>, vector<8x8xf32> -> vector<8x8xf32>
    %cst_110 = arith.constant 0.353553385 : f32
    %227 = vector.broadcast %cst_110 : f32 to vector<8x8xf32>
    %228 = arith.mulf %226, %227 : vector<8x8xf32>
    %229 = vector.broadcast %9 : vector<1x8xf32> to vector<8x8xf32>
    %230 = arith.addf %228, %229 : vector<8x8xf32>
    %cst_111 = arith.constant dense<0xFF800000> : vector<8xf32>
    %231 = vector.multi_reduction <maximumf>, %230, %cst_111 [1] : vector<8x8xf32> to vector<8xf32>
    %232 = vector.shape_cast %231 : vector<8xf32> to vector<8x1xf32>
    %233 = vector.broadcast %232 : vector<8x1xf32> to vector<8x8xf32>
    %234 = arith.subf %230, %233 : vector<8x8xf32>
    %235 = math.exp %234 : vector<8x8xf32>
    %cst_112 = arith.constant dense<0.000000e+00> : vector<8xf32>
    %236 = vector.multi_reduction <add>, %235, %cst_112 [1] : vector<8x8xf32> to vector<8xf32>
    %237 = vector.shape_cast %236 : vector<8xf32> to vector<8x1xf32>
    %238 = tpu.reciprocal %237 {approx = true} : vector<8x1xf32> -> vector<8x1xf32>
    %239 = vector.broadcast %238 : vector<8x1xf32> to vector<8x8xf32>
    %240 = arith.mulf %235, %239 : vector<8x8xf32>
    %241 = arith.truncf %240 : vector<8x8xf32> to vector<8x8xbf16>
    %242 = arith.truncf %225 : vector<8x8xf32> to vector<8x8xbf16>
    %cst_113 = arith.constant dense<0.000000e+00> : vector<8x8xf32>
    %243 = tpu.matmul %241, %242, %cst_113 {dimension_numbers = #tpu.dot_dimension_numbers<[1], [0], [0], [1], [0, 0, 1, 1], [], []>} : vector<8x8xbf16>, vector<8x8xbf16>, vector<8x8xf32> -> vector<8x8xf32>
    %244 = arith.truncf %243 : vector<8x8xf32> to vector<8x8xbf16>
    %c0_114 = arith.constant 0 : index
    %c1_115 = arith.constant 1 : index
    %c0_116 = arith.constant 0 : index
    %c0_117 = arith.constant 0 : index
    %245 = vector.load %arg14[%c0_114, %c1_115, %c0_116, %c0_117] : memref<1x4x8x32xbf16, #tpu.memory_space<vmem>>, vector<1x1x8x32xbf16>
    %246 = vector.shape_cast %245 : vector<1x1x8x32xbf16> to vector<8x32xbf16>
    %cst_118 = arith.constant dense<0.000000e+00> : vector<8x32xf32>
    %247 = tpu.matmul %244, %246, %cst_118 {dimension_numbers = #tpu.dot_dimension_numbers<[1], [0], [0], [1], [0, 0, 1, 1], [], []>} : vector<8x8xbf16>, vector<8x32xbf16>, vector<8x32xf32> -> vector<8x32xf32>
    %248 = arith.addf %222, %247 : vector<8x32xf32>
    %249 = vector.extract_strided_slice %186 {offsets = [0, 16], sizes = [8, 8], strides = [1, 1]} : vector<8x32xf32> to vector<8x8xf32>
    %250 = vector.extract_strided_slice %194 {offsets = [0, 16], sizes = [8, 8], strides = [1, 1]} : vector<8x32xf32> to vector<8x8xf32>
    %251 = vector.extract_strided_slice %195 {offsets = [0, 16], sizes = [8, 8], strides = [1, 1]} : vector<8x32xf32> to vector<8x8xf32>
    %cst_119 = arith.constant dense<0.000000e+00> : vector<8x8xf32>
    %252 = tpu.matmul %249, %250, %cst_119 {dimension_numbers = #tpu.dot_dimension_numbers<[1], [1], [0], [0], [0, 0, 1, 0], [], []>} : vector<8x8xf32>, vector<8x8xf32>, vector<8x8xf32> -> vector<8x8xf32>
    %cst_120 = arith.constant 0.353553385 : f32
    %253 = vector.broadcast %cst_120 : f32 to vector<8x8xf32>
    %254 = arith.mulf %252, %253 : vector<8x8xf32>
    %255 = vector.broadcast %9 : vector<1x8xf32> to vector<8x8xf32>
    %256 = arith.addf %254, %255 : vector<8x8xf32>
    %cst_121 = arith.constant dense<0xFF800000> : vector<8xf32>
    %257 = vector.multi_reduction <maximumf>, %256, %cst_121 [1] : vector<8x8xf32> to vector<8xf32>
    %258 = vector.shape_cast %257 : vector<8xf32> to vector<8x1xf32>
    %259 = vector.broadcast %258 : vector<8x1xf32> to vector<8x8xf32>
    %260 = arith.subf %256, %259 : vector<8x8xf32>
    %261 = math.exp %260 : vector<8x8xf32>
    %cst_122 = arith.constant dense<0.000000e+00> : vector<8xf32>
    %262 = vector.multi_reduction <add>, %261, %cst_122 [1] : vector<8x8xf32> to vector<8xf32>
    %263 = vector.shape_cast %262 : vector<8xf32> to vector<8x1xf32>
    %264 = tpu.reciprocal %263 {approx = true} : vector<8x1xf32> -> vector<8x1xf32>
    %265 = vector.broadcast %264 : vector<8x1xf32> to vector<8x8xf32>
    %266 = arith.mulf %261, %265 : vector<8x8xf32>
    %267 = arith.truncf %266 : vector<8x8xf32> to vector<8x8xbf16>
    %268 = arith.truncf %251 : vector<8x8xf32> to vector<8x8xbf16>
    %cst_123 = arith.constant dense<0.000000e+00> : vector<8x8xf32>
    %269 = tpu.matmul %267, %268, %cst_123 {dimension_numbers = #tpu.dot_dimension_numbers<[1], [0], [0], [1], [0, 0, 1, 1], [], []>} : vector<8x8xbf16>, vector<8x8xbf16>, vector<8x8xf32> -> vector<8x8xf32>
    %270 = arith.truncf %269 : vector<8x8xf32> to vector<8x8xbf16>
    %c0_124 = arith.constant 0 : index
    %c2_125 = arith.constant 2 : index
    %c0_126 = arith.constant 0 : index
    %c0_127 = arith.constant 0 : index
    %271 = vector.load %arg14[%c0_124, %c2_125, %c0_126, %c0_127] : memref<1x4x8x32xbf16, #tpu.memory_space<vmem>>, vector<1x1x8x32xbf16>
    %272 = vector.shape_cast %271 : vector<1x1x8x32xbf16> to vector<8x32xbf16>
    %cst_128 = arith.constant dense<0.000000e+00> : vector<8x32xf32>
    %273 = tpu.matmul %270, %272, %cst_128 {dimension_numbers = #tpu.dot_dimension_numbers<[1], [0], [0], [1], [0, 0, 1, 1], [], []>} : vector<8x8xbf16>, vector<8x32xbf16>, vector<8x32xf32> -> vector<8x32xf32>
    %274 = arith.addf %248, %273 : vector<8x32xf32>
    %275 = vector.extract_strided_slice %186 {offsets = [0, 24], sizes = [8, 8], strides = [1, 1]} : vector<8x32xf32> to vector<8x8xf32>
    %276 = vector.extract_strided_slice %194 {offsets = [0, 24], sizes = [8, 8], strides = [1, 1]} : vector<8x32xf32> to vector<8x8xf32>
    %277 = vector.extract_strided_slice %195 {offsets = [0, 24], sizes = [8, 8], strides = [1, 1]} : vector<8x32xf32> to vector<8x8xf32>
    %cst_129 = arith.constant dense<0.000000e+00> : vector<8x8xf32>
    %278 = tpu.matmul %275, %276, %cst_129 {dimension_numbers = #tpu.dot_dimension_numbers<[1], [1], [0], [0], [0, 0, 1, 0], [], []>} : vector<8x8xf32>, vector<8x8xf32>, vector<8x8xf32> -> vector<8x8xf32>
    %cst_130 = arith.constant 0.353553385 : f32
    %279 = vector.broadcast %cst_130 : f32 to vector<8x8xf32>
    %280 = arith.mulf %278, %279 : vector<8x8xf32>
    %281 = vector.broadcast %9 : vector<1x8xf32> to vector<8x8xf32>
    %282 = arith.addf %280, %281 : vector<8x8xf32>
    %cst_131 = arith.constant dense<0xFF800000> : vector<8xf32>
    %283 = vector.multi_reduction <maximumf>, %282, %cst_131 [1] : vector<8x8xf32> to vector<8xf32>
    %284 = vector.shape_cast %283 : vector<8xf32> to vector<8x1xf32>
    %285 = vector.broadcast %284 : vector<8x1xf32> to vector<8x8xf32>
    %286 = arith.subf %282, %285 : vector<8x8xf32>
    %287 = math.exp %286 : vector<8x8xf32>
    %cst_132 = arith.constant dense<0.000000e+00> : vector<8xf32>
    %288 = vector.multi_reduction <add>, %287, %cst_132 [1] : vector<8x8xf32> to vector<8xf32>
    %289 = vector.shape_cast %288 : vector<8xf32> to vector<8x1xf32>
    %290 = tpu.reciprocal %289 {approx = true} : vector<8x1xf32> -> vector<8x1xf32>
    %291 = vector.broadcast %290 : vector<8x1xf32> to vector<8x8xf32>
    %292 = arith.mulf %287, %291 : vector<8x8xf32>
    %293 = arith.truncf %292 : vector<8x8xf32> to vector<8x8xbf16>
    %294 = arith.truncf %277 : vector<8x8xf32> to vector<8x8xbf16>
    %cst_133 = arith.constant dense<0.000000e+00> : vector<8x8xf32>
    %295 = tpu.matmul %293, %294, %cst_133 {dimension_numbers = #tpu.dot_dimension_numbers<[1], [0], [0], [1], [0, 0, 1, 1], [], []>} : vector<8x8xbf16>, vector<8x8xbf16>, vector<8x8xf32> -> vector<8x8xf32>
    %296 = arith.truncf %295 : vector<8x8xf32> to vector<8x8xbf16>
    %c0_134 = arith.constant 0 : index
    %c3_135 = arith.constant 3 : index
    %c0_136 = arith.constant 0 : index
    %c0_137 = arith.constant 0 : index
    %297 = vector.load %arg14[%c0_134, %c3_135, %c0_136, %c0_137] : memref<1x4x8x32xbf16, #tpu.memory_space<vmem>>, vector<1x1x8x32xbf16>
    %298 = vector.shape_cast %297 : vector<1x1x8x32xbf16> to vector<8x32xbf16>
    %cst_138 = arith.constant dense<0.000000e+00> : vector<8x32xf32>
    %299 = tpu.matmul %296, %298, %cst_138 {dimension_numbers = #tpu.dot_dimension_numbers<[1], [0], [0], [1], [0, 0, 1, 1], [], []>} : vector<8x8xbf16>, vector<8x32xbf16>, vector<8x32xf32> -> vector<8x32xf32>
    %300 = arith.addf %274, %299 : vector<8x32xf32>
    %301 = arith.addf %152, %300 : vector<8x32xf32>
    %c0_139 = arith.constant 0 : index
    %c0_140 = arith.constant 0 : index
    %c0_141 = arith.constant 0 : index
    %302 = vector.load %arg15[%c0_139, %c0_140, %c0_141] : memref<1x1x32xf32, #tpu.memory_space<vmem>>, vector<1x1x32xf32>
    %303 = vector.shape_cast %302 : vector<1x1x32xf32> to vector<1x32xf32>
    %304 = vector.broadcast %303 : vector<1x32xf32> to vector<8x32xf32>
    %305 = arith.addf %301, %304 : vector<8x32xf32>
    %c0_142 = arith.constant 0 : index
    %c2_143 = arith.constant 2 : index
    %c0_144 = arith.constant 0 : index
    %c0_145 = arith.constant 0 : index
    %306 = vector.load %arg16[%c0_142, %c2_143, %c0_144, %c0_145] : memref<1x3x1x32xf32, #tpu.memory_space<vmem>>, vector<1x1x1x32xf32>
    %307 = vector.shape_cast %306 : vector<1x1x1x32xf32> to vector<1x32xf32>
    %c0_146 = arith.constant 0 : index
    %c2_147 = arith.constant 2 : index
    %c0_148 = arith.constant 0 : index
    %c0_149 = arith.constant 0 : index
    %308 = vector.load %arg17[%c0_146, %c2_147, %c0_148, %c0_149] : memref<1x3x1x32xf32, #tpu.memory_space<vmem>>, vector<1x1x1x32xf32>
    %309 = vector.shape_cast %308 : vector<1x1x1x32xf32> to vector<1x32xf32>
    %cst_150 = arith.constant dense<0.000000e+00> : vector<8xf32>
    %310 = vector.multi_reduction <add>, %305, %cst_150 [1] : vector<8x32xf32> to vector<8xf32>
    %311 = vector.shape_cast %310 : vector<8xf32> to vector<8x1xf32>
    %cst_151 = arith.constant 3.200000e+01 : f32
    %312 = vector.broadcast %cst_151 : f32 to vector<8x1xf32>
    %313 = arith.divf %311, %312 : vector<8x1xf32>
    %314 = vector.broadcast %313 : vector<8x1xf32> to vector<8x32xf32>
    %315 = arith.subf %305, %314 : vector<8x32xf32>
    %316 = arith.mulf %315, %315 : vector<8x32xf32>
    %cst_152 = arith.constant dense<0.000000e+00> : vector<8xf32>
    %317 = vector.multi_reduction <add>, %316, %cst_152 [1] : vector<8x32xf32> to vector<8xf32>
    %318 = vector.shape_cast %317 : vector<8xf32> to vector<8x1xf32>
    %cst_153 = arith.constant 3.200000e+01 : f32
    %319 = vector.broadcast %cst_153 : f32 to vector<8x1xf32>
    %320 = arith.divf %318, %319 : vector<8x1xf32>
    %321 = vector.broadcast %313 : vector<8x1xf32> to vector<8x32xf32>
    %322 = arith.subf %305, %321 : vector<8x32xf32>
    %cst_154 = arith.constant 9.99999997E-7 : f32
    %323 = vector.broadcast %cst_154 : f32 to vector<8x1xf32>
    %324 = arith.addf %320, %323 : vector<8x1xf32>
    %325 = math.rsqrt %324 : vector<8x1xf32>
    %326 = vector.broadcast %325 : vector<8x1xf32> to vector<8x32xf32>
    %327 = arith.mulf %322, %326 : vector<8x32xf32>
    %328 = vector.broadcast %307 : vector<1x32xf32> to vector<8x32xf32>
    %329 = arith.mulf %327, %328 : vector<8x32xf32>
    %330 = vector.broadcast %309 : vector<1x32xf32> to vector<8x32xf32>
    %331 = arith.addf %329, %330 : vector<8x32xf32>
    %332 = arith.truncf %331 : vector<8x32xf32> to vector<8x32xbf16>
    %c0_155 = arith.constant 0 : index
    %c0_156 = arith.constant 0 : index
    %c0_157 = arith.constant 0 : index
    %333 = vector.load %arg18[%c0_155, %c0_156, %c0_157] : memref<1x32x64xbf16, #tpu.memory_space<vmem>>, vector<1x32x64xbf16>
    %334 = vector.shape_cast %333 : vector<1x32x64xbf16> to vector<32x64xbf16>
    %cst_158 = arith.constant dense<0.000000e+00> : vector<8x64xf32>
    %335 = tpu.matmul %332, %334, %cst_158 {dimension_numbers = #tpu.dot_dimension_numbers<[1], [0], [0], [1], [0, 0, 1, 1], [], []>} : vector<8x32xbf16>, vector<32x64xbf16>, vector<8x64xf32> -> vector<8x64xf32>
    %c0_159 = arith.constant 0 : index
    %c0_160 = arith.constant 0 : index
    %c0_161 = arith.constant 0 : index
    %336 = vector.load %arg19[%c0_159, %c0_160, %c0_161] : memref<1x1x64xf32, #tpu.memory_space<vmem>>, vector<1x1x64xf32>
    %337 = vector.shape_cast %336 : vector<1x1x64xf32> to vector<1x64xf32>
    %338 = vector.broadcast %337 : vector<1x64xf32> to vector<8x64xf32>
    %339 = arith.addf %335, %338 : vector<8x64xf32>
    %cst_162 = arith.constant 0.000000e+00 : f32
    %340 = vector.broadcast %cst_162 : f32 to vector<8x64xf32>
    %341 = arith.maximumf %339, %340 : vector<8x64xf32>
    %342 = arith.truncf %341 : vector<8x64xf32> to vector<8x64xbf16>
    %c0_163 = arith.constant 0 : index
    %c0_164 = arith.constant 0 : index
    %c0_165 = arith.constant 0 : index
    %343 = vector.load %arg20[%c0_163, %c0_164, %c0_165] : memref<1x64x32xbf16, #tpu.memory_space<vmem>>, vector<1x64x32xbf16>
    %344 = vector.shape_cast %343 : vector<1x64x32xbf16> to vector<64x32xbf16>
    %cst_166 = arith.constant dense<0.000000e+00> : vector<8x32xf32>
    %345 = tpu.matmul %342, %344, %cst_166 {dimension_numbers = #tpu.dot_dimension_numbers<[1], [0], [0], [1], [0, 0, 1, 1], [], []>} : vector<8x64xbf16>, vector<64x32xbf16>, vector<8x32xf32> -> vector<8x32xf32>
    %346 = arith.addf %305, %345 : vector<8x32xf32>
    %c0_167 = arith.constant 0 : index
    %c0_168 = arith.constant 0 : index
    %c0_169 = arith.constant 0 : index
    %347 = vector.load %arg21[%c0_167, %c0_168, %c0_169] : memref<1x1x32xf32, #tpu.memory_space<vmem>>, vector<1x1x32xf32>
    %348 = vector.shape_cast %347 : vector<1x1x32xf32> to vector<1x32xf32>
    %349 = vector.broadcast %348 : vector<1x32xf32> to vector<8x32xf32>
    %350 = arith.addf %346, %349 : vector<8x32xf32>
    %c0_170 = arith.constant 0 : index
    %c0_171 = arith.constant 0 : index
    %351 = vector.load %arg25[%c0_170, %c0_171] : memref<8x32xf32, #tpu.memory_space<vmem>>, vector<8x32xf32>
    tpu.vector_store %arg25[%c0_170, %c0_171], %350 {strides = array<i32>} : memref<8x32xf32, #tpu.memory_space<vmem>>, vector<8x32xf32>,
    %c1_i32 = arith.constant 1 : i32
    %352 = arith.cmpi eq, %arg1, %c1_i32 : i32
    %353 = arith.extui %352 : i1 to i32
    %c0_i32_172 = arith.constant 0 : i32
    %354 = arith.cmpi ne, %353, %c0_i32_172 : i32
    scf.if %354 {
      %c0_173 = arith.constant 0 : index
      %c0_174 = arith.constant 0 : index
      %355 = vector.load %arg22[%c0_173, %c0_174] : memref<1x32xf32, #tpu.memory_space<vmem>>, vector<1x32xf32>
      %c0_175 = arith.constant 0 : index
      %c0_176 = arith.constant 0 : index
      %356 = vector.load %arg23[%c0_175, %c0_176] : memref<1x32xf32, #tpu.memory_space<vmem>>, vector<1x32xf32>
      %cst_177 = arith.constant dense<0.000000e+00> : vector<8xf32>
      %357 = vector.multi_reduction <add>, %350, %cst_177 [1] : vector<8x32xf32> to vector<8xf32>
      %358 = vector.shape_cast %357 : vector<8xf32> to vector<8x1xf32>
      %cst_178 = arith.constant 3.200000e+01 : f32
      %359 = vector.broadcast %cst_178 : f32 to vector<8x1xf32>
      %360 = arith.divf %358, %359 : vector<8x1xf32>
      %361 = vector.broadcast %360 : vector<8x1xf32> to vector<8x32xf32>
      %362 = arith.subf %350, %361 : vector<8x32xf32>
      %363 = arith.mulf %362, %362 : vector<8x32xf32>
      %cst_179 = arith.constant dense<0.000000e+00> : vector<8xf32>
      %364 = vector.multi_reduction <add>, %363, %cst_179 [1] : vector<8x32xf32> to vector<8xf32>
      %365 = vector.shape_cast %364 : vector<8xf32> to vector<8x1xf32>
      %cst_180 = arith.constant 3.200000e+01 : f32
      %366 = vector.broadcast %cst_180 : f32 to vector<8x1xf32>
      %367 = arith.divf %365, %366 : vector<8x1xf32>
      %368 = vector.broadcast %360 : vector<8x1xf32> to vector<8x32xf32>
      %369 = arith.subf %350, %368 : vector<8x32xf32>
      %cst_181 = arith.constant 9.99999997E-7 : f32
      %370 = vector.broadcast %cst_181 : f32 to vector<8x1xf32>
      %371 = arith.addf %367, %370 : vector<8x1xf32>
      %372 = math.rsqrt %371 : vector<8x1xf32>
      %373 = vector.broadcast %372 : vector<8x1xf32> to vector<8x32xf32>
      %374 = arith.mulf %369, %373 : vector<8x32xf32>
      %375 = vector.broadcast %355 : vector<1x32xf32> to vector<8x32xf32>
      %376 = arith.mulf %374, %375 : vector<8x32xf32>
      %377 = vector.broadcast %356 : vector<1x32xf32> to vector<8x32xf32>
      %378 = arith.addf %376, %377 : vector<8x32xf32>
      %c0_182 = arith.constant 0 : index
      %c0_183 = arith.constant 0 : index
      %c0_184 = arith.constant 0 : index
      %379 = vector.load %arg24[%c0_182, %c0_183, %c0_184] : memref<1x8x32xf32, #tpu.memory_space<vmem>>, vector<1x8x32xf32>
      %380 = vector.shape_cast %379 : vector<1x8x32xf32> to vector<8x32xf32>
      %381 = vector.shape_cast %378 : vector<8x32xf32> to vector<1x8x32xf32>
      tpu.vector_store %arg24[%c0_182, %c0_183, %c0_184], %381 {strides = array<i32>} : memref<1x8x32xf32, #tpu.memory_space<vmem>>, vector<1x8x32xf32>,
    } else {
    }
    return
  }
  func.func @transform_0(%arg0: i32, %arg1: i32) -> (i32, i32, i32) {
    %c0_i32 = arith.constant 0 : i32
    %c0_i32_0 = arith.constant 0 : i32
    %c0_i32_1 = arith.constant 0 : i32
    return %arg0, %c0_i32, %c0_i32_0 : i32, i32, i32
  }
  func.func @transform_1(%arg0: i32, %arg1: i32) -> (i32, i32, i32) {
    %c0_i32 = arith.constant 0 : i32
    %c0_i32_0 = arith.constant 0 : i32
    %c0_i32_1 = arith.constant 0 : i32
    return %arg0, %c0_i32, %c0_i32_0 : i32, i32, i32
  }
  func.func @transform_2(%arg0: i32, %arg1: i32) -> (i32, i32, i32) {
    %c0_i32 = arith.constant 0 : i32
    %c0_i32_0 = arith.constant 0 : i32
    %c0_i32_1 = arith.constant 0 : i32
    return %arg0, %c0_i32, %c0_i32_0 : i32, i32, i32
  }
  func.func @transform_3(%arg0: i32, %arg1: i32) -> (i32, i32, i32) {
    %c0_i32 = arith.constant 0 : i32
    %c0_i32_0 = arith.constant 0 : i32
    %c0_i32_1 = arith.constant 0 : i32
    return %arg0, %c0_i32, %c0_i32_0 : i32, i32, i32
  }
  func.func @transform_4(%arg0: i32, %arg1: i32) -> (i32, i32, i32) {
    %c0_i32 = arith.constant 0 : i32
    %c0_i32_0 = arith.constant 0 : i32
    %c0_i32_1 = arith.constant 0 : i32
    return %arg1, %c0_i32, %c0_i32_0 : i32, i32, i32
  }
  func.func @transform_5(%arg0: i32, %arg1: i32) -> (i32, i32, i32) {
    %c0_i32 = arith.constant 0 : i32
    %c0_i32_0 = arith.constant 0 : i32
    %c0_i32_1 = arith.constant 0 : i32
    return %arg1, %c0_i32, %c0_i32_0 : i32, i32, i32
  }
  func.func @transform_6(%arg0: i32, %arg1: i32) -> (i32, i32, i32, i32) {
    %c0_i32 = arith.constant 0 : i32
    %c0_i32_0 = arith.constant 0 : i32
    %c0_i32_1 = arith.constant 0 : i32
    %c0_i32_2 = arith.constant 0 : i32
    return %arg1, %c0_i32, %c0_i32_0, %c0_i32_1 : i32, i32, i32, i32
  }
  func.func @transform_7(%arg0: i32, %arg1: i32) -> (i32, i32, i32) {
    %c0_i32 = arith.constant 0 : i32
    %c0_i32_0 = arith.constant 0 : i32
    %c0_i32_1 = arith.constant 0 : i32
    return %arg1, %c0_i32, %c0_i32_0 : i32, i32, i32
  }
  func.func @transform_8(%arg0: i32, %arg1: i32) -> (i32, i32, i32) {
    %c0_i32 = arith.constant 0 : i32
    %c0_i32_0 = arith.constant 0 : i32
    %c0_i32_1 = arith.constant 0 : i32
    return %arg1, %c0_i32, %c0_i32_0 : i32, i32, i32
  }
  func.func @transform_9(%arg0: i32, %arg1: i32) -> (i32, i32, i32) {
    %c0_i32 = arith.constant 0 : i32
    %c0_i32_0 = arith.constant 0 : i32
    %c0_i32_1 = arith.constant 0 : i32
    return %arg1, %c0_i32, %c0_i32_0 : i32, i32, i32
  }
  func.func @transform_10(%arg0: i32, %arg1: i32) -> (i32, i32, i32) {
    %c0_i32 = arith.constant 0 : i32
    %c0_i32_0 = arith.constant 0 : i32
    %c0_i32_1 = arith.constant 0 : i32
    return %arg1, %c0_i32, %c0_i32_0 : i32, i32, i32
  }
  func.func @transform_11(%arg0: i32, %arg1: i32) -> (i32, i32, i32) {
    %c0_i32 = arith.constant 0 : i32
    %c0_i32_0 = arith.constant 0 : i32
    %c0_i32_1 = arith.constant 0 : i32
    return %arg1, %c0_i32, %c0_i32_0 : i32, i32, i32
  }
  func.func @transform_12(%arg0: i32, %arg1: i32) -> (i32, i32, i32, i32) {
    %c0_i32 = arith.constant 0 : i32
    %c0_i32_0 = arith.constant 0 : i32
    %c0_i32_1 = arith.constant 0 : i32
    %c0_i32_2 = arith.constant 0 : i32
    return %arg1, %c0_i32, %c0_i32_0, %c0_i32_1 : i32, i32, i32, i32
  }
  func.func @transform_13(%arg0: i32, %arg1: i32) -> (i32, i32, i32) {
    %c0_i32 = arith.constant 0 : i32
    %c0_i32_0 = arith.constant 0 : i32
    %c0_i32_1 = arith.constant 0 : i32
    return %arg1, %c0_i32, %c0_i32_0 : i32, i32, i32
  }
  func.func @transform_14(%arg0: i32, %arg1: i32) -> (i32, i32, i32, i32) {
    %c0_i32 = arith.constant 0 : i32
    %c0_i32_0 = arith.constant 0 : i32
    %c0_i32_1 = arith.constant 0 : i32
    %c0_i32_2 = arith.constant 0 : i32
    return %arg1, %c0_i32, %c0_i32_0, %c0_i32_1 : i32, i32, i32, i32
  }
  func.func @transform_15(%arg0: i32, %arg1: i32) -> (i32, i32, i32, i32) {
    %c0_i32 = arith.constant 0 : i32
    %c0_i32_0 = arith.constant 0 : i32
    %c0_i32_1 = arith.constant 0 : i32
    %c0_i32_2 = arith.constant 0 : i32
    return %arg1, %c0_i32, %c0_i32_0, %c0_i32_1 : i32, i32, i32, i32
  }
  func.func @transform_16(%arg0: i32, %arg1: i32) -> (i32, i32, i32) {
    %c0_i32 = arith.constant 0 : i32
    %c0_i32_0 = arith.constant 0 : i32
    %c0_i32_1 = arith.constant 0 : i32
    return %arg1, %c0_i32, %c0_i32_0 : i32, i32, i32
  }
  func.func @transform_17(%arg0: i32, %arg1: i32) -> (i32, i32, i32) {
    %c0_i32 = arith.constant 0 : i32
    %c0_i32_0 = arith.constant 0 : i32
    %c0_i32_1 = arith.constant 0 : i32
    return %arg1, %c0_i32, %c0_i32_0 : i32, i32, i32
  }
  func.func @transform_18(%arg0: i32, %arg1: i32) -> (i32, i32, i32) {
    %c0_i32 = arith.constant 0 : i32
    %c0_i32_0 = arith.constant 0 : i32
    %c0_i32_1 = arith.constant 0 : i32
    return %arg1, %c0_i32, %c0_i32_0 : i32, i32, i32
  }
  func.func @transform_19(%arg0: i32, %arg1: i32) -> (i32, i32, i32) {
    %c0_i32 = arith.constant 0 : i32
    %c0_i32_0 = arith.constant 0 : i32
    %c0_i32_1 = arith.constant 0 : i32
    return %arg1, %c0_i32, %c0_i32_0 : i32, i32, i32
  }
  func.func @transform_20(%arg0: i32, %arg1: i32) -> (i32, i32) {
    %c0_i32 = arith.constant 0 : i32
    %c0_i32_0 = arith.constant 0 : i32
    %c0_i32_1 = arith.constant 0 : i32
    return %c0_i32, %c0_i32_0 : i32, i32
  }
  func.func @transform_21(%arg0: i32, %arg1: i32) -> (i32, i32) {
    %c0_i32 = arith.constant 0 : i32
    %c0_i32_0 = arith.constant 0 : i32
    %c0_i32_1 = arith.constant 0 : i32
    return %c0_i32, %c0_i32_0 : i32, i32
  }
  func.func @transform_22(%arg0: i32, %arg1: i32) -> (i32, i32, i32) {
    %c0_i32 = arith.constant 0 : i32
    %c0_i32_0 = arith.constant 0 : i32
    %c0_i32_1 = arith.constant 0 : i32
    return %arg0, %c0_i32, %c0_i32_0 : i32, i32, i32
  }
}

</mosaic_0001>

<llo_original>
// kernel: decoder_forward.1
$region0: #{decoder_forward.1}
  #allocation0 [shape = 'u32[]', space=smem, size = 0x4, offset = 0x4, fixed_abs, tag = 'smem constant byte address 0x4 - core index']
  #allocation1 [shape = 'u32[144,128]{1,0:T(1,128)}', space=vmem, size = 0x12000, scoped, tag = 'internal scratch']
  #allocation2 [shape = 'f32[8,32]{1,0:T(8,128)}', space=vmem, size = 0x1000, scoped, tag = 'scratch operand']
  %s0 = inlined_call_operand.hbm [shape: f32[2,8,32], index: 0, kind: input, shape index: {}]
  %s1 = inlined_call_operand.vmem [shape: bf16[2,8,32], index: 1, kind: input, shape index: {}]
  %s2 = inlined_call_operand.vmem [shape: f32[2,8,8], index: 2, kind: input, shape index: {}]
  %s3 = inlined_call_operand.vmem [shape: f32[2,1,8], index: 3, kind: input, shape index: {}]
  %s4 = inlined_call_operand.vmem [shape: bf16[2,32,96], index: 4, kind: input, shape index: {}]
  %s5 = inlined_call_operand.hbm [shape: f32[2,1,96], index: 5, kind: input, shape index: {}]
  %s6 = inlined_call_operand.vmem [shape: bf16[2,4,8,32], index: 6, kind: input, shape index: {}]
  %s7 = inlined_call_operand.hbm [shape: f32[2,1,32], index: 7, kind: input, shape index: {}]
  %s8 = inlined_call_operand.vmem [shape: bf16[2,32,32], index: 8, kind: input, shape index: {}]
  %s9 = inlined_call_operand.hbm [shape: f32[2,1,32], index: 9, kind: input, shape index: {}]
  %s10 = inlined_call_operand.vmem [shape: bf16[2,32,64], index: 10, kind: input, shape index: {}]
  %s11 = inlined_call_operand.hbm [shape: f32[2,1,64], index: 11, kind: input, shape index: {}]
  %s12 = inlined_call_operand.vmem [shape: bf16[2,4,8,32], index: 12, kind: input, shape index: {}]
  %s13 = inlined_call_operand.hbm [shape: f32[2,1,32], index: 13, kind: input, shape index: {}]
  %s14 = inlined_call_operand.vmem [shape: f32[2,3,1,32], index: 14, kind: input, shape index: {}]
  %s15 = inlined_call_operand.vmem [shape: f32[2,3,1,32], index: 15, kind: input, shape index: {}]
  %s16 = inlined_call_operand.hbm [shape: bf16[2,32,64], index: 16, kind: input, shape index: {}]
  %s17 = inlined_call_operand.hbm [shape: f32[2,1,64], index: 17, kind: input, shape index: {}]
  %s18 = inlined_call_operand.vmem [shape: bf16[2,64,32], index: 18, kind: input, shape index: {}]
  %s19 = inlined_call_operand.hbm [shape: f32[2,1,32], index: 19, kind: input, shape index: {}]
  %s20 = inlined_call_operand.vmem [shape: f32[1,32], index: 20, kind: input, shape index: {}]
  %s21 = inlined_call_operand.hbm [shape: f32[1,32], index: 21, kind: input, shape index: {}]
  %s22 = inlined_call_operand.hbm [shape: f32[2,8,32], index: 22, kind: output, shape index: {}]
  %s23 = sld [smem:[#allocation0]]
  $region169: #{decoder_forward.1} parent=0
    _
  %s25 = ssub.s32 1, %s23
  %s26 = scalar_select 0, %s25, %s23
  $region1: #{decoder_forward.1} parent=0
    #allocation3 [shape = 'u8[8192]{0}', space=vmem, size = 0x2000, scoped, tag = 'input window, operand 0']
    #allocation4 [shape = 's32[2]{0}', space=sflag, size = 0x8, scoped, tag = 'scoped memory for decoder_forward.1']
    #allocation5 [shape = 's32[2]{0}', space=sflag, size = 0x8, scoped, tag = 'scoped memory for decoder_forward.1']
    #allocation6 [shape = 'u8[1024]{0}', space=vmem, size = 0x400, scoped, tag = 'input window, operand 5']
    #allocation7 [shape = 's32[2]{0}', space=sflag, size = 0x8, scoped, tag = 'scoped memory for decoder_forward.1']
    #allocation8 [shape = 'u8[1024]{0}', space=vmem, size = 0x400, scoped, tag = 'input window, operand 7']
    #allocation9 [shape = 'u8[1024]{0}', space=vmem, size = 0x400, scoped, tag = 'input window, operand 9']
    #allocation10 [shape = 's32[2]{0}', space=sflag, size = 0x8, scoped, tag = 'scoped memory for decoder_forward.1']
    #allocation11 [shape = 'u8[1024]{0}', space=vmem, size = 0x400, scoped, tag = 'input window, operand 11']
    #allocation12 [shape = 'u8[1024]{0}', space=vmem, size = 0x400, scoped, tag = 'input window, operand 13']
    #allocation13 [shape = 's32[2]{0}', space=sflag, size = 0x8, scoped, tag = 'scoped memory for decoder_forward.1']
    #allocation14 [shape = 'u8[16384]{0}', space=vmem, size = 0x4000, scoped, tag = 'input window, operand 16']
    #allocation15 [shape = 'u8[1024]{0}', space=vmem, size = 0x400, scoped, tag = 'input window, operand 17']
    #allocation16 [shape = 's32[2]{0}', space=sflag, size = 0x8, scoped, tag = 'scoped memory for decoder_forward.1']
    #allocation17 [shape = 'u8[1024]{0}', space=vmem, size = 0x400, scoped, tag = 'input window, operand 19']
    #allocation18 [shape = 'u8[512]{0}', space=vmem, size = 0x400, scoped, tag = 'input window, operand 21, single buffered']
    #allocation19 [shape = 's32[1]{0}', space=sflag, size = 0x4, scoped, tag = 'scoped memory for decoder_forward.1']
    #allocation20 [shape = 'u8[8192]{0}', space=vmem, size = 0x2000, scoped, tag = 'output window, operand 0']
    %27 = vsyncpa [#allocation4], 0
    %s28 = scalar_lea.sflag [#allocation4], 1
    %29 = vsyncpa %s28, 0
    %30 = vsyncpa [#allocation7], 0
    %s31 = scalar_lea.sflag [#allocation7], 1
    %32 = vsyncpa %s31, 0
    %33 = vsyncpa [#allocation10], 0
    %s34 = scalar_lea.sflag [#allocation10], 1
    %35 = vsyncpa %s34, 0
    %36 = vsyncpa [#allocation13], 0
    %s37 = scalar_lea.sflag [#allocation13], 1
    %38 = vsyncpa %s37, 0
    %39 = vsyncpa [#allocation16], 0
    %s40 = scalar_lea.sflag [#allocation16], 1
    %41 = vsyncpa %s40, 0
    %42 = vsyncpa [#allocation19], 0
    %43 = vsyncpa [#allocation5], 0
    %s44 = scalar_lea.sflag [#allocation5], 1
    %45 = vsyncpa %s44, 0
    loop: start=0, step=1, limit=6
    $region2: #{decoder_forward.1} parent=1 // loop_pre_header
      _
    $region3: #{decoder_forward.1} parent=1 // loop_header
      %s47 = sphi 0, %s51
      %p48 = scmp.ge.s32.totalorder %s47, 6
      %s54 = sphi 0, %s66
      %s55 = sphi 0, %s62
      %s56 = sphi 0, %s54
      %s57 = sphi 0, %s55
      %s58 = sphi 0, %s56
      %s59 = sphi 0, %s57
      %s69 = sphi 0, %s71
      %s72 = sphi 0, %s69
      %s73 = sphi 0, %s72
      %s89 = sphi 0, %s73
      %s95 = sphi 0, %s97
      %s98 = sphi 0, %s95
      %s99 = sphi 0, %s98
      %s115 = sphi 0, %s99
      %s121 = sphi 0, %s123
      %s124 = sphi 0, %s121
      %s125 = sphi 0, %s124
      %s141 = sphi 0, %s125
      %s147 = sphi 0, %s149
      %s150 = sphi 0, %s147
      %s151 = sphi 0, %s150
      %s167 = sphi 0, %s151
      %s173 = sphi 0, %s175
      %s176 = sphi 0, %s173
      %s177 = sphi 0, %s176
      %s193 = sphi 0, %s177
      %s199 = sphi 0, %s201
      %s202 = sphi 0, %s199
      %s203 = sphi 0, %s202
      %s219 = sphi 0, %s203
      %s225 = sphi 0, %s227
      %s228 = sphi 0, %s225
      %s229 = sphi 0, %s228
      %s245 = sphi 0, %s229
      %s251 = sphi 0, %s253
      %s254 = sphi 0, %s251
      %s255 = sphi 0, %s254
      %s271 = sphi 0, %s255
      %s277 = sphi 0, %s279
      %s280 = sphi 0, %s277
      %s281 = sphi 0, %s280
      %s297 = sphi 0, %s281
      %s303 = sphi 0, %s305
      %s306 = sphi 0, %s303
      %s307 = sphi 0, %s306
      %s323 = sphi 0, %s307
      %s329 = sphi 0, %s331
      %s332 = sphi 0, %s329
      %s333 = sphi 0, %s332
      %s349 = sphi 0, %s333
      %s355 = sphi 0, %s357
      %s358 = sphi 0, %s355
      %s359 = sphi 0, %s358
      %s375 = sphi 0, %s359
      %s381 = sphi 0, %s383
      %s384 = sphi 0, %s381
      %s385 = sphi 0, %s384
      %s401 = sphi 0, %s385
      %s407 = sphi 0, %s409
      %s410 = sphi 0, %s407
      %s411 = sphi 0, %s410
      %s427 = sphi 0, %s411
      %s433 = sphi 0, %s435
      %s436 = sphi 0, %s433
      %s437 = sphi 0, %s436
      %s453 = sphi 0, %s437
      %s459 = sphi 0, %s461
      %s462 = sphi 0, %s459
      %s463 = sphi 0, %s462
      %s479 = sphi 0, %s463
      %s485 = sphi 0, %s487
      %s488 = sphi 0, %s485
      %s489 = sphi 0, %s488
      %s505 = sphi 0, %s489
      %s511 = sphi 0, %s513
      %s514 = sphi 0, %s511
      %s515 = sphi 0, %s514
      %s531 = sphi 0, %s515
      %s537 = sphi 0, %s539
      %s540 = sphi 0, %s537
      %s541 = sphi 0, %s540
      %s557 = sphi 0, %s541
      %s563 = sphi 0, %s565
      %s566 = sphi 0, %s563
      %s567 = sphi 0, %s566
      %s583 = sphi 0, %s567
      %s587 = sphi 0, %s587
      %s589 = sphi 0, %s587
      %s590 = sphi 0, %s589
      %s604 = sphi 0, %s590
      %s608 = sphi 0, %s608
      %s610 = sphi 0, %s608
      %s611 = sphi 0, %s610
      %s625 = sphi 0, %s611
      %s631 = sphi 0, %s633
      %s634 = sphi 0, %s631
      %s635 = sphi 0, %s634
      %s651 = sphi 0, %s635
    $region4: #{decoder_forward.1} parent=1 // loop_header_branch
      %50 = sbr.rel (%p48) target = $region8
    $region5: #{decoder_forward.1} parent=1 // loop_body
      %s52 = ssub.s32 %s47, 1
      %s53 = ssub.s32 %s47, 2
      %s60 = sadd.s32 1, %s55
      %p61 = scmp.ge.s32.totalorder %s60, 2
      %s62 = scalar_select %p61, 0, %s60
      %s63 = sadd.s32 1, %s54
      %s64 = scalar_select %p61, %s63, %s54
      %p65 = scmp.ge.s32.totalorder %s64, 2
      %s66 = scalar_select %p65, 0, %s64
      %s67 = ssub.s32 %s54, %s66
      %p68 = scmp.eq.s32.totalorder %s67, 0
      %s70 = sadd.s32 %s69, 1
      %s71 = scalar_select %p68, %s69, %s70
      %p74 = pneg %p68
      %p75 = scmp.eq.s32.totalorder %s47, 3
      %p76 = por %p74, %p75
      %p77 = scmp.ne.s32.totalorder %s69, %s72
      %p78 = scmp.eq.s32.totalorder %s47, 0
      %p79 = por %p77, %p78
      %p80 = scmp.ne.s32.totalorder %s69, %s72
      %p81 = scmp.eq.s32.totalorder %s52, 3
      %p82 = por %p80, %p81
      %p83 = scmp.ne.s32.totalorder %s72, %s73
      %p84 = scmp.eq.s32.totalorder %s52, 0
      %p85 = por %p83, %p84
      %p86 = scmp.ne.s32.totalorder %s72, %s73
      %p87 = scmp.eq.s32.totalorder %s53, 3
      %p88 = por %p86, %p87
      %p90 = scmp.ne.s32.totalorder %s73, %s89
      %p91 = scmp.eq.s32.totalorder %s53, 0
      %p92 = por %p90, %p91
      %s93 = ssub.s32 %s54, %s66
      %p94 = scmp.eq.s32.totalorder %s93, 0
      %s96 = sadd.s32 %s95, 1
      %s97 = scalar_select %p94, %s95, %s96
      %p100 = pneg %p94
      %p101 = scmp.eq.s32.totalorder %s47, 3
      %p102 = por %p100, %p101
      %p103 = scmp.ne.s32.totalorder %s95, %s98
      %p104 = scmp.eq.s32.totalorder %s47, 0
      %p105 = por %p103, %p104
      %p106 = scmp.ne.s32.totalorder %s95, %s98
      %p107 = scmp.eq.s32.totalorder %s52, 3
      %p108 = por %p106, %p107
      %p109 = scmp.ne.s32.totalorder %s98, %s99
      %p110 = scmp.eq.s32.totalorder %s52, 0
      %p111 = por %p109, %p110
      %p112 = scmp.ne.s32.totalorder %s98, %s99
      %p113 = scmp.eq.s32.totalorder %s53, 3
      %p114 = por %p112, %p113
      %p116 = scmp.ne.s32.totalorder %s99, %s115
      %p117 = scmp.eq.s32.totalorder %s53, 0
      %p118 = por %p116, %p117
      %s119 = ssub.s32 %s54, %s66
      %p120 = scmp.eq.s32.totalorder %s119, 0
      %s122 = sadd.s32 %s121, 1
      %s123 = scalar_select %p120, %s121, %s122
      %p126 = pneg %p120
      %p127 = scmp.eq.s32.totalorder %s47, 3
      %p128 = por %p126, %p127
      %p129 = scmp.ne.s32.totalorder %s121, %s124
      %p130 = scmp.eq.s32.totalorder %s47, 0
      %p131 = por %p129, %p130
      %p132 = scmp.ne.s32.totalorder %s121, %s124
      %p133 = scmp.eq.s32.totalorder %s52, 3
      %p134 = por %p132, %p133
      %p135 = scmp.ne.s32.totalorder %s124, %s125
      %p136 = scmp.eq.s32.totalorder %s52, 0
      %p137 = por %p135, %p136
      %p138 = scmp.ne.s32.totalorder %s124, %s125
      %p139 = scmp.eq.s32.totalorder %s53, 3
      %p140 = por %p138, %p139
      %p142 = scmp.ne.s32.totalorder %s125, %s141
      %p143 = scmp.eq.s32.totalorder %s53, 0
      %p144 = por %p142, %p143
      %s145 = ssub.s32 %s54, %s66
      %p146 = scmp.eq.s32.totalorder %s145, 0
      %s148 = sadd.s32 %s147, 1
      %s149 = scalar_select %p146, %s147, %s148
      %p152 = pneg %p146
      %p153 = scmp.eq.s32.totalorder %s47, 3
      %p154 = por %p152, %p153
      %p155 = scmp.ne.s32.totalorder %s147, %s150
      %p156 = scmp.eq.s32.totalorder %s47, 0
      %p157 = por %p155, %p156
      %p158 = scmp.ne.s32.totalorder %s147, %s150
      %p159 = scmp.eq.s32.totalorder %s52, 3
      %p160 = por %p158, %p159
      %p161 = scmp.ne.s32.totalorder %s150, %s151
      %p162 = scmp.eq.s32.totalorder %s52, 0
      %p163 = por %p161, %p162
      %p164 = scmp.ne.s32.totalorder %s150, %s151
      %p165 = scmp.eq.s32.totalorder %s53, 3
      %p166 = por %p164, %p165
      %p168 = scmp.ne.s32.totalorder %s151, %s167
      %p169 = scmp.eq.s32.totalorder %s53, 0
      %p170 = por %p168, %p169
      %s171 = ssub.s32 %s55, %s62
      %p172 = scmp.eq.s32.totalorder %s171, 0
      %s174 = sadd.s32 %s173, 1
      %s175 = scalar_select %p172, %s173, %s174
      %p178 = pneg %p172
      %p179 = scmp.eq.s32.totalorder %s47, 3
      %p180 = por %p178, %p179
      %p181 = scmp.ne.s32.totalorder %s173, %s176
      %p182 = scmp.eq.s32.totalorder %s47, 0
      %p183 = por %p181, %p182
      %p184 = scmp.ne.s32.totalorder %s173, %s176
      %p185 = scmp.eq.s32.totalorder %s52, 3
      %p186 = por %p184, %p185
      %p187 = scmp.ne.s32.totalorder %s176, %s177
      %p188 = scmp.eq.s32.totalorder %s52, 0
      %p189 = por %p187, %p188
      %p190 = scmp.ne.s32.totalorder %s176, %s177
      %p191 = scmp.eq.s32.totalorder %s53, 3
      %p192 = por %p190, %p191
      %p194 = scmp.ne.s32.totalorder %s177, %s193
      %p195 = scmp.eq.s32.totalorder %s53, 0
      %p196 = por %p194, %p195
      %s197 = ssub.s32 %s55, %s62
      %p198 = scmp.eq.s32.totalorder %s197, 0
      %s200 = sadd.s32 %s199, 1
      %s201 = scalar_select %p198, %s199, %s200
      %p204 = pneg %p198
      %p205 = scmp.eq.s32.totalorder %s47, 3
      %p206 = por %p204, %p205
      %p207 = scmp.ne.s32.totalorder %s199, %s202
      %p208 = scmp.eq.s32.totalorder %s47, 0
      %p209 = por %p207, %p208
      %p210 = scmp.ne.s32.totalorder %s199, %s202
      %p211 = scmp.eq.s32.totalorder %s52, 3
      %p212 = por %p210, %p211
      %p213 = scmp.ne.s32.totalorder %s202, %s203
      %p214 = scmp.eq.s32.totalorder %s52, 0
      %p215 = por %p213, %p214
      %p216 = scmp.ne.s32.totalorder %s202, %s203
      %p217 = scmp.eq.s32.totalorder %s53, 3
      %p218 = por %p216, %p217
      %p220 = scmp.ne.s32.totalorder %s203, %s219
      %p221 = scmp.eq.s32.totalorder %s53, 0
      %p222 = por %p220, %p221
      %s223 = ssub.s32 %s55, %s62
      %p224 = scmp.eq.s32.totalorder %s223, 0
      %s226 = sadd.s32 %s225, 1
      %s227 = scalar_select %p224, %s225, %s226
      %p230 = pneg %p224
      %p231 = scmp.eq.s32.totalorder %s47, 3
      %p232 = por %p230, %p231
      %p233 = scmp.ne.s32.totalorder %s225, %s228
      %p234 = scmp.eq.s32.totalorder %s47, 0
      %p235 = por %p233, %p234
      %p236 = scmp.ne.s32.totalorder %s225, %s228
      %p237 = scmp.eq.s32.totalorder %s52, 3
      %p238 = por %p236, %p237
      %p239 = scmp.ne.s32.totalorder %s228, %s229
      %p240 = scmp.eq.s32.totalorder %s52, 0
      %p241 = por %p239, %p240
      %p242 = scmp.ne.s32.totalorder %s228, %s229
      %p243 = scmp.eq.s32.totalorder %s53, 3
      %p244 = por %p242, %p243
      %p246 = scmp.ne.s32.totalorder %s229, %s245
      %p247 = scmp.eq.s32.totalorder %s53, 0
      %p248 = por %p246, %p247
      %s249 = ssub.s32 %s55, %s62
      %p250 = scmp.eq.s32.totalorder %s249, 0
      %s252 = sadd.s32 %s251, 1
      %s253 = scalar_select %p250, %s251, %s252
      %p256 = pneg %p250
      %p257 = scmp.eq.s32.totalorder %s47, 3
      %p258 = por %p256, %p257
      %p259 = scmp.ne.s32.totalorder %s251, %s254
      %p260 = scmp.eq.s32.totalorder %s47, 0
      %p261 = por %p259, %p260
      %p262 = scmp.ne.s32.totalorder %s251, %s254
      %p263 = scmp.eq.s32.totalorder %s52, 3
      %p264 = por %p262, %p263
      %p265 = scmp.ne.s32.totalorder %s254, %s255
      %p266 = scmp.eq.s32.totalorder %s52, 0
      %p267 = por %p265, %p266
      %p268 = scmp.ne.s32.totalorder %s254, %s255
      %p269 = scmp.eq.s32.totalorder %s53, 3
      %p270 = por %p268, %p269
      %p272 = scmp.ne.s32.totalorder %s255, %s271
      %p273 = scmp.eq.s32.totalorder %s53, 0
      %p274 = por %p272, %p273
      %s275 = ssub.s32 %s55, %s62
      %p276 = scmp.eq.s32.totalorder %s275, 0
      %s278 = sadd.s32 %s277, 1
      %s279 = scalar_select %p276, %s277, %s278
      %p282 = pneg %p276
      %p283 = scmp.eq.s32.totalorder %s47, 3
      %p284 = por %p282, %p283
      %p285 = scmp.ne.s32.totalorder %s277, %s280
      %p286 = scmp.eq.s32.totalorder %s47, 0
      %p287 = por %p285, %p286
      %p288 = scmp.ne.s32.totalorder %s277, %s280
      %p289 = scmp.eq.s32.totalorder %s52, 3
      %p290 = por %p288, %p289
      %p291 = scmp.ne.s32.totalorder %s280, %s281
      %p292 = scmp.eq.s32.totalorder %s52, 0
      %p293 = por %p291, %p292
      %p294 = scmp.ne.s32.totalorder %s280, %s281
      %p295 = scmp.eq.s32.totalorder %s53, 3
      %p296 = por %p294, %p295
      %p298 = scmp.ne.s32.totalorder %s281, %s297
      %p299 = scmp.eq.s32.totalorder %s53, 0
      %p300 = por %p298, %p299
      %s301 = ssub.s32 %s55, %s62
      %p302 = scmp.eq.s32.totalorder %s301, 0
      %s304 = sadd.s32 %s303, 1
      %s305 = scalar_select %p302, %s303, %s304
      %p308 = pneg %p302
      %p309 = scmp.eq.s32.totalorder %s47, 3
      %p310 = por %p308, %p309
      %p311 = scmp.ne.s32.totalorder %s303, %s306
      %p312 = scmp.eq.s32.totalorder %s47, 0
      %p313 = por %p311, %p312
      %p314 = scmp.ne.s32.totalorder %s303, %s306
      %p315 = scmp.eq.s32.totalorder %s52, 3
      %p316 = por %p314, %p315
      %p317 = scmp.ne.s32.totalorder %s306, %s307
      %p318 = scmp.eq.s32.totalorder %s52, 0
      %p319 = por %p317, %p318
      %p320 = scmp.ne.s32.totalorder %s306, %s307
      %p321 = scmp.eq.s32.totalorder %s53, 3
      %p322 = por %p320, %p321
      %p324 = scmp.ne.s32.totalorder %s307, %s323
      %p325 = scmp.eq.s32.totalorder %s53, 0
      %p326 = por %p324, %p325
      %s327 = ssub.s32 %s55, %s62
      %p328 = scmp.eq.s32.totalorder %s327, 0
      %s330 = sadd.s32 %s329, 1
      %s331 = scalar_select %p328, %s329, %s330
      %p334 = pneg %p328
      %p335 = scmp.eq.s32.totalorder %s47, 3
      %p336 = por %p334, %p335
      %p337 = scmp.ne.s32.totalorder %s329, %s332
      %p338 = scmp.eq.s32.totalorder %s47, 0
      %p339 = por %p337, %p338
      %p340 = scmp.ne.s32.totalorder %s329, %s332
      %p341 = scmp.eq.s32.totalorder %s52, 3
      %p342 = por %p340, %p341
      %p343 = scmp.ne.s32.totalorder %s332, %s333
      %p344 = scmp.eq.s32.totalorder %s52, 0
      %p345 = por %p343, %p344
      %p346 = scmp.ne.s32.totalorder %s332, %s333
      %p347 = scmp.eq.s32.totalorder %s53, 3
      %p348 = por %p346, %p347
      %p350 = scmp.ne.s32.totalorder %s333, %s349
      %p351 = scmp.eq.s32.totalorder %s53, 0
      %p352 = por %p350, %p351
      %s353 = ssub.s32 %s55, %s62
      %p354 = scmp.eq.s32.totalorder %s353, 0
      %s356 = sadd.s32 %s355, 1
      %s357 = scalar_select %p354, %s355, %s356
      %p360 = pneg %p354
      %p361 = scmp.eq.s32.totalorder %s47, 3
      %p362 = por %p360, %p361
      %p363 = scmp.ne.s32.totalorder %s355, %s358
      %p364 = scmp.eq.s32.totalorder %s47, 0
      %p365 = por %p363, %p364
      %p366 = scmp.ne.s32.totalorder %s355, %s358
      %p367 = scmp.eq.s32.totalorder %s52, 3
      %p368 = por %p366, %p367
      %p369 = scmp.ne.s32.totalorder %s358, %s359
      %p370 = scmp.eq.s32.totalorder %s52, 0
      %p371 = por %p369, %p370
      %p372 = scmp.ne.s32.totalorder %s358, %s359
      %p373 = scmp.eq.s32.totalorder %s53, 3
      %p374 = por %p372, %p373
      %p376 = scmp.ne.s32.totalorder %s359, %s375
      %p377 = scmp.eq.s32.totalorder %s53, 0
      %p378 = por %p376, %p377
      %s379 = ssub.s32 %s55, %s62
      %p380 = scmp.eq.s32.totalorder %s379, 0
      %s382 = sadd.s32 %s381, 1
      %s383 = scalar_select %p380, %s381, %s382
      %p386 = pneg %p380
      %p387 = scmp.eq.s32.totalorder %s47, 3
      %p388 = por %p386, %p387
      %p389 = scmp.ne.s32.totalorder %s381, %s384
      %p390 = scmp.eq.s32.totalorder %s47, 0
      %p391 = por %p389, %p390
      %p392 = scmp.ne.s32.totalorder %s381, %s384
      %p393 = scmp.eq.s32.totalorder %s52, 3
      %p394 = por %p392, %p393
      %p395 = scmp.ne.s32.totalorder %s384, %s385
      %p396 = scmp.eq.s32.totalorder %s52, 0
      %p397 = por %p395, %p396
      %p398 = scmp.ne.s32.totalorder %s384, %s385
      %p399 = scmp.eq.s32.totalorder %s53, 3
      %p400 = por %p398, %p399
      %p402 = scmp.ne.s32.totalorder %s385, %s401
      %p403 = scmp.eq.s32.totalorder %s53, 0
      %p404 = por %p402, %p403
      %s405 = ssub.s32 %s55, %s62
      %p406 = scmp.eq.s32.totalorder %s405, 0
      %s408 = sadd.s32 %s407, 1
      %s409 = scalar_select %p406, %s407, %s408
      %p412 = pneg %p406
      %p413 = scmp.eq.s32.totalorder %s47, 3
      %p414 = por %p412, %p413
      %p415 = scmp.ne.s32.totalorder %s407, %s410
      %p416 = scmp.eq.s32.totalorder %s47, 0
      %p417 = por %p415, %p416
      %p418 = scmp.ne.s32.totalorder %s407, %s410
      %p419 = scmp.eq.s32.totalorder %s52, 3
      %p420 = por %p418, %p419
      %p421 = scmp.ne.s32.totalorder %s410, %s411
      %p422 = scmp.eq.s32.totalorder %s52, 0
      %p423 = por %p421, %p422
      %p424 = scmp.ne.s32.totalorder %s410, %s411
      %p425 = scmp.eq.s32.totalorder %s53, 3
      %p426 = por %p424, %p425
      %p428 = scmp.ne.s32.totalorder %s411, %s427
      %p429 = scmp.eq.s32.totalorder %s53, 0
      %p430 = por %p428, %p429
      %s431 = ssub.s32 %s55, %s62
      %p432 = scmp.eq.s32.totalorder %s431, 0
      %s434 = sadd.s32 %s433, 1
      %s435 = scalar_select %p432, %s433, %s434
      %p438 = pneg %p432
      %p439 = scmp.eq.s32.totalorder %s47, 3
      %p440 = por %p438, %p439
      %p441 = scmp.ne.s32.totalorder %s433, %s436
      %p442 = scmp.eq.s32.totalorder %s47, 0
      %p443 = por %p441, %p442
      %p444 = scmp.ne.s32.totalorder %s433, %s436
      %p445 = scmp.eq.s32.totalorder %s52, 3
      %p446 = por %p444, %p445
      %p447 = scmp.ne.s32.totalorder %s436, %s437
      %p448 = scmp.eq.s32.totalorder %s52, 0
      %p449 = por %p447, %p448
      %p450 = scmp.ne.s32.totalorder %s436, %s437
      %p451 = scmp.eq.s32.totalorder %s53, 3
      %p452 = por %p450, %p451
      %p454 = scmp.ne.s32.totalorder %s437, %s453
      %p455 = scmp.eq.s32.totalorder %s53, 0
      %p456 = por %p454, %p455
      %s457 = ssub.s32 %s55, %s62
      %p458 = scmp.eq.s32.totalorder %s457, 0
      %s460 = sadd.s32 %s459, 1
      %s461 = scalar_select %p458, %s459, %s460
      %p464 = pneg %p458
      %p465 = scmp.eq.s32.totalorder %s47, 3
      %p466 = por %p464, %p465
      %p467 = scmp.ne.s32.totalorder %s459, %s462
      %p468 = scmp.eq.s32.totalorder %s47, 0
      %p469 = por %p467, %p468
      %p470 = scmp.ne.s32.totalorder %s459, %s462
      %p471 = scmp.eq.s32.totalorder %s52, 3
      %p472 = por %p470, %p471
      %p473 = scmp.ne.s32.totalorder %s462, %s463
      %p474 = scmp.eq.s32.totalorder %s52, 0
      %p475 = por %p473, %p474
      %p476 = scmp.ne.s32.totalorder %s462, %s463
      %p477 = scmp.eq.s32.totalorder %s53, 3
      %p478 = por %p476, %p477
      %p480 = scmp.ne.s32.totalorder %s463, %s479
      %p481 = scmp.eq.s32.totalorder %s53, 0
      %p482 = por %p480, %p481
      %s483 = ssub.s32 %s55, %s62
      %p484 = scmp.eq.s32.totalorder %s483, 0
      %s486 = sadd.s32 %s485, 1
      %s487 = scalar_select %p484, %s485, %s486
      %p490 = pneg %p484
      %p491 = scmp.eq.s32.totalorder %s47, 3
      %p492 = por %p490, %p491
      %p493 = scmp.ne.s32.totalorder %s485, %s488
      %p494 = scmp.eq.s32.totalorder %s47, 0
      %p495 = por %p493, %p494
      %p496 = scmp.ne.s32.totalorder %s485, %s488
      %p497 = scmp.eq.s32.totalorder %s52, 3
      %p498 = por %p496, %p497
      %p499 = scmp.ne.s32.totalorder %s488, %s489
      %p500 = scmp.eq.s32.totalorder %s52, 0
      %p501 = por %p499, %p500
      %p502 = scmp.ne.s32.totalorder %s488, %s489
      %p503 = scmp.eq.s32.totalorder %s53, 3
      %p504 = por %p502, %p503
      %p506 = scmp.ne.s32.totalorder %s489, %s505
      %p507 = scmp.eq.s32.totalorder %s53, 0
      %p508 = por %p506, %p507
      %s509 = ssub.s32 %s55, %s62
      %p510 = scmp.eq.s32.totalorder %s509, 0
      %s512 = sadd.s32 %s511, 1
      %s513 = scalar_select %p510, %s511, %s512
      %p516 = pneg %p510
      %p517 = scmp.eq.s32.totalorder %s47, 3
      %p518 = por %p516, %p517
      %p519 = scmp.ne.s32.totalorder %s511, %s514
      %p520 = scmp.eq.s32.totalorder %s47, 0
      %p521 = por %p519, %p520
      %p522 = scmp.ne.s32.totalorder %s511, %s514
      %p523 = scmp.eq.s32.totalorder %s52, 3
      %p524 = por %p522, %p523
      %p525 = scmp.ne.s32.totalorder %s514, %s515
      %p526 = scmp.eq.s32.totalorder %s52, 0
      %p527 = por %p525, %p526
      %p528 = scmp.ne.s32.totalorder %s514, %s515
      %p529 = scmp.eq.s32.totalorder %s53, 3
      %p530 = por %p528, %p529
      %p532 = scmp.ne.s32.totalorder %s515, %s531
      %p533 = scmp.eq.s32.totalorder %s53, 0
      %p534 = por %p532, %p533
      %s535 = ssub.s32 %s55, %s62
      %p536 = scmp.eq.s32.totalorder %s535, 0
      %s538 = sadd.s32 %s537, 1
      %s539 = scalar_select %p536, %s537, %s538
      %p542 = pneg %p536
      %p543 = scmp.eq.s32.totalorder %s47, 3
      %p544 = por %p542, %p543
      %p545 = scmp.ne.s32.totalorder %s537, %s540
      %p546 = scmp.eq.s32.totalorder %s47, 0
      %p547 = por %p545, %p546
      %p548 = scmp.ne.s32.totalorder %s537, %s540
      %p549 = scmp.eq.s32.totalorder %s52, 3
      %p550 = por %p548, %p549
      %p551 = scmp.ne.s32.totalorder %s540, %s541
      %p552 = scmp.eq.s32.totalorder %s52, 0
      %p553 = por %p551, %p552
      %p554 = scmp.ne.s32.totalorder %s540, %s541
      %p555 = scmp.eq.s32.totalorder %s53, 3
      %p556 = por %p554, %p555
      %p558 = scmp.ne.s32.totalorder %s541, %s557
      %p559 = scmp.eq.s32.totalorder %s53, 0
      %p560 = por %p558, %p559
      %s561 = ssub.s32 %s55, %s62
      %p562 = scmp.eq.s32.totalorder %s561, 0
      %s564 = sadd.s32 %s563, 1
      %s565 = scalar_select %p562, %s563, %s564
      %p568 = pneg %p562
      %p569 = scmp.eq.s32.totalorder %s47, 3
      %p570 = por %p568, %p569
      %p571 = scmp.ne.s32.totalorder %s563, %s566
      %p572 = scmp.eq.s32.totalorder %s47, 0
      %p573 = por %p571, %p572
      %p574 = scmp.ne.s32.totalorder %s563, %s566
      %p575 = scmp.eq.s32.totalorder %s52, 3
      %p576 = por %p574, %p575
      %p577 = scmp.ne.s32.totalorder %s566, %s567
      %p578 = scmp.eq.s32.totalorder %s52, 0
      %p579 = por %p577, %p578
      %p580 = scmp.ne.s32.totalorder %s566, %s567
      %p581 = scmp.eq.s32.totalorder %s53, 3
      %p582 = por %p580, %p581
      %p584 = scmp.ne.s32.totalorder %s567, %s583
      %p585 = scmp.eq.s32.totalorder %s53, 0
      %p586 = por %p584, %p585
      %s588 = sadd.s32 %s587, 1
      %p591 = scmp.eq.s32.totalorder %s47, 3
      %p592 = scmp.ne.s32.totalorder %s587, %s589
      %p593 = scmp.eq.s32.totalorder %s47, 0
      %p594 = por %p592, %p593
      %p595 = scmp.ne.s32.totalorder %s587, %s589
      %p596 = scmp.eq.s32.totalorder %s52, 3
      %p597 = por %p595, %p596
      %p598 = scmp.ne.s32.totalorder %s589, %s590
      %p599 = scmp.eq.s32.totalorder %s52, 0
      %p600 = por %p598, %p599
      %p601 = scmp.ne.s32.totalorder %s589, %s590
      %p602 = scmp.eq.s32.totalorder %s53, 3
      %p603 = por %p601, %p602
      %p605 = scmp.ne.s32.totalorder %s590, %s604
      %p606 = scmp.eq.s32.totalorder %s53, 0
      %p607 = por %p605, %p606
      %s609 = sadd.s32 %s608, 1
      %p612 = scmp.eq.s32.totalorder %s47, 3
      %p613 = scmp.ne.s32.totalorder %s608, %s610
      %p614 = scmp.eq.s32.totalorder %s47, 0
      %p615 = por %p613, %p614
      %p616 = scmp.ne.s32.totalorder %s608, %s610
      %p617 = scmp.eq.s32.totalorder %s52, 3
      %p618 = por %p616, %p617
      %p619 = scmp.ne.s32.totalorder %s610, %s611
      %p620 = scmp.eq.s32.totalorder %s52, 0
      %p621 = por %p619, %p620
      %p622 = scmp.ne.s32.totalorder %s610, %s611
      %p623 = scmp.eq.s32.totalorder %s53, 3
      %p624 = por %p622, %p623
      %p626 = scmp.ne.s32.totalorder %s611, %s625
      %p627 = scmp.eq.s32.totalorder %s53, 0
      %p628 = por %p626, %p627
      %s629 = ssub.s32 %s54, %s66
      %p630 = scmp.eq.s32.totalorder %s629, 0
      %s632 = sadd.s32 %s631, 1
      %s633 = scalar_select %p630, %s631, %s632
      %p636 = pneg %p630
      %p637 = scmp.eq.s32.totalorder %s47, 3
      %p638 = por %p636, %p637
      %p639 = scmp.ne.s32.totalorder %s631, %s634
      %p640 = scmp.eq.s32.totalorder %s47, 0
      %p641 = por %p639, %p640
      %p642 = scmp.ne.s32.totalorder %s631, %s634
      %p643 = scmp.eq.s32.totalorder %s52, 3
      %p644 = por %p642, %p643
      %p645 = scmp.ne.s32.totalorder %s634, %s635
      %p646 = scmp.eq.s32.totalorder %s52, 0
      %p647 = por %p645, %p646
      %p648 = scmp.ne.s32.totalorder %s634, %s635
      %p649 = scmp.eq.s32.totalorder %s53, 3
      %p650 = por %p648, %p649
      %p652 = scmp.ne.s32.totalorder %s635, %s651
      %p653 = scmp.eq.s32.totalorder %s53, 0
      %p654 = por %p652, %p653
      %p655 = scmp.le.s32.totalorder 1, %s47
      %p656 = scmp.lt.s32.totalorder %s47, 5
      %p657 = pnand %p655, %p656
      %p658 = pneg %p657
      // Predicated region
      $region9: #{decoder_forward.1} parent=5 // pred_check
        _
      $region10: #{decoder_forward.1} parent=5 // pred_check_branch
        %660 = sbr.rel (%p657) target = $region12
      $region11: #{decoder_forward.1} parent=5 // pred_region
        %s661 = ssub.s32 %s47, 1
        // Predicated region
        $region13: #{decoder_forward.1} parent=11 // pred_check
          %p662 = pneg %p600
        $region14: #{decoder_forward.1} parent=11 // pred_check_branch
          %664 = sbr.rel (%p662) target = $region16
        $region15: #{decoder_forward.1} parent=11 // pred_region
          _
        $region16: #{decoder_forward.1} parent=11 // pred_fallthru
          _
        // Predicated region
        $region17: #{decoder_forward.1} parent=11 // pred_check
          %p665 = pneg %p621
        $region18: #{decoder_forward.1} parent=11 // pred_check_branch
          %667 = sbr.rel (%p665) target = $region20
        $region19: #{decoder_forward.1} parent=11 // pred_region
          %s669 = ssub.s32 16, 16
          %670 = vsyncadd [#allocation19], %s669
          %s672 = sshll.u32 [#allocation18], 4
          %s673 = int_to_ptr.vmem [resolvable:$true] %s672
          %675 = dma.hbm_to_vmem [thread:$0]  %s21, 16, %s673, [#allocation19]
        $region20: #{decoder_forward.1} parent=11 // pred_fallthru
          _
      $region12: #{decoder_forward.1} parent=5 // pred_fallthru
        _
      %p676 = scmp.lt.s32.totalorder %s47, 4
      // Predicated region
      $region21: #{decoder_forward.1} parent=5 // pred_check
        %p677 = pneg %p676
      $region22: #{decoder_forward.1} parent=5 // pred_check_branch
        %679 = sbr.rel (%p677) target = $region24
      $region23: #{decoder_forward.1} parent=5 // pred_region
        // Predicated region
        $region25: #{decoder_forward.1} parent=23 // pred_check
          %p680 = pneg %p79
        $region26: #{decoder_forward.1} parent=23 // pred_check_branch
          %682 = sbr.rel (%p680) target = $region28
        $region27: #{decoder_forward.1} parent=23 // pred_region
          %s683 = sand.u32 %s69, 1
          %s684 = scalar_lea.sflag [#allocation4], %s683
          %s685 = sand.u32 %s69, 1
          %s686 = smul.addr %s685, 8
          %s687 = scalar_lea.vmem [#allocation3], %s686
          %s689 = ssub.s32 128, 128
          %690 = vsyncadd %s684, %s689
          %s691 = smul.addr %s54, 128
          %s692 = scalar_lea.hbm %s0, %s691
          %s694 = sshll.u32 %s687, 4
          %s695 = int_to_ptr.vmem [resolvable:$true] %s694
          %697 = dma.hbm_to_vmem [thread:$0]  %s692, 128, %s695, %s684
        $region28: #{decoder_forward.1} parent=23 // pred_fallthru
          _
        // Predicated region
        $region29: #{decoder_forward.1} parent=23 // pred_check
          %p698 = pneg %p105
        $region30: #{decoder_forward.1} parent=23 // pred_check_branch
          %700 = sbr.rel (%p698) target = $region32
        $region31: #{decoder_forward.1} parent=23 // pred_region
          %p701 = scmp.lt.s32.totalorder %s54, 1
          %s702 = scalar_select %p701, %s54, 1
          %s703 = smul.addr %s702, 4
          %s704 = scalar_lea.vmem %s1, %s703
        $region32: #{decoder_forward.1} parent=23 // pred_fallthru
          _
        // Predicated region
        $region33: #{decoder_forward.1} parent=23 // pred_check
          %p705 = pneg %p131
        $region34: #{decoder_forward.1} parent=23 // pred_check_branch
          %707 = sbr.rel (%p705) target = $region36
        $region35: #{decoder_forward.1} parent=23 // pred_region
          %p708 = scmp.lt.s32.totalorder %s54, 1
          %s709 = scalar_select %p708, %s54, 1
          %s710 = smul.addr %s709, 8
          %s711 = scalar_lea.vmem %s2, %s710
        $region36: #{decoder_forward.1} parent=23 // pred_fallthru
          _
        // Predicated region
        $region37: #{decoder_forward.1} parent=23 // pred_check
          %p712 = pneg %p157
        $region38: #{decoder_forward.1} parent=23 // pred_check_branch
          %714 = sbr.rel (%p712) target = $region40
        $region39: #{decoder_forward.1} parent=23 // pred_region
          %p715 = scmp.lt.s32.totalorder %s54, 1
          %s716 = scalar_select %p715, %s54, 1
          %s717 = scalar_lea.vmem %s3, %s716
        $region40: #{decoder_forward.1} parent=23 // pred_fallthru
          _
        // Predicated region
        $region41: #{decoder_forward.1} parent=23 // pred_check
          %p718 = pneg %p183
        $region42: #{decoder_forward.1} parent=23 // pred_check_branch
          %720 = sbr.rel (%p718) target = $region44
        $region43: #{decoder_forward.1} parent=23 // pred_region
          %p721 = scmp.lt.s32.totalorder %s55, 1
          %s722 = scalar_select %p721, %s55, 1
          %s723 = smul.addr %s722, 4
          %s724 = smul.addr %s723, 4
          %s725 = scalar_lea.vmem %s4, %s724
        $region44: #{decoder_forward.1} parent=23 // pred_fallthru
          _
        // Predicated region
        $region45: #{decoder_forward.1} parent=23 // pred_check
          %p726 = pneg %p209
        $region46: #{decoder_forward.1} parent=23 // pred_check_branch
          %728 = sbr.rel (%p726) target = $region48
        $region47: #{decoder_forward.1} parent=23 // pred_region
          %s729 = sand.u32 %s47, 1
          %s730 = scalar_lea.sflag [#allocation7], %s729
          %s731 = sand.u32 %s199, 1
          %s732 = scalar_lea.vmem [#allocation6], %s731
          %s734 = ssub.s32 16, 16
          %735 = vsyncadd %s730, %s734
          %s736 = smul.addr %s55, 16
          %s737 = scalar_lea.hbm %s5, %s736
          %s739 = sshll.u32 %s732, 4
          %s740 = int_to_ptr.vmem [resolvable:$true] %s739
          %742 = dma.hbm_to_vmem [thread:$0]  %s737, 16, %s740, %s730
        $region48: #{decoder_forward.1} parent=23 // pred_fallthru
          _
        // Predicated region
        $region49: #{decoder_forward.1} parent=23 // pred_check
          %p743 = pneg %p235
        $region50: #{decoder_forward.1} parent=23 // pred_check_branch
          %745 = sbr.rel (%p743) target = $region52
        $region51: #{decoder_forward.1} parent=23 // pred_region
          %p746 = scmp.lt.s32.totalorder %s55, 1
          %s747 = scalar_select %p746, %s55, 1
          %s748 = smul.addr %s747, 4
          %s749 = smul.addr %s748, 4
          %s750 = scalar_lea.vmem %s6, %s749
        $region52: #{decoder_forward.1} parent=23 // pred_fallthru
          _
        // Predicated region
        $region53: #{decoder_forward.1} parent=23 // pred_check
          %p751 = pneg %p261
        $region54: #{decoder_forward.1} parent=23 // pred_check_branch
          %753 = sbr.rel (%p751) target = $region56
        $region55: #{decoder_forward.1} parent=23 // pred_region
          %s754 = sand.u32 %s47, 1
          %s755 = scalar_lea.sflag [#allocation7], %s754
          %s756 = sand.u32 %s251, 1
          %s757 = scalar_lea.vmem [#allocation8], %s756
          %s759 = ssub.s32 16, 16
          %760 = vsyncadd %s755, %s759
          %s761 = smul.addr %s55, 16
          %s762 = scalar_lea.hbm %s7, %s761
          %s764 = sshll.u32 %s757, 4
          %s765 = int_to_ptr.vmem [resolvable:$true] %s764
          %767 = dma.hbm_to_vmem [thread:$0]  %s762, 16, %s765, %s755
        $region56: #{decoder_forward.1} parent=23 // pred_fallthru
          _
        // Predicated region
        $region57: #{decoder_forward.1} parent=23 // pred_check
          %p768 = pneg %p287
        $region58: #{decoder_forward.1} parent=23 // pred_check_branch
          %770 = sbr.rel (%p768) target = $region60
        $region59: #{decoder_forward.1} parent=23 // pred_region
          %p771 = scmp.lt.s32.totalorder %s55, 1
          %s772 = scalar_select %p771, %s55, 1
          %s773 = smul.addr %s772, 4
          %s774 = smul.addr %s773, 4
          %s775 = scalar_lea.vmem %s8, %s774
        $region60: #{decoder_forward.1} parent=23 // pred_fallthru
          _
        // Predicated region
        $region61: #{decoder_forward.1} parent=23 // pred_check
          %p776 = pneg %p313
        $region62: #{decoder_forward.1} parent=23 // pred_check_branch
          %778 = sbr.rel (%p776) target = $region64
        $region63: #{decoder_forward.1} parent=23 // pred_region
          %s779 = sand.u32 %s47, 1
          %s780 = scalar_lea.sflag [#allocation10], %s779
          %s781 = sand.u32 %s303, 1
          %s782 = scalar_lea.vmem [#allocation9], %s781
          %s784 = ssub.s32 16, 16
          %785 = vsyncadd %s780, %s784
          %s786 = smul.addr %s55, 16
          %s787 = scalar_lea.hbm %s9, %s786
          %s789 = sshll.u32 %s782, 4
          %s790 = int_to_ptr.vmem [resolvable:$true] %s789
          %792 = dma.hbm_to_vmem [thread:$0]  %s787, 16, %s790, %s780
        $region64: #{decoder_forward.1} parent=23 // pred_fallthru
          _
        // Predicated region
        $region65: #{decoder_forward.1} parent=23 // pred_check
          %p793 = pneg %p339
        $region66: #{decoder_forward.1} parent=23 // pred_check_branch
          %795 = sbr.rel (%p793) target = $region68
        $region67: #{decoder_forward.1} parent=23 // pred_region
          %p796 = scmp.lt.s32.totalorder %s55, 1
          %s797 = scalar_select %p796, %s55, 1
          %s798 = smul.addr %s797, 4
          %s799 = smul.addr %s798, 4
          %s800 = scalar_lea.vmem %s10, %s799
        $region68: #{decoder_forward.1} parent=23 // pred_fallthru
          _
        // Predicated region
        $region69: #{decoder_forward.1} parent=23 // pred_check
          %p801 = pneg %p365
        $region70: #{decoder_forward.1} parent=23 // pred_check_branch
          %803 = sbr.rel (%p801) target = $region72
        $region71: #{decoder_forward.1} parent=23 // pred_region
          %s804 = sand.u32 %s47, 1
          %s805 = scalar_lea.sflag [#allocation10], %s804
          %s806 = sand.u32 %s355, 1
          %s807 = scalar_lea.vmem [#allocation11], %s806
          %s809 = ssub.s32 16, 16
          %810 = vsyncadd %s805, %s809
          %s811 = smul.addr %s55, 16
          %s812 = scalar_lea.hbm %s11, %s811
          %s814 = sshll.u32 %s807, 4
          %s815 = int_to_ptr.vmem [resolvable:$true] %s814
          %817 = dma.hbm_to_vmem [thread:$0]  %s812, 16, %s815, %s805
        $region72: #{decoder_forward.1} parent=23 // pred_fallthru
          _
        // Predicated region
        $region73: #{decoder_forward.1} parent=23 // pred_check
          %p818 = pneg %p391
        $region74: #{decoder_forward.1} parent=23 // pred_check_branch
          %820 = sbr.rel (%p818) target = $region76
        $region75: #{decoder_forward.1} parent=23 // pred_region
          %p821 = scmp.lt.s32.totalorder %s55, 1
          %s822 = scalar_select %p821, %s55, 1
          %s823 = smul.addr %s822, 4
          %s824 = smul.addr %s823, 4
          %s825 = scalar_lea.vmem %s12, %s824
        $region76: #{decoder_forward.1} parent=23 // pred_fallthru
          _
        // Predicated region
        $region77: #{decoder_forward.1} parent=23 // pred_check
          %p826 = pneg %p417
        $region78: #{decoder_forward.1} parent=23 // pred_check_branch
          %828 = sbr.rel (%p826) target = $region80
        $region79: #{decoder_forward.1} parent=23 // pred_region
          %s829 = sand.u32 %s47, 1
          %s830 = scalar_lea.sflag [#allocation13], %s829
          %s831 = sand.u32 %s407, 1
          %s832 = scalar_lea.vmem [#allocation12], %s831
          %s834 = ssub.s32 16, 16
          %835 = vsyncadd %s830, %s834
          %s836 = smul.addr %s55, 16
          %s837 = scalar_lea.hbm %s13, %s836
          %s839 = sshll.u32 %s832, 4
          %s840 = int_to_ptr.vmem [resolvable:$true] %s839
          %842 = dma.hbm_to_vmem [thread:$0]  %s837, 16, %s840, %s830
        $region80: #{decoder_forward.1} parent=23 // pred_fallthru
          _
        // Predicated region
        $region81: #{decoder_forward.1} parent=23 // pred_check
          %p843 = pneg %p443
        $region82: #{decoder_forward.1} parent=23 // pred_check_branch
          %845 = sbr.rel (%p843) target = $region84
        $region83: #{decoder_forward.1} parent=23 // pred_region
          %p846 = scmp.lt.s32.totalorder %s55, 1
          %s847 = scalar_select %p846, %s55, 1
          %s848 = smul.addr %s847, 3
          %s849 = scalar_lea.vmem %s14, %s848
        $region84: #{decoder_forward.1} parent=23 // pred_fallthru
          _
        // Predicated region
        $region85: #{decoder_forward.1} parent=23 // pred_check
          %p850 = pneg %p469
        $region86: #{decoder_forward.1} parent=23 // pred_check_branch
          %852 = sbr.rel (%p850) target = $region88
        $region87: #{decoder_forward.1} parent=23 // pred_region
          %p853 = scmp.lt.s32.totalorder %s55, 1
          %s854 = scalar_select %p853, %s55, 1
          %s855 = smul.addr %s854, 3
          %s856 = scalar_lea.vmem %s15, %s855
        $region88: #{decoder_forward.1} parent=23 // pred_fallthru
          _
        // Predicated region
        $region89: #{decoder_forward.1} parent=23 // pred_check
          %p857 = pneg %p495
        $region90: #{decoder_forward.1} parent=23 // pred_check_branch
          %859 = sbr.rel (%p857) target = $region92
        $region91: #{decoder_forward.1} parent=23 // pred_region
          %s860 = sand.u32 %s47, 1
          %s861 = scalar_lea.sflag [#allocation13], %s860
          %s862 = sand.u32 %s485, 1
          %s863 = smul.addr %s862, 16
          %s864 = scalar_lea.vmem [#allocation14], %s863
          %s866 = ssub.s32 256, 256
          %867 = vsyncadd %s861, %s866
          %s868 = smul.addr %s55, 4
          %s869 = smul.addr %s868, 64
          %s870 = scalar_lea.hbm %s16, %s869
          %s871 = sshll.u32 %s864, 4
          %s872 = int_to_ptr.vmem [resolvable:$true] %s871
          %877 = dma.hbm_to_vmem [thread:$0]  %s870, 256, %s872, %s861, 64, 64, 4
        $region92: #{decoder_forward.1} parent=23 // pred_fallthru
          _
        // Predicated region
        $region93: #{decoder_forward.1} parent=23 // pred_check
          %p878 = pneg %p521
        $region94: #{decoder_forward.1} parent=23 // pred_check_branch
          %880 = sbr.rel (%p878) target = $region96
        $region95: #{decoder_forward.1} parent=23 // pred_region
          %s881 = sand.u32 %s47, 1
          %s882 = scalar_lea.sflag [#allocation16], %s881
          %s883 = sand.u32 %s511, 1
          %s884 = scalar_lea.vmem [#allocation15], %s883
          %s886 = ssub.s32 16, 16
          %887 = vsyncadd %s882, %s886
          %s888 = smul.addr %s55, 16
          %s889 = scalar_lea.hbm %s17, %s888
          %s891 = sshll.u32 %s884, 4
          %s892 = int_to_ptr.vmem [resolvable:$true] %s891
          %894 = dma.hbm_to_vmem [thread:$0]  %s889, 16, %s892, %s882
        $region96: #{decoder_forward.1} parent=23 // pred_fallthru
          _
        // Predicated region
        $region97: #{decoder_forward.1} parent=23 // pred_check
          %p895 = pneg %p547
        $region98: #{decoder_forward.1} parent=23 // pred_check_branch
          %897 = sbr.rel (%p895) target = $region100
        $region99: #{decoder_forward.1} parent=23 // pred_region
          %p898 = scmp.lt.s32.totalorder %s55, 1
          %s899 = scalar_select %p898, %s55, 1
          %s900 = smul.addr %s899, 8
          %s901 = smul.addr %s900, 4
          %s902 = scalar_lea.vmem %s18, %s901
        $region100: #{decoder_forward.1} parent=23 // pred_fallthru
          _
        // Predicated region
        $region101: #{decoder_forward.1} parent=23 // pred_check
          %p903 = pneg %p573
        $region102: #{decoder_forward.1} parent=23 // pred_check_branch
          %905 = sbr.rel (%p903) target = $region104
        $region103: #{decoder_forward.1} parent=23 // pred_region
          %s906 = sand.u32 %s47, 1
          %s907 = scalar_lea.sflag [#allocation16], %s906
          %s908 = sand.u32 %s563, 1
          %s909 = scalar_lea.vmem [#allocation17], %s908
          %s911 = ssub.s32 16, 16
          %912 = vsyncadd %s907, %s911
          %s913 = smul.addr %s55, 16
          %s914 = scalar_lea.hbm %s19, %s913
          %s916 = sshll.u32 %s909, 4
          %s917 = int_to_ptr.vmem [resolvable:$true] %s916
          %919 = dma.hbm_to_vmem [thread:$0]  %s914, 16, %s917, %s907
        $region104: #{decoder_forward.1} parent=23 // pred_fallthru
          _
      $region24: #{decoder_forward.1} parent=5 // pred_fallthru
        _
      %p920 = scmp.le.s32.totalorder 1, %s47
      %p921 = scmp.lt.s32.totalorder %s47, 5
      %p922 = pnand %p920, %p921
      %p923 = pneg %p922
      // Predicated region
      $region105: #{decoder_forward.1} parent=5 // pred_check
        _
      $region106: #{decoder_forward.1} parent=5 // pred_check_branch
        %925 = sbr.rel (%p922) target = $region108
      $region107: #{decoder_forward.1} parent=5 // pred_region
        %s926 = ssub.s32 %s47, 1
        %s927 = sand.u32 %s72, 1
        %s928 = scalar_lea.sflag [#allocation4], %s927
        %s929 = sand.u32 %s72, 1
        %s930 = smul.addr %s929, 8
        %s931 = scalar_lea.vmem [#allocation3], %s930
        // Predicated region
        $region109: #{decoder_forward.1} parent=107 // pred_check
          %p932 = pneg %p85
        $region110: #{decoder_forward.1} parent=107 // pred_check_branch
          %934 = sbr.rel (%p932) target = $region112
        $region111: #{decoder_forward.1} parent=107 // pred_region
          %935 = dma.done %s928, 128
        $region112: #{decoder_forward.1} parent=107 // pred_fallthru
          _
        %s936 = sand.u32 %s52, 1
        %s937 = scalar_lea.sflag [#allocation7], %s936
        %s938 = sand.u32 %s202, 1
        %s939 = scalar_lea.vmem [#allocation6], %s938
        // Predicated region
        $region113: #{decoder_forward.1} parent=107 // pred_check
          %p940 = pneg %p215
        $region114: #{decoder_forward.1} parent=107 // pred_check_branch
          %942 = sbr.rel (%p940) target = $region116
        $region115: #{decoder_forward.1} parent=107 // pred_region
          %943 = dma.done %s937, 16
        $region116: #{decoder_forward.1} parent=107 // pred_fallthru
          _
        %s944 = sand.u32 %s52, 1
        %s945 = scalar_lea.sflag [#allocation7], %s944
        %s946 = sand.u32 %s254, 1
        %s947 = scalar_lea.vmem [#allocation8], %s946
        // Predicated region
        $region117: #{decoder_forward.1} parent=107 // pred_check
          %p948 = pneg %p267
        $region118: #{decoder_forward.1} parent=107 // pred_check_branch
          %950 = sbr.rel (%p948) target = $region120
        $region119: #{decoder_forward.1} parent=107 // pred_region
          %951 = dma.done %s945, 16
        $region120: #{decoder_forward.1} parent=107 // pred_fallthru
          _
        %s952 = sand.u32 %s52, 1
        %s953 = scalar_lea.sflag [#allocation10], %s952
        %s954 = sand.u32 %s306, 1
        %s955 = scalar_lea.vmem [#allocation9], %s954
        // Predicated region
        $region121: #{decoder_forward.1} parent=107 // pred_check
          %p956 = pneg %p319
        $region122: #{decoder_forward.1} parent=107 // pred_check_branch
          %958 = sbr.rel (%p956) target = $region124
        $region123: #{decoder_forward.1} parent=107 // pred_region
          %959 = dma.done %s953, 16
        $region124: #{decoder_forward.1} parent=107 // pred_fallthru
          _
        %s960 = sand.u32 %s52, 1
        %s961 = scalar_lea.sflag [#allocation10], %s960
        %s962 = sand.u32 %s358, 1
        %s963 = scalar_lea.vmem [#allocation11], %s962
        // Predicated region
        $region125: #{decoder_forward.1} parent=107 // pred_check
          %p964 = pneg %p371
        $region126: #{decoder_forward.1} parent=107 // pred_check_branch
          %966 = sbr.rel (%p964) target = $region128
        $region127: #{decoder_forward.1} parent=107 // pred_region
          %967 = dma.done %s961, 16
        $region128: #{decoder_forward.1} parent=107 // pred_fallthru
          _
        %s968 = sand.u32 %s52, 1
        %s969 = scalar_lea.sflag [#allocation13], %s968
        %s970 = sand.u32 %s410, 1
        %s971 = scalar_lea.vmem [#allocation12], %s970
        // Predicated region
        $region129: #{decoder_forward.1} parent=107 // pred_check
          %p972 = pneg %p423
        $region130: #{decoder_forward.1} parent=107 // pred_check_branch
          %974 = sbr.rel (%p972) target = $region132
        $region131: #{decoder_forward.1} parent=107 // pred_region
          %975 = dma.done %s969, 16
        $region132: #{decoder_forward.1} parent=107 // pred_fallthru
          _
        %s976 = sand.u32 %s52, 1
        %s977 = scalar_lea.sflag [#allocation13], %s976
        %s978 = sand.u32 %s488, 1
        %s979 = smul.addr %s978, 16
        %s980 = scalar_lea.vmem [#allocation14], %s979
        // Predicated region
        $region133: #{decoder_forward.1} parent=107 // pred_check
          %p981 = pneg %p501
        $region134: #{decoder_forward.1} parent=107 // pred_check_branch
          %983 = sbr.rel (%p981) target = $region136
        $region135: #{decoder_forward.1} parent=107 // pred_region
          %984 = dma.done %s977, 256
        $region136: #{decoder_forward.1} parent=107 // pred_fallthru
          _
        %s985 = sand.u32 %s52, 1
        %s986 = scalar_lea.sflag [#allocation16], %s985
        %s987 = sand.u32 %s514, 1
        %s988 = scalar_lea.vmem [#allocation15], %s987
        // Predicated region
        $region137: #{decoder_forward.1} parent=107 // pred_check
          %p989 = pneg %p527
        $region138: #{decoder_forward.1} parent=107 // pred_check_branch
          %991 = sbr.rel (%p989) target = $region140
        $region139: #{decoder_forward.1} parent=107 // pred_region
          %992 = dma.done %s986, 16
        $region140: #{decoder_forward.1} parent=107 // pred_fallthru
          _
        %s993 = sand.u32 %s52, 1
        %s994 = scalar_lea.sflag [#allocation16], %s993
        %s995 = sand.u32 %s566, 1
        %s996 = scalar_lea.vmem [#allocation17], %s995
        // Predicated region
        $region141: #{decoder_forward.1} parent=107 // pred_check
          %p997 = pneg %p579
        $region142: #{decoder_forward.1} parent=107 // pred_check_branch
          %999 = sbr.rel (%p997) target = $region144
        $region143: #{decoder_forward.1} parent=107 // pred_region
          %1000 = dma.done %s994, 16
        $region144: #{decoder_forward.1} parent=107 // pred_fallthru
          _
        // Predicated region
        $region145: #{decoder_forward.1} parent=107 // pred_check
          %p1001 = pneg %p621
        $region146: #{decoder_forward.1} parent=107 // pred_check_branch
          %1003 = sbr.rel (%p1001) target = $region148
        $region147: #{decoder_forward.1} parent=107 // pred_region
          %1004 = dma.done [#allocation19], 16
        $region148: #{decoder_forward.1} parent=107 // pred_fallthru
          _
        %s1005 = sand.u32 %s72, 1
        %s1006 = scalar_lea.sflag [#allocation4], %s1005
        %s1007 = sand.u32 %s72, 1
        %s1008 = smul.addr %s1007, 8
        %s1009 = scalar_lea.vmem [#allocation3], %s1008
        %p1010 = pneg %p85
        %p1011 = pneg %p82
        %p1012 = scmp.lt.s32.totalorder %s56, 1
        %s1013 = scalar_select %p1012, %s56, 1
        %s1014 = smul.addr %s1013, 4
        %s1015 = scalar_lea.vmem %s1, %s1014
        %p1016 = pneg %p111
        %p1017 = pneg %p108
        %p1018 = scmp.lt.s32.totalorder %s56, 1
        %s1019 = scalar_select %p1018, %s56, 1
        %s1020 = smul.addr %s1019, 8
        %s1021 = scalar_lea.vmem %s2, %s1020
        %p1022 = pneg %p137
        %p1023 = pneg %p134
        %p1024 = scmp.lt.s32.totalorder %s56, 1
        %s1025 = scalar_select %p1024, %s56, 1
        %s1026 = scalar_lea.vmem %s3, %s1025
        %p1027 = pneg %p163
        %p1028 = pneg %p160
        %p1029 = scmp.lt.s32.totalorder %s57, 1
        %s1030 = scalar_select %p1029, %s57, 1
        %s1031 = smul.addr %s1030, 4
        %s1032 = smul.addr %s1031, 4
        %s1033 = scalar_lea.vmem %s4, %s1032
        %p1034 = pneg %p189
        %p1035 = pneg %p186
        %s1036 = sand.u32 %s52, 1
        %s1037 = scalar_lea.sflag [#allocation7], %s1036
        %s1038 = sand.u32 %s202, 1
        %s1039 = scalar_lea.vmem [#allocation6], %s1038
        %p1040 = pneg %p215
        %p1041 = pneg %p212
        %p1042 = scmp.lt.s32.totalorder %s57, 1
        %s1043 = scalar_select %p1042, %s57, 1
        %s1044 = smul.addr %s1043, 4
        %s1045 = smul.addr %s1044, 4
        %s1046 = scalar_lea.vmem %s6, %s1045
        %p1047 = pneg %p241
        %p1048 = pneg %p238
        %s1049 = sand.u32 %s52, 1
        %s1050 = scalar_lea.sflag [#allocation7], %s1049
        %s1051 = sand.u32 %s254, 1
        %s1052 = scalar_lea.vmem [#allocation8], %s1051
        %p1053 = pneg %p267
        %p1054 = pneg %p264
        %p1055 = scmp.lt.s32.totalorder %s57, 1
        %s1056 = scalar_select %p1055, %s57, 1
        %s1057 = smul.addr %s1056, 4
        %s1058 = smul.addr %s1057, 4
        %s1059 = scalar_lea.vmem %s8, %s1058
        %p1060 = pneg %p293
        %p1061 = pneg %p290
        %s1062 = sand.u32 %s52, 1
        %s1063 = scalar_lea.sflag [#allocation10], %s1062
        %s1064 = sand.u32 %s306, 1
        %s1065 = scalar_lea.vmem [#allocation9], %s1064
        %p1066 = pneg %p319
        %p1067 = pneg %p316
        %p1068 = scmp.lt.s32.totalorder %s57, 1
        %s1069 = scalar_select %p1068, %s57, 1
        %s1070 = smul.addr %s1069, 4
        %s1071 = smul.addr %s1070, 4
        %s1072 = scalar_lea.vmem %s10, %s1071
        %p1073 = pneg %p345
        %p1074 = pneg %p342
        %s1075 = sand.u32 %s52, 1
        %s1076 = scalar_lea.sflag [#allocation10], %s1075
        %s1077 = sand.u32 %s358, 1
        %s1078 = scalar_lea.vmem [#allocation11], %s1077
        %p1079 = pneg %p371
        %p1080 = pneg %p368
        %p1081 = scmp.lt.s32.totalorder %s57, 1
        %s1082 = scalar_select %p1081, %s57, 1
        %s1083 = smul.addr %s1082, 4
        %s1084 = smul.addr %s1083, 4
        %s1085 = scalar_lea.vmem %s12, %s1084
        %p1086 = pneg %p397
        %p1087 = pneg %p394
        %s1088 = sand.u32 %s52, 1
        %s1089 = scalar_lea.sflag [#allocation13], %s1088
        %s1090 = sand.u32 %s410, 1
        %s1091 = scalar_lea.vmem [#allocation12], %s1090
        %p1092 = pneg %p423
        %p1093 = pneg %p420
        %p1094 = scmp.lt.s32.totalorder %s57, 1
        %s1095 = scalar_select %p1094, %s57, 1
        %s1096 = smul.addr %s1095, 3
        %s1097 = scalar_lea.vmem %s14, %s1096
        %p1098 = pneg %p449
        %p1099 = pneg %p446
        %p1100 = scmp.lt.s32.totalorder %s57, 1
        %s1101 = scalar_select %p1100, %s57, 1
        %s1102 = smul.addr %s1101, 3
        %s1103 = scalar_lea.vmem %s15, %s1102
        %p1104 = pneg %p475
        %p1105 = pneg %p472
        %s1106 = sand.u32 %s52, 1
        %s1107 = scalar_lea.sflag [#allocation13], %s1106
        %s1108 = sand.u32 %s488, 1
        %s1109 = smul.addr %s1108, 16
        %s1110 = scalar_lea.vmem [#allocation14], %s1109
        %p1111 = pneg %p501
        %p1112 = pneg %p498
        %s1113 = sand.u32 %s52, 1
        %s1114 = scalar_lea.sflag [#allocation16], %s1113
        %s1115 = sand.u32 %s514, 1
        %s1116 = scalar_lea.vmem [#allocation15], %s1115
        %p1117 = pneg %p527
        %p1118 = pneg %p524
        %p1119 = scmp.lt.s32.totalorder %s57, 1
        %s1120 = scalar_select %p1119, %s57, 1
        %s1121 = smul.addr %s1120, 8
        %s1122 = smul.addr %s1121, 4
        %s1123 = scalar_lea.vmem %s18, %s1122
        %p1124 = pneg %p553
        %p1125 = pneg %p550
        %s1126 = sand.u32 %s52, 1
        %s1127 = scalar_lea.sflag [#allocation16], %s1126
        %s1128 = sand.u32 %s566, 1
        %s1129 = scalar_lea.vmem [#allocation17], %s1128
        %p1130 = pneg %p579
        %p1131 = pneg %p576
        %p1132 = pneg %p600
        %p1133 = pneg %p597
        %p1134 = pneg %p621
        %p1135 = pneg %p618
        %p1136 = pneg %p647
        %p1137 = pneg %p644
        %s1138 = sand.u32 %s634, 1
        %s1139 = scalar_lea.sflag [#allocation5], %s1138
        %s1140 = sand.u32 %s634, 1
        %s1141 = smul.addr %s1140, 8
        %s1142 = scalar_lea.vmem [#allocation20], %s1141
        %p1143 = scmp.lt.s32.totalorder %s56, 1
        %s1144 = scalar_select %p1143, %s56, 1
        %s1145 = smul.addr %s1144, 4
        %s1146 = scalar_lea.vmem %s1, %s1145
        %p1147 = scmp.lt.s32.totalorder %s56, 1
        %s1148 = scalar_select %p1147, %s56, 1
        %s1149 = smul.addr %s1148, 8
        %s1150 = scalar_lea.vmem %s2, %s1149
        %p1151 = scmp.lt.s32.totalorder %s56, 1
        %s1152 = scalar_select %p1151, %s56, 1
        %s1153 = scalar_lea.vmem %s3, %s1152
        %p1154 = scmp.lt.s32.totalorder %s57, 1
        %s1155 = scalar_select %p1154, %s57, 1
        %s1156 = smul.addr %s1155, 4
        %s1157 = smul.addr %s1156, 4
        %s1158 = scalar_lea.vmem %s4, %s1157
        %p1159 = scmp.lt.s32.totalorder %s57, 1
        %s1160 = scalar_select %p1159, %s57, 1
        %s1161 = smul.addr %s1160, 4
        %s1162 = smul.addr %s1161, 4
        %s1163 = scalar_lea.vmem %s6, %s1162
        %p1164 = scmp.lt.s32.totalorder %s57, 1
        %s1165 = scalar_select %p1164, %s57, 1
        %s1166 = smul.addr %s1165, 4
        %s1167 = smul.addr %s1166, 4
        %s1168 = scalar_lea.vmem %s8, %s1167
        %p1169 = scmp.lt.s32.totalorder %s57, 1
        %s1170 = scalar_select %p1169, %s57, 1
        %s1171 = smul.addr %s1170, 4
        %s1172 = smul.addr %s1171, 4
        %s1173 = scalar_lea.vmem %s10, %s1172
        %p1174 = scmp.lt.s32.totalorder %s57, 1
        %s1175 = scalar_select %p1174, %s57, 1
        %s1176 = smul.addr %s1175, 4
        %s1177 = smul.addr %s1176, 4
        %s1178 = scalar_lea.vmem %s12, %s1177
        %p1179 = scmp.lt.s32.totalorder %s57, 1
        %s1180 = scalar_select %p1179, %s57, 1
        %s1181 = smul.addr %s1180, 3
        %s1182 = scalar_lea.vmem %s14, %s1181
        %p1183 = scmp.lt.s32.totalorder %s57, 1
        %s1184 = scalar_select %p1183, %s57, 1
        %s1185 = smul.addr %s1184, 3
        %s1186 = scalar_lea.vmem %s15, %s1185
        %p1187 = scmp.lt.s32.totalorder %s57, 1
        %s1188 = scalar_select %p1187, %s57, 1
        %s1189 = smul.addr %s1188, 8
        %s1190 = smul.addr %s1189, 4
        %s1191 = scalar_lea.vmem %s18, %s1190
        %p1193 = scmp.eq.s32.totalorder %s57, 0
        // Predicated region
        $region149: #{decoder_forward.1} parent=107 // pred_check
          %p1194 = pneg %p1193
        $region150: #{decoder_forward.1} parent=107 // pred_check_branch
          %1196 = sbr.rel (%p1194) target = $region152
        $region151: #{decoder_forward.1} parent=107 // pred_region
          %v1197 = vld [vmem:[%s931] sm:$0xff]
          %vm1198 = vcmask 261120
          %1199 = vst.msk [vmem:[#allocation2] sm:$0xff] %vm1198, %v1197
        $region152: #{decoder_forward.1} parent=107 // pred_fallthru
          _
        %v1200 = vld [vmem:[#allocation2] sm:$0xff]
        %v1201 = vld [vmem:[%s1146] sm:$0xf]
        %v1202 = vld [vmem:[%s1150] sm:$0xff]
        %v1203 = vld [vmem:[%s1153] sm:$0x1]
        %v1204 = vld [vmem:[%s1182] sm:$0x1]
        %v1205 = vld [vmem:[%s1186] sm:$0x1]
        %vm1206 = vcmask 261120
        %v1207 = vsel %vm1206, %v1200, 0.0
        %1208 = vadd.xlane.f32.xlu0 %v1207
        %v1209 = vpop.xlane.xlu0 %1208
        %v1210 = vrcp.pop 32.0
        %v1211 = vmul.f32 %v1209, %v1210
        %v1212 = vsub.f32 %v1200, %v1211
        %v1213 = vmul.f32 %v1212, %v1212
        %v1214 = vsel %vm1206, %v1213, 0.0
        %1215 = vadd.xlane.f32.xlu0 %v1214
        %v1216 = vpop.xlane.xlu0 %1215
        %v1217 = vmul.f32 %v1216, %v1210
        %v1218 = vadd.f32 %v1217, 1e-06
        %v1219 = vrsqrt.pop %v1218
        %v1220 = vmul.f32 %v1212, %v1219
        %v1222 = vlaneseq
        %v1223 = vshrl.u32 %v1222, 7
        %v1224 = vsub.s32 0, %v1223
        %v1225 = vrot.slane %v1204, %v1224
        %v1227 = vmul.f32 %v1220, %v1225
        %v1229 = vlaneseq
        %v1230 = vshrl.u32 %v1229, 7
        %v1231 = vsub.s32 0, %v1230
        %v1232 = vrot.slane %v1205, %v1231
        %v1234 = vadd.f32 %v1227, %v1232
        %v1235 = vpack.c.bf16 %v1234, %v1234
        %v1236 = vld [vmem:[%s1158] sm:$0xf]
        %v1237 = vld [vmem:[%s1158 + $0x4] sm:$0xf]
        %v1238 = vld [vmem:[%s1158 + $0x8] sm:$0xf]
        %v1239 = vld [vmem:[%s1158 + $0xc] sm:$0xf]
        %v1240 = vld [vmem:[%s939] sm:$0x1]
        %v1242 = vlaneseq
        %v1243 = vshrl.u32 %v1242, 7
        %v1244 = vsub.s32 0, %v1243
        %v1245 = vrot.slane %v1240, %v1244
        %v1251 = vunpack.c.l.b16 %v1236
        %v1252 = vunpack.c.l.b16 %v1237
        %v1253 = vunpack.c.l.b16 %v1238
        %v1254 = vunpack.c.l.b16 %v1239
        %v1255 = vpack.c.b16 %v1252, %v1251
        %v1256 = vpack.c.b16 %v1254, %v1253
        %v1260 = vsel %vm1206, %v1235, 0
        %1262 = vmatprep.subr.bf16.mxu0 0
        %1263 = vmatpush1.bf16.msra.mxu0 %v1255
        %1264 = vmatprep.subr.bf16.mxu0 0
        %1265 = vmatpush1.bf16.msra.mxu0 %v1256
        %1266 = vmatprep.subr.bf16.mxu0 0
        %1267 = vmatpush1.bf16.msra.mxu0 0
        %1268 = vmatprep.subr.bf16.mxu0 0
        %1269 = vmatpush1.bf16.msra.mxu0 0
        %1270 = vmatprep.subr.bf16.mxu0 0
        %1271 = vmatpush1.bf16.msra.mxu0 0
        %1272 = vmatprep.subr.bf16.mxu0 0
        %1273 = vmatpush1.bf16.msra.mxu0 0
        %1274 = vmatprep.subr.bf16.mxu0 0
        %1275 = vmatpush1.bf16.msra.mxu0 0
        %1276 = vmatprep.subr.bf16.mxu0 0
        %1277 = vmatpush1.bf16.msra.mxu0 0
        %1278 = vmatprep.subr.bf16.mxu0 0
        %1279 = vmatpush1.bf16.msra.mxu0 0
        %1280 = vmatprep.subr.bf16.mxu0 0
        %1281 = vmatpush1.bf16.msra.mxu0 0
        %1282 = vmatprep.subr.bf16.mxu0 0
        %1283 = vmatpush1.bf16.msra.mxu0 0
        %1284 = vmatprep.subr.bf16.mxu0 0
        %1285 = vmatpush1.bf16.msra.mxu0 0
        %1286 = vmatprep.subr.bf16.mxu0 0
        %1287 = vmatpush1.bf16.msra.mxu0 0
        %1288 = vmatprep.subr.bf16.mxu0 0
        %1289 = vmatpush1.bf16.msra.mxu0 0
        %1290 = vmatprep.subr.bf16.mxu0 0
        %1291 = vmatpush1.bf16.msra.mxu0 0
        %1292 = vmatprep.subr.bf16.mxu0 0
        %1293 = vmatpush1.bf16.msra.mxu0 0
        %1294 = vmatprep.mubr.bf16.mxu0 0
        %1295 = vmatmul.mubr.bf16.gmra.mrb[0].mxu0 %v1260
        %v1296 = vpop.f32.mrb[0].mxu0
        %v1297 = vadd.f32 %v1245, %v1296
        %v1298 = vpop.f32.mrb[0].mxu0
        %v1299 = vpop.f32.mrb[0].mxu0
        %v1300 = vpop.f32.mrb[0].mxu0
        %1301 = vdwg.mxu0
        %1303 = vrot.lane.b32.xlu0 %v1297, 96
        %v1304 = vpop.permute.xlu0 %1303
        %vm1305 = vcmask 64512
        %v1306 = vsel %vm1305, %v1297, 0
        %v1308 = vsel %vm1305, %v1304, 0
        %1310 = vmatprep.subr.mxu0 0.0
        %1311 = vmatpush1.xpose.msra.mxu0 %v1308
        %1312 = vmatprep.subr.mxu0 0.0
        %1313 = vmatpush1.xpose.msra.mxu0 0.0
        %1314 = vmatprep.subr.mxu0 0.0
        %1315 = vmatpush1.xpose.msra.mxu0 0.0
        %1316 = vmatprep.subr.mxu0 0.0
        %1317 = vmatpush1.xpose.msra.mxu0 0.0
        %1318 = vmatprep.subr.mxu0 0.0
        %1319 = vmatpush1.xpose.msra.mxu0 0.0
        %1320 = vmatprep.subr.mxu0 0.0
        %1321 = vmatpush1.xpose.msra.mxu0 0.0
        %1322 = vmatprep.subr.mxu0 0.0
        %1323 = vmatpush1.xpose.msra.mxu0 0.0
        %1324 = vmatprep.subr.mxu0 0.0
        %1325 = vmatpush1.xpose.msra.mxu0 0.0
        %1326 = vmatprep.subr.mxu0 0.0
        %1327 = vmatpush1.xpose.msra.mxu0 0.0
        %1328 = vmatprep.subr.mxu0 0.0
        %1329 = vmatpush1.xpose.msra.mxu0 0.0
        %1330 = vmatprep.subr.mxu0 0.0
        %1331 = vmatpush1.xpose.msra.mxu0 0.0
        %1332 = vmatprep.subr.mxu0 0.0
        %1333 = vmatpush1.xpose.msra.mxu0 0.0
        %1334 = vmatprep.subr.mxu0 0.0
        %1335 = vmatpush1.xpose.msra.mxu0 0.0
        %1336 = vmatprep.subr.mxu0 0.0
        %1337 = vmatpush1.xpose.msra.mxu0 0.0
        %1338 = vmatprep.subr.mxu0 0.0
        %1339 = vmatpush1.xpose.msra.mxu0 0.0
        %1340 = vmatprep.subr.mxu0 0.0
        %1341 = vmatpush1.xpose.msra.mxu0 0.0
        %1342 = vmatprep.subr.mxu0 0.0
        %1343 = vmatpush1.xpose.msra.mxu0 0.0
        %1344 = vmatprep.subr.mxu0 0.0
        %1345 = vmatpush1.xpose.msra.mxu0 0.0
        %1346 = vmatprep.subr.mxu0 0.0
        %1347 = vmatpush1.xpose.msra.mxu0 0.0
        %1348 = vmatprep.subr.mxu0 0.0
        %1349 = vmatpush1.xpose.msra.mxu0 0.0
        %1350 = vmatprep.subr.mxu0 0.0
        %1351 = vmatpush1.xpose.msra.mxu0 0.0
        %1352 = vmatprep.subr.mxu0 0.0
        %1353 = vmatpush1.xpose.msra.mxu0 0.0
        %1354 = vmatprep.subr.mxu0 0.0
        %1355 = vmatpush1.xpose.msra.mxu0 0.0
        %1356 = vmatprep.subr.mxu0 0.0
        %1357 = vmatpush1.xpose.msra.mxu0 0.0
        %1358 = vmatprep.subr.mxu0 0.0
        %1359 = vmatpush1.xpose.msra.mxu0 0.0
        %1360 = vmatprep.subr.mxu0 0.0
        %1361 = vmatpush1.xpose.msra.mxu0 0.0
        %1362 = vmatprep.subr.mxu0 0.0
        %1363 = vmatpush1.xpose.msra.mxu0 0.0
        %1364 = vmatprep.subr.mxu0 0.0
        %1365 = vmatpush1.xpose.msra.mxu0 0.0
        %1366 = vmatprep.subr.mxu0 0.0
        %1367 = vmatpush1.xpose.msra.mxu0 0.0
        %1368 = vmatprep.subr.mxu0 0.0
        %1369 = vmatpush1.xpose.msra.mxu0 0.0
        %1370 = vmatprep.subr.mxu0 0.0
        %1371 = vmatpush1.xpose.msra.mxu0 0.0
        %1372 = vmatprep.subr.mxu0 0.0
        %1373 = vmatpush1.xpose.msra.mxu0 0.0
        %1374 = vmatprep.mubr.f32.mxu0 0.0
        %1375 = vmatmul.mubr.f32.gmra.mrb[0].mxu0 %v1306
        %v1376 = vpop.f32.mrb[0].mxu0
        %v1377 = vadd.f32 0.0, %v1376
        %v1378 = vpop.f32.mrb[0].mxu0
        %1379 = vdwg.mxu0
        %v1380 = vmul.f32 %v1377, 0.35355338
        %v1381 = vadd.f32 %v1380, %v1202
        %v1382 = vsel %vm1305, %v1381, -inf
        %1383 = vmax.xlane.f32.xlu0 %v1382
        %v1384 = vpop.xlane.xlu0 %1383
        %v1385 = vsub.f32 %v1381, %v1384
        %v1386 = vmul.f32 %v1385, 1.442695
        %v1387 = vpow.pop %v1386
        %v1388 = vsel %vm1305, %v1387, 0.0
        %1389 = vadd.xlane.f32.xlu0 %v1388
        %v1390 = vpop.xlane.xlu0 %1389
        %v1391 = vrcp.pop %v1390
        %v1392 = vmul.f32 %v1387, %v1391
        %v1393 = vpack.c.bf16 %v1392, %v1392
        %v1394 = vpack.c.bf16 %v1297, %v1297
        %1396 = vrot.lane.b32.xlu0 %v1394, 64
        %v1397 = vpop.permute.xlu0 %1396
        %v1399 = vsel %vm1305, %v1393, 0
        %vm1401 = vcmask 1043456
        %v1403 = vsel %vm1401, %v1397, 0
        %1405 = vmatprep.subr.bf16.mxu0 0
        %1406 = vmatpush1.bf16.msra.mxu0 %v1403
        %1407 = vmatprep.subr.bf16.mxu0 0
        %1408 = vmatpush1.bf16.msra.mxu0 0
        %1409 = vmatprep.subr.bf16.mxu0 0
        %1410 = vmatpush1.bf16.msra.mxu0 0
        %1411 = vmatprep.subr.bf16.mxu0 0
        %1412 = vmatpush1.bf16.msra.mxu0 0
        %1413 = vmatprep.subr.bf16.mxu0 0
        %1414 = vmatpush1.bf16.msra.mxu0 0
        %1415 = vmatprep.subr.bf16.mxu0 0
        %1416 = vmatpush1.bf16.msra.mxu0 0
        %1417 = vmatprep.subr.bf16.mxu0 0
        %1418 = vmatpush1.bf16.msra.mxu0 0
        %1419 = vmatprep.subr.bf16.mxu0 0
        %1420 = vmatpush1.bf16.msra.mxu0 0
        %1421 = vmatprep.subr.bf16.mxu0 0
        %1422 = vmatpush1.bf16.msra.mxu0 0
        %1423 = vmatprep.subr.bf16.mxu0 0
        %1424 = vmatpush1.bf16.msra.mxu0 0
        %1425 = vmatprep.subr.bf16.mxu0 0
        %1426 = vmatpush1.bf16.msra.mxu0 0
        %1427 = vmatprep.subr.bf16.mxu0 0
        %1428 = vmatpush1.bf16.msra.mxu0 0
        %1429 = vmatprep.subr.bf16.mxu0 0
        %1430 = vmatpush1.bf16.msra.mxu0 0
        %1431 = vmatprep.subr.bf16.mxu0 0
        %1432 = vmatpush1.bf16.msra.mxu0 0
        %1433 = vmatprep.subr.bf16.mxu0 0
        %1434 = vmatpush1.bf16.msra.mxu0 0
        %1435 = vmatprep.subr.bf16.mxu0 0
        %1436 = vmatpush1.bf16.msra.mxu0 0
        %1437 = vmatprep.mubr.bf16.mxu0 0
        %1438 = vmatmul.mubr.bf16.gmra.mrb[0].mxu0 %v1399
        %v1439 = vpop.f32.mrb[0].mxu0
        %v1440 = vadd.f32 0.0, %v1439
        %v1441 = vpop.f32.mrb[0].mxu0
        %v1442 = vpop.f32.mrb[0].mxu0
        %v1443 = vpop.f32.mrb[0].mxu0
        %1444 = vdwg.mxu0
        %v1445 = vpack.c.bf16 %v1440, %v1440
        %v1446 = vld [vmem:[%s1163] sm:$0xf]
        %1447 = vrot.lane.b32.xlu0 %v1297, 120
        %v1448 = vpop.permute.xlu0 %1447
        %1449 = vrot.lane.b32.xlu0 %v1297, 88
        %v1450 = vpop.permute.xlu0 %1449
        %v1451 = vsel %vm1305, %v1448, 0
        %v1453 = vsel %vm1305, %v1450, 0
        %1455 = vmatprep.subr.mxu0 0.0
        %1456 = vmatpush1.xpose.msra.mxu0 %v1453
        %1457 = vmatprep.subr.mxu0 0.0
        %1458 = vmatpush1.xpose.msra.mxu0 0.0
        %1459 = vmatprep.subr.mxu0 0.0
        %1460 = vmatpush1.xpose.msra.mxu0 0.0
        %1461 = vmatprep.subr.mxu0 0.0
        %1462 = vmatpush1.xpose.msra.mxu0 0.0
        %1463 = vmatprep.subr.mxu0 0.0
        %1464 = vmatpush1.xpose.msra.mxu0 0.0
        %1465 = vmatprep.subr.mxu0 0.0
        %1466 = vmatpush1.xpose.msra.mxu0 0.0
        %1467 = vmatprep.subr.mxu0 0.0
        %1468 = vmatpush1.xpose.msra.mxu0 0.0
        %1469 = vmatprep.subr.mxu0 0.0
        %1470 = vmatpush1.xpose.msra.mxu0 0.0
        %1471 = vmatprep.subr.mxu0 0.0
        %1472 = vmatpush1.xpose.msra.mxu0 0.0
        %1473 = vmatprep.subr.mxu0 0.0
        %1474 = vmatpush1.xpose.msra.mxu0 0.0
        %1475 = vmatprep.subr.mxu0 0.0
        %1476 = vmatpush1.xpose.msra.mxu0 0.0
        %1477 = vmatprep.subr.mxu0 0.0
        %1478 = vmatpush1.xpose.msra.mxu0 0.0
        %1479 = vmatprep.subr.mxu0 0.0
        %1480 = vmatpush1.xpose.msra.mxu0 0.0
        %1481 = vmatprep.subr.mxu0 0.0
        %1482 = vmatpush1.xpose.msra.mxu0 0.0
        %1483 = vmatprep.subr.mxu0 0.0
        %1484 = vmatpush1.xpose.msra.mxu0 0.0
        %1485 = vmatprep.subr.mxu0 0.0
        %1486 = vmatpush1.xpose.msra.mxu0 0.0
        %1487 = vmatprep.subr.mxu0 0.0
        %1488 = vmatpush1.xpose.msra.mxu0 0.0
        %1489 = vmatprep.subr.mxu0 0.0
        %1490 = vmatpush1.xpose.msra.mxu0 0.0
        %1491 = vmatprep.subr.mxu0 0.0
        %1492 = vmatpush1.xpose.msra.mxu0 0.0
        %1493 = vmatprep.subr.mxu0 0.0
        %1494 = vmatpush1.xpose.msra.mxu0 0.0
        %1495 = vmatprep.subr.mxu0 0.0
        %1496 = vmatpush1.xpose.msra.mxu0 0.0
        %1497 = vmatprep.subr.mxu0 0.0
        %1498 = vmatpush1.xpose.msra.mxu0 0.0
        %1499 = vmatprep.subr.mxu0 0.0
        %1500 = vmatpush1.xpose.msra.mxu0 0.0
        %1501 = vmatprep.subr.mxu0 0.0
        %1502 = vmatpush1.xpose.msra.mxu0 0.0
        %1503 = vmatprep.subr.mxu0 0.0
        %1504 = vmatpush1.xpose.msra.mxu0 0.0
        %1505 = vmatprep.subr.mxu0 0.0
        %1506 = vmatpush1.xpose.msra.mxu0 0.0
        %1507 = vmatprep.subr.mxu0 0.0
        %1508 = vmatpush1.xpose.msra.mxu0 0.0
        %1509 = vmatprep.subr.mxu0 0.0
        %1510 = vmatpush1.xpose.msra.mxu0 0.0
        %1511 = vmatprep.subr.mxu0 0.0
        %1512 = vmatpush1.xpose.msra.mxu0 0.0
        %1513 = vmatprep.subr.mxu0 0.0
        %1514 = vmatpush1.xpose.msra.mxu0 0.0
        %1515 = vmatprep.subr.mxu0 0.0
        %1516 = vmatpush1.xpose.msra.mxu0 0.0
        %1517 = vmatprep.subr.mxu0 0.0
        %1518 = vmatpush1.xpose.msra.mxu0 0.0
        %1519 = vmatprep.mubr.f32.mxu0 0.0
        %1520 = vmatmul.mubr.f32.gmra.mrb[0].mxu0 %v1451
        %v1521 = vpop.f32.mrb[0].mxu0
        %v1522 = vadd.f32 0.0, %v1521
        %v1523 = vpop.f32.mrb[0].mxu0
        %1524 = vdwg.mxu0
        %v1525 = vmul.f32 %v1522, 0.35355338
        %v1526 = vadd.f32 %v1525, %v1202
        %v1527 = vsel %vm1305, %v1526, -inf
        %1528 = vmax.xlane.f32.xlu0 %v1527
        %v1529 = vpop.xlane.xlu0 %1528
        %v1530 = vsub.f32 %v1526, %v1529
        %v1531 = vmul.f32 %v1530, 1.442695
        %v1532 = vpow.pop %v1531
        %v1533 = vsel %vm1305, %v1532, 0.0
        %1534 = vadd.xlane.f32.xlu0 %v1533
        %v1535 = vpop.xlane.xlu0 %1534
        %v1536 = vrcp.pop %v1535
        %v1537 = vmul.f32 %v1532, %v1536
        %v1538 = vpack.c.bf16 %v1537, %v1537
        %1539 = vrot.lane.b32.xlu0 %v1394, 56
        %v1540 = vpop.permute.xlu0 %1539
        %v1542 = vsel %vm1305, %v1538, 0
        %v1545 = vsel %vm1401, %v1540, 0
        %1547 = vmatprep.subr.bf16.mxu0 0
        %1548 = vmatpush1.bf16.msra.mxu0 %v1545
        %1549 = vmatprep.subr.bf16.mxu0 0
        %1550 = vmatpush1.bf16.msra.mxu0 0
        %1551 = vmatprep.subr.bf16.mxu0 0
        %1552 = vmatpush1.bf16.msra.mxu0 0
        %1553 = vmatprep.subr.bf16.mxu0 0
        %1554 = vmatpush1.bf16.msra.mxu0 0
        %1555 = vmatprep.subr.bf16.mxu0 0
        %1556 = vmatpush1.bf16.msra.mxu0 0
        %1557 = vmatprep.subr.bf16.mxu0 0
        %1558 = vmatpush1.bf16.msra.mxu0 0
        %1559 = vmatprep.subr.bf16.mxu0 0
        %1560 = vmatpush1.bf16.msra.mxu0 0
        %1561 = vmatprep.subr.bf16.mxu0 0
        %1562 = vmatpush1.bf16.msra.mxu0 0
        %1563 = vmatprep.subr.bf16.mxu0 0
        %1564 = vmatpush1.bf16.msra.mxu0 0
        %1565 = vmatprep.subr.bf16.mxu0 0
        %1566 = vmatpush1.bf16.msra.mxu0 0
        %1567 = vmatprep.subr.bf16.mxu0 0
        %1568 = vmatpush1.bf16.msra.mxu0 0
        %1569 = vmatprep.subr.bf16.mxu0 0
        %1570 = vmatpush1.bf16.msra.mxu0 0
        %1571 = vmatprep.subr.bf16.mxu0 0
        %1572 = vmatpush1.bf16.msra.mxu0 0
        %1573 = vmatprep.subr.bf16.mxu0 0
        %1574 = vmatpush1.bf16.msra.mxu0 0
        %1575 = vmatprep.subr.bf16.mxu0 0
        %1576 = vmatpush1.bf16.msra.mxu0 0
        %1577 = vmatprep.subr.bf16.mxu0 0
        %1578 = vmatpush1.bf16.msra.mxu0 0
        %1579 = vmatprep.mubr.bf16.mxu0 0
        %1580 = vmatmul.mubr.bf16.gmra.mrb[0].mxu0 %v1542
        %v1581 = vpop.f32.mrb[0].mxu0
        %v1582 = vadd.f32 0.0, %v1581
        %v1583 = vpop.f32.mrb[0].mxu0
        %v1584 = vpop.f32.mrb[0].mxu0
        %v1585 = vpop.f32.mrb[0].mxu0
        %1586 = vdwg.mxu0
        %v1587 = vpack.c.bf16 %v1582, %v1582
        %s1588 = scalar_lea.vmem %s1163, 4
        %v1589 = vld [vmem:[%s1588] sm:$0xf]
        %v1591 = vsel %vm1305, %v1587, 0
        %v1594 = vsel %vm1401, %v1589, 0
        %1596 = vmatprep.subr.bf16.mxu0 0
        %1597 = vmatpush1.bf16.msra.mxu0 %v1594
        %1598 = vmatprep.subr.bf16.mxu0 0
        %1599 = vmatpush1.bf16.msra.mxu0 0
        %1600 = vmatprep.subr.bf16.mxu0 0
        %1601 = vmatpush1.bf16.msra.mxu0 0
        %1602 = vmatprep.subr.bf16.mxu0 0
        %1603 = vmatpush1.bf16.msra.mxu0 0
        %1604 = vmatprep.subr.bf16.mxu0 0
        %1605 = vmatpush1.bf16.msra.mxu0 0
        %1606 = vmatprep.subr.bf16.mxu0 0
        %1607 = vmatpush1.bf16.msra.mxu0 0
        %1608 = vmatprep.subr.bf16.mxu0 0
        %1609 = vmatpush1.bf16.msra.mxu0 0
        %1610 = vmatprep.subr.bf16.mxu0 0
        %1611 = vmatpush1.bf16.msra.mxu0 0
        %1612 = vmatprep.subr.bf16.mxu0 0
        %1613 = vmatpush1.bf16.msra.mxu0 0
        %1614 = vmatprep.subr.bf16.mxu0 0
        %1615 = vmatpush1.bf16.msra.mxu0 0
        %1616 = vmatprep.subr.bf16.mxu0 0
        %1617 = vmatpush1.bf16.msra.mxu0 0
        %1618 = vmatprep.subr.bf16.mxu0 0
        %1619 = vmatpush1.bf16.msra.mxu0 0
        %1620 = vmatprep.subr.bf16.mxu0 0
        %1621 = vmatpush1.bf16.msra.mxu0 0
        %1622 = vmatprep.subr.bf16.mxu0 0
        %1623 = vmatpush1.bf16.msra.mxu0 0
        %1624 = vmatprep.subr.bf16.mxu0 0
        %1625 = vmatpush1.bf16.msra.mxu0 0
        %1626 = vmatprep.subr.bf16.mxu0 0
        %1627 = vmatpush1.bf16.msra.mxu0 0
        %1628 = vmatprep.mubr.bf16.mxu0 0
        %1629 = vmatmul.mubr.bf16.gmra.mrb[0].mxu0 %v1591
        %v1630 = vpop.f32.mrb[0].mxu0
        %v1631 = vadd.f32 0.0, %v1630
        %v1632 = vpop.f32.mrb[0].mxu0
        %v1633 = vpop.f32.mrb[0].mxu0
        %v1634 = vpop.f32.mrb[0].mxu0
        %1635 = vdwg.mxu0
        %v1637 = vsel %vm1305, %v1445, 0
        %v1640 = vsel %vm1401, %v1446, 0
        %1642 = vmatprep.subr.bf16.mxu0 0
        %1643 = vmatpush1.bf16.msra.mxu0 %v1640
        %1644 = vmatprep.subr.bf16.mxu0 0
        %1645 = vmatpush1.bf16.msra.mxu0 0
        %1646 = vmatprep.subr.bf16.mxu0 0
        %1647 = vmatpush1.bf16.msra.mxu0 0
        %1648 = vmatprep.subr.bf16.mxu0 0
        %1649 = vmatpush1.bf16.msra.mxu0 0
        %1650 = vmatprep.subr.bf16.mxu0 0
        %1651 = vmatpush1.bf16.msra.mxu0 0
        %1652 = vmatprep.subr.bf16.mxu0 0
        %1653 = vmatpush1.bf16.msra.mxu0 0
        %1654 = vmatprep.subr.bf16.mxu0 0
        %1655 = vmatpush1.bf16.msra.mxu0 0
        %1656 = vmatprep.subr.bf16.mxu0 0
        %1657 = vmatpush1.bf16.msra.mxu0 0
        %1658 = vmatprep.subr.bf16.mxu0 0
        %1659 = vmatpush1.bf16.msra.mxu0 0
        %1660 = vmatprep.subr.bf16.mxu0 0
        %1661 = vmatpush1.bf16.msra.mxu0 0
        %1662 = vmatprep.subr.bf16.mxu0 0
        %1663 = vmatpush1.bf16.msra.mxu0 0
        %1664 = vmatprep.subr.bf16.mxu0 0
        %1665 = vmatpush1.bf16.msra.mxu0 0
        %1666 = vmatprep.subr.bf16.mxu0 0
        %1667 = vmatpush1.bf16.msra.mxu0 0
        %1668 = vmatprep.subr.bf16.mxu0 0
        %1669 = vmatpush1.bf16.msra.mxu0 0
        %1670 = vmatprep.subr.bf16.mxu0 0
        %1671 = vmatpush1.bf16.msra.mxu0 0
        %1672 = vmatprep.subr.bf16.mxu0 0
        %1673 = vmatpush1.bf16.msra.mxu0 0
        %1674 = vmatprep.mubr.bf16.mxu0 0
        %1675 = vmatmul.mubr.bf16.gmra.mrb[0].mxu0 %v1637
        %v1676 = vpop.f32.mrb[0].mxu0
        %v1677 = vadd.f32 %v1631, %v1676
        %v1678 = vpop.f32.mrb[0].mxu0
        %v1679 = vpop.f32.mrb[0].mxu0
        %v1680 = vpop.f32.mrb[0].mxu0
        %1681 = vdwg.mxu0
        %1682 = vrot.lane.b32.xlu0 %v1297, 112
        %v1683 = vpop.permute.xlu0 %1682
        %1684 = vrot.lane.b32.xlu0 %v1297, 80
        %v1685 = vpop.permute.xlu0 %1684
        %v1686 = vsel %vm1305, %v1683, 0
        %v1688 = vsel %vm1305, %v1685, 0
        %1690 = vmatprep.subr.mxu0 0.0
        %1691 = vmatpush1.xpose.msra.mxu0 %v1688
        %1692 = vmatprep.subr.mxu0 0.0
        %1693 = vmatpush1.xpose.msra.mxu0 0.0
        %1694 = vmatprep.subr.mxu0 0.0
        %1695 = vmatpush1.xpose.msra.mxu0 0.0
        %1696 = vmatprep.subr.mxu0 0.0
        %1697 = vmatpush1.xpose.msra.mxu0 0.0
        %1698 = vmatprep.subr.mxu0 0.0
        %1699 = vmatpush1.xpose.msra.mxu0 0.0
        %1700 = vmatprep.subr.mxu0 0.0
        %1701 = vmatpush1.xpose.msra.mxu0 0.0
        %1702 = vmatprep.subr.mxu0 0.0
        %1703 = vmatpush1.xpose.msra.mxu0 0.0
        %1704 = vmatprep.subr.mxu0 0.0
        %1705 = vmatpush1.xpose.msra.mxu0 0.0
        %1706 = vmatprep.subr.mxu0 0.0
        %1707 = vmatpush1.xpose.msra.mxu0 0.0
        %1708 = vmatprep.subr.mxu0 0.0
        %1709 = vmatpush1.xpose.msra.mxu0 0.0
        %1710 = vmatprep.subr.mxu0 0.0
        %1711 = vmatpush1.xpose.msra.mxu0 0.0
        %1712 = vmatprep.subr.mxu0 0.0
        %1713 = vmatpush1.xpose.msra.mxu0 0.0
        %1714 = vmatprep.subr.mxu0 0.0
        %1715 = vmatpush1.xpose.msra.mxu0 0.0
        %1716 = vmatprep.subr.mxu0 0.0
        %1717 = vmatpush1.xpose.msra.mxu0 0.0
        %1718 = vmatprep.subr.mxu0 0.0
        %1719 = vmatpush1.xpose.msra.mxu0 0.0
        %1720 = vmatprep.subr.mxu0 0.0
        %1721 = vmatpush1.xpose.msra.mxu0 0.0
        %1722 = vmatprep.subr.mxu0 0.0
        %1723 = vmatpush1.xpose.msra.mxu0 0.0
        %1724 = vmatprep.subr.mxu0 0.0
        %1725 = vmatpush1.xpose.msra.mxu0 0.0
        %1726 = vmatprep.subr.mxu0 0.0
        %1727 = vmatpush1.xpose.msra.mxu0 0.0
        %1728 = vmatprep.subr.mxu0 0.0
        %1729 = vmatpush1.xpose.msra.mxu0 0.0
        %1730 = vmatprep.subr.mxu0 0.0
        %1731 = vmatpush1.xpose.msra.mxu0 0.0
        %1732 = vmatprep.subr.mxu0 0.0
        %1733 = vmatpush1.xpose.msra.mxu0 0.0
        %1734 = vmatprep.subr.mxu0 0.0
        %1735 = vmatpush1.xpose.msra.mxu0 0.0
        %1736 = vmatprep.subr.mxu0 0.0
        %1737 = vmatpush1.xpose.msra.mxu0 0.0
        %1738 = vmatprep.subr.mxu0 0.0
        %1739 = vmatpush1.xpose.msra.mxu0 0.0
        %1740 = vmatprep.subr.mxu0 0.0
        %1741 = vmatpush1.xpose.msra.mxu0 0.0
        %1742 = vmatprep.subr.mxu0 0.0
        %1743 = vmatpush1.xpose.msra.mxu0 0.0
        %1744 = vmatprep.subr.mxu0 0.0
        %1745 = vmatpush1.xpose.msra.mxu0 0.0
        %1746 = vmatprep.subr.mxu0 0.0
        %1747 = vmatpush1.xpose.msra.mxu0 0.0
        %1748 = vmatprep.subr.mxu0 0.0
        %1749 = vmatpush1.xpose.msra.mxu0 0.0
        %1750 = vmatprep.subr.mxu0 0.0
        %1751 = vmatpush1.xpose.msra.mxu0 0.0
        %1752 = vmatprep.subr.mxu0 0.0
        %1753 = vmatpush1.xpose.msra.mxu0 0.0
        %1754 = vmatprep.mubr.f32.mxu0 0.0
        %1755 = vmatmul.mubr.f32.gmra.mrb[0].mxu0 %v1686
        %v1756 = vpop.f32.mrb[0].mxu0
        %v1757 = vadd.f32 0.0, %v1756
        %v1758 = vpop.f32.mrb[0].mxu0
        %1759 = vdwg.mxu0
        %v1760 = vmul.f32 %v1757, 0.35355338
        %v1761 = vadd.f32 %v1760, %v1202
        %v1762 = vsel %vm1305, %v1761, -inf
        %1763 = vmax.xlane.f32.xlu0 %v1762
        %v1764 = vpop.xlane.xlu0 %1763
        %v1765 = vsub.f32 %v1761, %v1764
        %v1766 = vmul.f32 %v1765, 1.442695
        %v1767 = vpow.pop %v1766
        %v1768 = vsel %vm1305, %v1767, 0.0
        %1769 = vadd.xlane.f32.xlu0 %v1768
        %v1770 = vpop.xlane.xlu0 %1769
        %v1771 = vrcp.pop %v1770
        %v1772 = vmul.f32 %v1767, %v1771
        %v1773 = vpack.c.bf16 %v1772, %v1772
        %1774 = vrot.lane.b32.xlu0 %v1394, 48
        %v1775 = vpop.permute.xlu0 %1774
        %v1777 = vsel %vm1305, %v1773, 0
        %v1780 = vsel %vm1401, %v1775, 0
        %1782 = vmatprep.subr.bf16.mxu0 0
        %1783 = vmatpush1.bf16.msra.mxu0 %v1780
        %1784 = vmatprep.subr.bf16.mxu0 0
        %1785 = vmatpush1.bf16.msra.mxu0 0
        %1786 = vmatprep.subr.bf16.mxu0 0
        %1787 = vmatpush1.bf16.msra.mxu0 0
        %1788 = vmatprep.subr.bf16.mxu0 0
        %1789 = vmatpush1.bf16.msra.mxu0 0
        %1790 = vmatprep.subr.bf16.mxu0 0
        %1791 = vmatpush1.bf16.msra.mxu0 0
        %1792 = vmatprep.subr.bf16.mxu0 0
        %1793 = vmatpush1.bf16.msra.mxu0 0
        %1794 = vmatprep.subr.bf16.mxu0 0
        %1795 = vmatpush1.bf16.msra.mxu0 0
        %1796 = vmatprep.subr.bf16.mxu0 0
        %1797 = vmatpush1.bf16.msra.mxu0 0
        %1798 = vmatprep.subr.bf16.mxu0 0
        %1799 = vmatpush1.bf16.msra.mxu0 0
        %1800 = vmatprep.subr.bf16.mxu0 0
        %1801 = vmatpush1.bf16.msra.mxu0 0
        %1802 = vmatprep.subr.bf16.mxu0 0
        %1803 = vmatpush1.bf16.msra.mxu0 0
        %1804 = vmatprep.subr.bf16.mxu0 0
        %1805 = vmatpush1.bf16.msra.mxu0 0
        %1806 = vmatprep.subr.bf16.mxu0 0
        %1807 = vmatpush1.bf16.msra.mxu0 0
        %1808 = vmatprep.subr.bf16.mxu0 0
        %1809 = vmatpush1.bf16.msra.mxu0 0
        %1810 = vmatprep.subr.bf16.mxu0 0
        %1811 = vmatpush1.bf16.msra.mxu0 0
        %1812 = vmatprep.subr.bf16.mxu0 0
        %1813 = vmatpush1.bf16.msra.mxu0 0
        %1814 = vmatprep.mubr.bf16.mxu0 0
        %1815 = vmatmul.mubr.bf16.gmra.mrb[0].mxu0 %v1777
        %v1816 = vpop.f32.mrb[0].mxu0
        %v1817 = vadd.f32 0.0, %v1816
        %v1818 = vpop.f32.mrb[0].mxu0
        %v1819 = vpop.f32.mrb[0].mxu0
        %v1820 = vpop.f32.mrb[0].mxu0
        %1821 = vdwg.mxu0
        %v1822 = vpack.c.bf16 %v1817, %v1817
        %s1823 = scalar_lea.vmem %s1163, 8
        %v1824 = vld [vmem:[%s1823] sm:$0xf]
        %v1826 = vsel %vm1305, %v1822, 0
        %v1829 = vsel %vm1401, %v1824, 0
        %1831 = vmatprep.subr.bf16.mxu0 0
        %1832 = vmatpush1.bf16.msra.mxu0 %v1829
        %1833 = vmatprep.subr.bf16.mxu0 0
        %1834 = vmatpush1.bf16.msra.mxu0 0
        %1835 = vmatprep.subr.bf16.mxu0 0
        %1836 = vmatpush1.bf16.msra.mxu0 0
        %1837 = vmatprep.subr.bf16.mxu0 0
        %1838 = vmatpush1.bf16.msra.mxu0 0
        %1839 = vmatprep.subr.bf16.mxu0 0
        %1840 = vmatpush1.bf16.msra.mxu0 0
        %1841 = vmatprep.subr.bf16.mxu0 0
        %1842 = vmatpush1.bf16.msra.mxu0 0
        %1843 = vmatprep.subr.bf16.mxu0 0
        %1844 = vmatpush1.bf16.msra.mxu0 0
        %1845 = vmatprep.subr.bf16.mxu0 0
        %1846 = vmatpush1.bf16.msra.mxu0 0
        %1847 = vmatprep.subr.bf16.mxu0 0
        %1848 = vmatpush1.bf16.msra.mxu0 0
        %1849 = vmatprep.subr.bf16.mxu0 0
        %1850 = vmatpush1.bf16.msra.mxu0 0
        %1851 = vmatprep.subr.bf16.mxu0 0
        %1852 = vmatpush1.bf16.msra.mxu0 0
        %1853 = vmatprep.subr.bf16.mxu0 0
        %1854 = vmatpush1.bf16.msra.mxu0 0
        %1855 = vmatprep.subr.bf16.mxu0 0
        %1856 = vmatpush1.bf16.msra.mxu0 0
        %1857 = vmatprep.subr.bf16.mxu0 0
        %1858 = vmatpush1.bf16.msra.mxu0 0
        %1859 = vmatprep.subr.bf16.mxu0 0
        %1860 = vmatpush1.bf16.msra.mxu0 0
        %1861 = vmatprep.subr.bf16.mxu0 0
        %1862 = vmatpush1.bf16.msra.mxu0 0
        %1863 = vmatprep.mubr.bf16.mxu0 0
        %1864 = vmatmul.mubr.bf16.gmra.mrb[0].mxu0 %v1826
        %v1865 = vpop.f32.mrb[0].mxu0
        %v1866 = vadd.f32 0.0, %v1865
        %v1867 = vpop.f32.mrb[0].mxu0
        %v1868 = vpop.f32.mrb[0].mxu0
        %v1869 = vpop.f32.mrb[0].mxu0
        %1870 = vdwg.mxu0
        %v1871 = vadd.f32 %v1677, %v1866
        %1872 = vrot.lane.b32.xlu0 %v1297, 104
        %v1873 = vpop.permute.xlu0 %1872
        %1874 = vrot.lane.b32.xlu0 %v1297, 72
        %v1875 = vpop.permute.xlu0 %1874
        %v1876 = vsel %vm1305, %v1873, 0
        %v1878 = vsel %vm1305, %v1875, 0
        %1880 = vmatprep.subr.mxu0 0.0
        %1881 = vmatpush1.xpose.msra.mxu0 %v1878
        %1882 = vmatprep.subr.mxu0 0.0
        %1883 = vmatpush1.xpose.msra.mxu0 0.0
        %1884 = vmatprep.subr.mxu0 0.0
        %1885 = vmatpush1.xpose.msra.mxu0 0.0
        %1886 = vmatprep.subr.mxu0 0.0
        %1887 = vmatpush1.xpose.msra.mxu0 0.0
        %1888 = vmatprep.subr.mxu0 0.0
        %1889 = vmatpush1.xpose.msra.mxu0 0.0
        %1890 = vmatprep.subr.mxu0 0.0
        %1891 = vmatpush1.xpose.msra.mxu0 0.0
        %1892 = vmatprep.subr.mxu0 0.0
        %1893 = vmatpush1.xpose.msra.mxu0 0.0
        %1894 = vmatprep.subr.mxu0 0.0
        %1895 = vmatpush1.xpose.msra.mxu0 0.0
        %1896 = vmatprep.subr.mxu0 0.0
        %1897 = vmatpush1.xpose.msra.mxu0 0.0
        %1898 = vmatprep.subr.mxu0 0.0
        %1899 = vmatpush1.xpose.msra.mxu0 0.0
        %1900 = vmatprep.subr.mxu0 0.0
        %1901 = vmatpush1.xpose.msra.mxu0 0.0
        %1902 = vmatprep.subr.mxu0 0.0
        %1903 = vmatpush1.xpose.msra.mxu0 0.0
        %1904 = vmatprep.subr.mxu0 0.0
        %1905 = vmatpush1.xpose.msra.mxu0 0.0
        %1906 = vmatprep.subr.mxu0 0.0
        %1907 = vmatpush1.xpose.msra.mxu0 0.0
        %1908 = vmatprep.subr.mxu0 0.0
        %1909 = vmatpush1.xpose.msra.mxu0 0.0
        %1910 = vmatprep.subr.mxu0 0.0
        %1911 = vmatpush1.xpose.msra.mxu0 0.0
        %1912 = vmatprep.subr.mxu0 0.0
        %1913 = vmatpush1.xpose.msra.mxu0 0.0
        %1914 = vmatprep.subr.mxu0 0.0
        %1915 = vmatpush1.xpose.msra.mxu0 0.0
        %1916 = vmatprep.subr.mxu0 0.0
        %1917 = vmatpush1.xpose.msra.mxu0 0.0
        %1918 = vmatprep.subr.mxu0 0.0
        %1919 = vmatpush1.xpose.msra.mxu0 0.0
        %1920 = vmatprep.subr.mxu0 0.0
        %1921 = vmatpush1.xpose.msra.mxu0 0.0
        %1922 = vmatprep.subr.mxu0 0.0
        %1923 = vmatpush1.xpose.msra.mxu0 0.0
        %1924 = vmatprep.subr.mxu0 0.0
        %1925 = vmatpush1.xpose.msra.mxu0 0.0
        %1926 = vmatprep.subr.mxu0 0.0
        %1927 = vmatpush1.xpose.msra.mxu0 0.0
        %1928 = vmatprep.subr.mxu0 0.0
        %1929 = vmatpush1.xpose.msra.mxu0 0.0
        %1930 = vmatprep.subr.mxu0 0.0
        %1931 = vmatpush1.xpose.msra.mxu0 0.0
        %1932 = vmatprep.subr.mxu0 0.0
        %1933 = vmatpush1.xpose.msra.mxu0 0.0
        %1934 = vmatprep.subr.mxu0 0.0
        %1935 = vmatpush1.xpose.msra.mxu0 0.0
        %1936 = vmatprep.subr.mxu0 0.0
        %1937 = vmatpush1.xpose.msra.mxu0 0.0
        %1938 = vmatprep.subr.mxu0 0.0
        %1939 = vmatpush1.xpose.msra.mxu0 0.0
        %1940 = vmatprep.subr.mxu0 0.0
        %1941 = vmatpush1.xpose.msra.mxu0 0.0
        %1942 = vmatprep.subr.mxu0 0.0
        %1943 = vmatpush1.xpose.msra.mxu0 0.0
        %1944 = vmatprep.mubr.f32.mxu0 0.0
        %1945 = vmatmul.mubr.f32.gmra.mrb[0].mxu0 %v1876
        %v1946 = vpop.f32.mrb[0].mxu0
        %v1947 = vadd.f32 0.0, %v1946
        %v1948 = vpop.f32.mrb[0].mxu0
        %1949 = vdwg.mxu0
        %v1950 = vmul.f32 %v1947, 0.35355338
        %v1951 = vadd.f32 %v1950, %v1202
        %v1952 = vsel %vm1305, %v1951, -inf
        %1953 = vmax.xlane.f32.xlu0 %v1952
        %v1954 = vpop.xlane.xlu0 %1953
        %v1955 = vsub.f32 %v1951, %v1954
        %v1956 = vmul.f32 %v1955, 1.442695
        %v1957 = vpow.pop %v1956
        %v1958 = vsel %vm1305, %v1957, 0.0
        %1959 = vadd.xlane.f32.xlu0 %v1958
        %v1960 = vpop.xlane.xlu0 %1959
        %v1961 = vrcp.pop %v1960
        %v1962 = vmul.f32 %v1957, %v1961
        %v1963 = vpack.c.bf16 %v1962, %v1962
        %1964 = vrot.lane.b32.xlu0 %v1394, 40
        %v1965 = vpop.permute.xlu0 %1964
        %v1967 = vsel %vm1305, %v1963, 0
        %v1970 = vsel %vm1401, %v1965, 0
        %1972 = vmatprep.subr.bf16.mxu0 0
        %1973 = vmatpush1.bf16.msra.mxu0 %v1970
        %1974 = vmatprep.subr.bf16.mxu0 0
        %1975 = vmatpush1.bf16.msra.mxu0 0
        %1976 = vmatprep.subr.bf16.mxu0 0
        %1977 = vmatpush1.bf16.msra.mxu0 0
        %1978 = vmatprep.subr.bf16.mxu0 0
        %1979 = vmatpush1.bf16.msra.mxu0 0
        %1980 = vmatprep.subr.bf16.mxu0 0
        %1981 = vmatpush1.bf16.msra.mxu0 0
        %1982 = vmatprep.subr.bf16.mxu0 0
        %1983 = vmatpush1.bf16.msra.mxu0 0
        %1984 = vmatprep.subr.bf16.mxu0 0
        %1985 = vmatpush1.bf16.msra.mxu0 0
        %1986 = vmatprep.subr.bf16.mxu0 0
        %1987 = vmatpush1.bf16.msra.mxu0 0
        %1988 = vmatprep.subr.bf16.mxu0 0
        %1989 = vmatpush1.bf16.msra.mxu0 0
        %1990 = vmatprep.subr.bf16.mxu0 0
        %1991 = vmatpush1.bf16.msra.mxu0 0
        %1992 = vmatprep.subr.bf16.mxu0 0
        %1993 = vmatpush1.bf16.msra.mxu0 0
        %1994 = vmatprep.subr.bf16.mxu0 0
        %1995 = vmatpush1.bf16.msra.mxu0 0
        %1996 = vmatprep.subr.bf16.mxu0 0
        %1997 = vmatpush1.bf16.msra.mxu0 0
        %1998 = vmatprep.subr.bf16.mxu0 0
        %1999 = vmatpush1.bf16.msra.mxu0 0
        %2000 = vmatprep.subr.bf16.mxu0 0
        %2001 = vmatpush1.bf16.msra.mxu0 0
        %2002 = vmatprep.subr.bf16.mxu0 0
        %2003 = vmatpush1.bf16.msra.mxu0 0
        %2004 = vmatprep.mubr.bf16.mxu0 0
        %2005 = vmatmul.mubr.bf16.gmra.mrb[0].mxu0 %v1967
        %v2006 = vpop.f32.mrb[0].mxu0
        %v2007 = vadd.f32 0.0, %v2006
        %v2008 = vpop.f32.mrb[0].mxu0
        %v2009 = vpop.f32.mrb[0].mxu0
        %v2010 = vpop.f32.mrb[0].mxu0
        %2011 = vdwg.mxu0
        %v2012 = vpack.c.bf16 %v2007, %v2007
        %s2013 = scalar_lea.vmem %s1163, 12
        %v2014 = vld [vmem:[%s2013] sm:$0xf]
        %v2016 = vsel %vm1305, %v2012, 0
        %v2019 = vsel %vm1401, %v2014, 0
        %2021 = vmatprep.subr.bf16.mxu0 0
        %2022 = vmatpush1.bf16.msra.mxu0 %v2019
        %2023 = vmatprep.subr.bf16.mxu0 0
        %2024 = vmatpush1.bf16.msra.mxu0 0
        %2025 = vmatprep.subr.bf16.mxu0 0
        %2026 = vmatpush1.bf16.msra.mxu0 0
        %2027 = vmatprep.subr.bf16.mxu0 0
        %2028 = vmatpush1.bf16.msra.mxu0 0
        %2029 = vmatprep.subr.bf16.mxu0 0
        %2030 = vmatpush1.bf16.msra.mxu0 0
        %2031 = vmatprep.subr.bf16.mxu0 0
        %2032 = vmatpush1.bf16.msra.mxu0 0
        %2033 = vmatprep.subr.bf16.mxu0 0
        %2034 = vmatpush1.bf16.msra.mxu0 0
        %2035 = vmatprep.subr.bf16.mxu0 0
        %2036 = vmatpush1.bf16.msra.mxu0 0
        %2037 = vmatprep.subr.bf16.mxu0 0
        %2038 = vmatpush1.bf16.msra.mxu0 0
        %2039 = vmatprep.subr.bf16.mxu0 0
        %2040 = vmatpush1.bf16.msra.mxu0 0
        %2041 = vmatprep.subr.bf16.mxu0 0
        %2042 = vmatpush1.bf16.msra.mxu0 0
        %2043 = vmatprep.subr.bf16.mxu0 0
        %2044 = vmatpush1.bf16.msra.mxu0 0
        %2045 = vmatprep.subr.bf16.mxu0 0
        %2046 = vmatpush1.bf16.msra.mxu0 0
        %2047 = vmatprep.subr.bf16.mxu0 0
        %2048 = vmatpush1.bf16.msra.mxu0 0
        %2049 = vmatprep.subr.bf16.mxu0 0
        %2050 = vmatpush1.bf16.msra.mxu0 0
        %2051 = vmatprep.subr.bf16.mxu0 0
        %2052 = vmatpush1.bf16.msra.mxu0 0
        %2053 = vmatprep.mubr.bf16.mxu0 0
        %2054 = vmatmul.mubr.bf16.gmra.mrb[0].mxu0 %v2016
        %v2055 = vpop.f32.mrb[0].mxu0
        %v2056 = vadd.f32 0.0, %v2055
        %v2057 = vpop.f32.mrb[0].mxu0
        %v2058 = vpop.f32.mrb[0].mxu0
        %v2059 = vpop.f32.mrb[0].mxu0
        %2060 = vdwg.mxu0
        %v2061 = vadd.f32 %v1871, %v2056
        %v2062 = vadd.f32 %v1200, %v2061
        %v2063 = vld [vmem:[%s947] sm:$0x1]
        %v2065 = vlaneseq
        %v2066 = vshrl.u32 %v2065, 7
        %v2067 = vsub.s32 0, %v2066
        %v2068 = vrot.slane %v2063, %v2067
        %v2070 = vadd.f32 %v2062, %v2068
        %s2071 = scalar_lea.vmem %s1182, 1
        %v2072 = vld [vmem:[%s2071] sm:$0x1]
        %s2073 = scalar_lea.vmem %s1186, 1
        %v2074 = vld [vmem:[%s2073] sm:$0x1]
        %v2075 = vsel %vm1206, %v2070, 0.0
        %2076 = vadd.xlane.f32.xlu0 %v2075
        %v2077 = vpop.xlane.xlu0 %2076
        %v2078 = vmul.f32 %v2077, %v1210
        %v2079 = vsub.f32 %v2070, %v2078
        %v2080 = vmul.f32 %v2079, %v2079
        %v2081 = vsel %vm1206, %v2080, 0.0
        %2082 = vadd.xlane.f32.xlu0 %v2081
        %v2083 = vpop.xlane.xlu0 %2082
        %v2084 = vmul.f32 %v2083, %v1210
        %v2085 = vadd.f32 %v2084, 1e-06
        %v2086 = vrsqrt.pop %v2085
        %v2087 = vmul.f32 %v2079, %v2086
        %v2089 = vlaneseq
        %v2090 = vshrl.u32 %v2089, 7
        %v2091 = vsub.s32 0, %v2090
        %v2092 = vrot.slane %v2072, %v2091
        %v2094 = vmul.f32 %v2087, %v2092
        %v2096 = vlaneseq
        %v2097 = vshrl.u32 %v2096, 7
        %v2098 = vsub.s32 0, %v2097
        %v2099 = vrot.slane %v2074, %v2098
        %v2101 = vadd.f32 %v2094, %v2099
        %v2102 = vpack.c.bf16 %v2101, %v2101
        %v2103 = vld [vmem:[%s1168] sm:$0xf]
        %v2104 = vld [vmem:[%s1168 + $0x4] sm:$0xf]
        %v2105 = vld [vmem:[%s1168 + $0x8] sm:$0xf]
        %v2106 = vld [vmem:[%s1168 + $0xc] sm:$0xf]
        %v2107 = vld [vmem:[%s955] sm:$0x1]
        %v2109 = vlaneseq
        %v2110 = vshrl.u32 %v2109, 7
        %v2111 = vsub.s32 0, %v2110
        %v2112 = vrot.slane %v2107, %v2111
        %v2118 = vunpack.c.l.b16 %v2103
        %v2119 = vunpack.c.l.b16 %v2104
        %v2120 = vunpack.c.l.b16 %v2105
        %v2121 = vunpack.c.l.b16 %v2106
        %v2122 = vpack.c.b16 %v2119, %v2118
        %v2123 = vpack.c.b16 %v2121, %v2120
        %v2127 = vsel %vm1206, %v2102, 0
        %2129 = vmatprep.subr.bf16.mxu0 0
        %2130 = vmatpush1.bf16.msra.mxu0 %v2122
        %2131 = vmatprep.subr.bf16.mxu0 0
        %2132 = vmatpush1.bf16.msra.mxu0 %v2123
        %2133 = vmatprep.subr.bf16.mxu0 0
        %2134 = vmatpush1.bf16.msra.mxu0 0
        %2135 = vmatprep.subr.bf16.mxu0 0
        %2136 = vmatpush1.bf16.msra.mxu0 0
        %2137 = vmatprep.subr.bf16.mxu0 0
        %2138 = vmatpush1.bf16.msra.mxu0 0
        %2139 = vmatprep.subr.bf16.mxu0 0
        %2140 = vmatpush1.bf16.msra.mxu0 0
        %2141 = vmatprep.subr.bf16.mxu0 0
        %2142 = vmatpush1.bf16.msra.mxu0 0
        %2143 = vmatprep.subr.bf16.mxu0 0
        %2144 = vmatpush1.bf16.msra.mxu0 0
        %2145 = vmatprep.subr.bf16.mxu0 0
        %2146 = vmatpush1.bf16.msra.mxu0 0
        %2147 = vmatprep.subr.bf16.mxu0 0
        %2148 = vmatpush1.bf16.msra.mxu0 0
        %2149 = vmatprep.subr.bf16.mxu0 0
        %2150 = vmatpush1.bf16.msra.mxu0 0
        %2151 = vmatprep.subr.bf16.mxu0 0
        %2152 = vmatpush1.bf16.msra.mxu0 0
        %2153 = vmatprep.subr.bf16.mxu0 0
        %2154 = vmatpush1.bf16.msra.mxu0 0
        %2155 = vmatprep.subr.bf16.mxu0 0
        %2156 = vmatpush1.bf16.msra.mxu0 0
        %2157 = vmatprep.subr.bf16.mxu0 0
        %2158 = vmatpush1.bf16.msra.mxu0 0
        %2159 = vmatprep.subr.bf16.mxu0 0
        %2160 = vmatpush1.bf16.msra.mxu0 0
        %2161 = vmatprep.mubr.bf16.mxu0 0
        %2162 = vmatmul.mubr.bf16.gmra.mrb[0].mxu0 %v2127
        %v2163 = vpop.f32.mrb[0].mxu0
        %v2164 = vadd.f32 %v2112, %v2163
        %v2165 = vpop.f32.mrb[0].mxu0
        %v2166 = vpop.f32.mrb[0].mxu0
        %v2167 = vpop.f32.mrb[0].mxu0
        %2168 = vdwg.mxu0
        %v2169 = vld [vmem:[%s1173] sm:$0xf]
        %v2170 = vld [vmem:[%s1173 + $0x4] sm:$0xf]
        %v2171 = vld [vmem:[%s1173 + $0x8] sm:$0xf]
        %v2172 = vld [vmem:[%s1173 + $0xc] sm:$0xf]
        %v2173 = vld [vmem:[%s963] sm:$0x1]
        %v2175 = vlaneseq
        %v2176 = vshrl.u32 %v2175, 7
        %v2177 = vsub.s32 0, %v2176
        %v2178 = vrot.slane %v2173, %v2177
        %v2184 = vunpack.c.l.b16 %v2169
        %v2185 = vunpack.c.l.b16 %v2170
        %v2186 = vunpack.c.l.b16 %v2171
        %v2187 = vunpack.c.l.b16 %v2172
        %v2188 = vpack.c.b16 %v2185, %v2184
        %v2189 = vpack.c.b16 %v2187, %v2186
        %v2193 = vsel %vm1206, %v1201, 0
        %2195 = vmatprep.subr.bf16.mxu0 0
        %2196 = vmatpush1.bf16.msra.mxu0 %v2188
        %2197 = vmatprep.subr.bf16.mxu0 0
        %2198 = vmatpush1.bf16.msra.mxu0 %v2189
        %2199 = vmatprep.subr.bf16.mxu0 0
        %2200 = vmatpush1.bf16.msra.mxu0 0
        %2201 = vmatprep.subr.bf16.mxu0 0
        %2202 = vmatpush1.bf16.msra.mxu0 0
        %2203 = vmatprep.subr.bf16.mxu0 0
        %2204 = vmatpush1.bf16.msra.mxu0 0
        %2205 = vmatprep.subr.bf16.mxu0 0
        %2206 = vmatpush1.bf16.msra.mxu0 0
        %2207 = vmatprep.subr.bf16.mxu0 0
        %2208 = vmatpush1.bf16.msra.mxu0 0
        %2209 = vmatprep.subr.bf16.mxu0 0
        %2210 = vmatpush1.bf16.msra.mxu0 0
        %2211 = vmatprep.subr.bf16.mxu0 0
        %2212 = vmatpush1.bf16.msra.mxu0 0
        %2213 = vmatprep.subr.bf16.mxu0 0
        %2214 = vmatpush1.bf16.msra.mxu0 0
        %2215 = vmatprep.subr.bf16.mxu0 0
        %2216 = vmatpush1.bf16.msra.mxu0 0
        %2217 = vmatprep.subr.bf16.mxu0 0
        %2218 = vmatpush1.bf16.msra.mxu0 0
        %2219 = vmatprep.subr.bf16.mxu0 0
        %2220 = vmatpush1.bf16.msra.mxu0 0
        %2221 = vmatprep.subr.bf16.mxu0 0
        %2222 = vmatpush1.bf16.msra.mxu0 0
        %2223 = vmatprep.subr.bf16.mxu0 0
        %2224 = vmatpush1.bf16.msra.mxu0 0
        %2225 = vmatprep.subr.bf16.mxu0 0
        %2226 = vmatpush1.bf16.msra.mxu0 0
        %2227 = vmatprep.mubr.bf16.mxu0 0
        %2228 = vmatmul.mubr.bf16.gmra.mrb[0].mxu0 %v2193
        %v2229 = vpop.f32.mrb[0].mxu0
        %v2230 = vadd.f32 %v2178, %v2229
        %v2231 = vpop.f32.mrb[0].mxu0
        %v2232 = vpop.f32.mrb[0].mxu0
        %v2233 = vpop.f32.mrb[0].mxu0
        %2234 = vdwg.mxu0
        %v2236 = vsel %vm1305, %v2164, 0
        %v2239 = vsel %vm1305, %v2230, 0
        %2241 = vmatprep.subr.mxu0 0.0
        %2242 = vmatpush1.xpose.msra.mxu0 %v2239
        %2243 = vmatprep.subr.mxu0 0.0
        %2244 = vmatpush1.xpose.msra.mxu0 0.0
        %2245 = vmatprep.subr.mxu0 0.0
        %2246 = vmatpush1.xpose.msra.mxu0 0.0
        %2247 = vmatprep.subr.mxu0 0.0
        %2248 = vmatpush1.xpose.msra.mxu0 0.0
        %2249 = vmatprep.subr.mxu0 0.0
        %2250 = vmatpush1.xpose.msra.mxu0 0.0
        %2251 = vmatprep.subr.mxu0 0.0
        %2252 = vmatpush1.xpose.msra.mxu0 0.0
        %2253 = vmatprep.subr.mxu0 0.0
        %2254 = vmatpush1.xpose.msra.mxu0 0.0
        %2255 = vmatprep.subr.mxu0 0.0
        %2256 = vmatpush1.xpose.msra.mxu0 0.0
        %2257 = vmatprep.subr.mxu0 0.0
        %2258 = vmatpush1.xpose.msra.mxu0 0.0
        %2259 = vmatprep.subr.mxu0 0.0
        %2260 = vmatpush1.xpose.msra.mxu0 0.0
        %2261 = vmatprep.subr.mxu0 0.0
        %2262 = vmatpush1.xpose.msra.mxu0 0.0
        %2263 = vmatprep.subr.mxu0 0.0
        %2264 = vmatpush1.xpose.msra.mxu0 0.0
        %2265 = vmatprep.subr.mxu0 0.0
        %2266 = vmatpush1.xpose.msra.mxu0 0.0
        %2267 = vmatprep.subr.mxu0 0.0
        %2268 = vmatpush1.xpose.msra.mxu0 0.0
        %2269 = vmatprep.subr.mxu0 0.0
        %2270 = vmatpush1.xpose.msra.mxu0 0.0
        %2271 = vmatprep.subr.mxu0 0.0
        %2272 = vmatpush1.xpose.msra.mxu0 0.0
        %2273 = vmatprep.subr.mxu0 0.0
        %2274 = vmatpush1.xpose.msra.mxu0 0.0
        %2275 = vmatprep.subr.mxu0 0.0
        %2276 = vmatpush1.xpose.msra.mxu0 0.0
        %2277 = vmatprep.subr.mxu0 0.0
        %2278 = vmatpush1.xpose.msra.mxu0 0.0
        %2279 = vmatprep.subr.mxu0 0.0
        %2280 = vmatpush1.xpose.msra.mxu0 0.0
        %2281 = vmatprep.subr.mxu0 0.0
        %2282 = vmatpush1.xpose.msra.mxu0 0.0
        %2283 = vmatprep.subr.mxu0 0.0
        %2284 = vmatpush1.xpose.msra.mxu0 0.0
        %2285 = vmatprep.subr.mxu0 0.0
        %2286 = vmatpush1.xpose.msra.mxu0 0.0
        %2287 = vmatprep.subr.mxu0 0.0
        %2288 = vmatpush1.xpose.msra.mxu0 0.0
        %2289 = vmatprep.subr.mxu0 0.0
        %2290 = vmatpush1.xpose.msra.mxu0 0.0
        %2291 = vmatprep.subr.mxu0 0.0
        %2292 = vmatpush1.xpose.msra.mxu0 0.0
        %2293 = vmatprep.subr.mxu0 0.0
        %2294 = vmatpush1.xpose.msra.mxu0 0.0
        %2295 = vmatprep.subr.mxu0 0.0
        %2296 = vmatpush1.xpose.msra.mxu0 0.0
        %2297 = vmatprep.subr.mxu0 0.0
        %2298 = vmatpush1.xpose.msra.mxu0 0.0
        %2299 = vmatprep.subr.mxu0 0.0
        %2300 = vmatpush1.xpose.msra.mxu0 0.0
        %2301 = vmatprep.subr.mxu0 0.0
        %2302 = vmatpush1.xpose.msra.mxu0 0.0
        %2303 = vmatprep.subr.mxu0 0.0
        %2304 = vmatpush1.xpose.msra.mxu0 0.0
        %2305 = vmatprep.mubr.f32.mxu0 0.0
        %2306 = vmatmul.mubr.f32.gmra.mrb[0].mxu0 %v2236
        %v2307 = vpop.f32.mrb[0].mxu0
        %v2308 = vadd.f32 0.0, %v2307
        %v2309 = vpop.f32.mrb[0].mxu0
        %2310 = vdwg.mxu0
        %v2311 = vmul.f32 %v2308, 0.35355338
        %v2313 = vlaneseq
        %v2314 = vshrl.u32 %v2313, 7
        %v2315 = vsub.s32 0, %v2314
        %v2316 = vrot.slane %v1203, %v2315
        %v2318 = vadd.f32 %v2311, %v2316
        %v2319 = vsel %vm1305, %v2318, -inf
        %2320 = vmax.xlane.f32.xlu0 %v2319
        %v2321 = vpop.xlane.xlu0 %2320
        %v2322 = vsub.f32 %v2318, %v2321
        %v2323 = vmul.f32 %v2322, 1.442695
        %v2324 = vpow.pop %v2323
        %v2325 = vsel %vm1305, %v2324, 0.0
        %2326 = vadd.xlane.f32.xlu0 %v2325
        %v2327 = vpop.xlane.xlu0 %2326
        %v2328 = vrcp.pop %v2327
        %v2329 = vmul.f32 %v2324, %v2328
        %v2330 = vpack.c.bf16 %v2329, %v2329
        %v2331 = vpack.c.bf16 %v2230, %v2230
        %2333 = vrot.lane.b32.xlu0 %v2331, 96
        %v2334 = vpop.permute.xlu0 %2333
        %v2336 = vsel %vm1305, %v2330, 0
        %v2339 = vsel %vm1401, %v2334, 0
        %2341 = vmatprep.subr.bf16.mxu0 0
        %2342 = vmatpush1.bf16.msra.mxu0 %v2339
        %2343 = vmatprep.subr.bf16.mxu0 0
        %2344 = vmatpush1.bf16.msra.mxu0 0
        %2345 = vmatprep.subr.bf16.mxu0 0
        %2346 = vmatpush1.bf16.msra.mxu0 0
        %2347 = vmatprep.subr.bf16.mxu0 0
        %2348 = vmatpush1.bf16.msra.mxu0 0
        %2349 = vmatprep.subr.bf16.mxu0 0
        %2350 = vmatpush1.bf16.msra.mxu0 0
        %2351 = vmatprep.subr.bf16.mxu0 0
        %2352 = vmatpush1.bf16.msra.mxu0 0
        %2353 = vmatprep.subr.bf16.mxu0 0
        %2354 = vmatpush1.bf16.msra.mxu0 0
        %2355 = vmatprep.subr.bf16.mxu0 0
        %2356 = vmatpush1.bf16.msra.mxu0 0
        %2357 = vmatprep.subr.bf16.mxu0 0
        %2358 = vmatpush1.bf16.msra.mxu0 0
        %2359 = vmatprep.subr.bf16.mxu0 0
        %2360 = vmatpush1.bf16.msra.mxu0 0
        %2361 = vmatprep.subr.bf16.mxu0 0
        %2362 = vmatpush1.bf16.msra.mxu0 0
        %2363 = vmatprep.subr.bf16.mxu0 0
        %2364 = vmatpush1.bf16.msra.mxu0 0
        %2365 = vmatprep.subr.bf16.mxu0 0
        %2366 = vmatpush1.bf16.msra.mxu0 0
        %2367 = vmatprep.subr.bf16.mxu0 0
        %2368 = vmatpush1.bf16.msra.mxu0 0
        %2369 = vmatprep.subr.bf16.mxu0 0
        %2370 = vmatpush1.bf16.msra.mxu0 0
        %2371 = vmatprep.subr.bf16.mxu0 0
        %2372 = vmatpush1.bf16.msra.mxu0 0
        %2373 = vmatprep.mubr.bf16.mxu0 0
        %2374 = vmatmul.mubr.bf16.gmra.mrb[0].mxu0 %v2336
        %v2375 = vpop.f32.mrb[0].mxu0
        %v2376 = vadd.f32 0.0, %v2375
        %v2377 = vpop.f32.mrb[0].mxu0
        %v2378 = vpop.f32.mrb[0].mxu0
        %v2379 = vpop.f32.mrb[0].mxu0
        %2380 = vdwg.mxu0
        %v2381 = vpack.c.bf16 %v2376, %v2376
        %v2382 = vld [vmem:[%s1178] sm:$0xf]
        %2383 = vrot.lane.b32.xlu0 %v2164, 120
        %v2384 = vpop.permute.xlu0 %2383
        %2385 = vrot.lane.b32.xlu0 %v2230, 120
        %v2386 = vpop.permute.xlu0 %2385
        %v2387 = vsel %vm1305, %v2384, 0
        %v2389 = vsel %vm1305, %v2386, 0
        %2391 = vmatprep.subr.mxu0 0.0
        %2392 = vmatpush1.xpose.msra.mxu0 %v2389
        %2393 = vmatprep.subr.mxu0 0.0
        %2394 = vmatpush1.xpose.msra.mxu0 0.0
        %2395 = vmatprep.subr.mxu0 0.0
        %2396 = vmatpush1.xpose.msra.mxu0 0.0
        %2397 = vmatprep.subr.mxu0 0.0
        %2398 = vmatpush1.xpose.msra.mxu0 0.0
        %2399 = vmatprep.subr.mxu0 0.0
        %2400 = vmatpush1.xpose.msra.mxu0 0.0
        %2401 = vmatprep.subr.mxu0 0.0
        %2402 = vmatpush1.xpose.msra.mxu0 0.0
        %2403 = vmatprep.subr.mxu0 0.0
        %2404 = vmatpush1.xpose.msra.mxu0 0.0
        %2405 = vmatprep.subr.mxu0 0.0
        %2406 = vmatpush1.xpose.msra.mxu0 0.0
        %2407 = vmatprep.subr.mxu0 0.0
        %2408 = vmatpush1.xpose.msra.mxu0 0.0
        %2409 = vmatprep.subr.mxu0 0.0
        %2410 = vmatpush1.xpose.msra.mxu0 0.0
        %2411 = vmatprep.subr.mxu0 0.0
        %2412 = vmatpush1.xpose.msra.mxu0 0.0
        %2413 = vmatprep.subr.mxu0 0.0
        %2414 = vmatpush1.xpose.msra.mxu0 0.0
        %2415 = vmatprep.subr.mxu0 0.0
        %2416 = vmatpush1.xpose.msra.mxu0 0.0
        %2417 = vmatprep.subr.mxu0 0.0
        %2418 = vmatpush1.xpose.msra.mxu0 0.0
        %2419 = vmatprep.subr.mxu0 0.0
        %2420 = vmatpush1.xpose.msra.mxu0 0.0
        %2421 = vmatprep.subr.mxu0 0.0
        %2422 = vmatpush1.xpose.msra.mxu0 0.0
        %2423 = vmatprep.subr.mxu0 0.0
        %2424 = vmatpush1.xpose.msra.mxu0 0.0
        %2425 = vmatprep.subr.mxu0 0.0
        %2426 = vmatpush1.xpose.msra.mxu0 0.0
        %2427 = vmatprep.subr.mxu0 0.0
        %2428 = vmatpush1.xpose.msra.mxu0 0.0
        %2429 = vmatprep.subr.mxu0 0.0
        %2430 = vmatpush1.xpose.msra.mxu0 0.0
        %2431 = vmatprep.subr.mxu0 0.0
        %2432 = vmatpush1.xpose.msra.mxu0 0.0
        %2433 = vmatprep.subr.mxu0 0.0
        %2434 = vmatpush1.xpose.msra.mxu0 0.0
        %2435 = vmatprep.subr.mxu0 0.0
        %2436 = vmatpush1.xpose.msra.mxu0 0.0
        %2437 = vmatprep.subr.mxu0 0.0
        %2438 = vmatpush1.xpose.msra.mxu0 0.0
        %2439 = vmatprep.subr.mxu0 0.0
        %2440 = vmatpush1.xpose.msra.mxu0 0.0
        %2441 = vmatprep.subr.mxu0 0.0
        %2442 = vmatpush1.xpose.msra.mxu0 0.0
        %2443 = vmatprep.subr.mxu0 0.0
        %2444 = vmatpush1.xpose.msra.mxu0 0.0
        %2445 = vmatprep.subr.mxu0 0.0
        %2446 = vmatpush1.xpose.msra.mxu0 0.0
        %2447 = vmatprep.subr.mxu0 0.0
        %2448 = vmatpush1.xpose.msra.mxu0 0.0
        %2449 = vmatprep.subr.mxu0 0.0
        %2450 = vmatpush1.xpose.msra.mxu0 0.0
        %2451 = vmatprep.subr.mxu0 0.0
        %2452 = vmatpush1.xpose.msra.mxu0 0.0
        %2453 = vmatprep.subr.mxu0 0.0
        %2454 = vmatpush1.xpose.msra.mxu0 0.0
        %2455 = vmatprep.mubr.f32.mxu0 0.0
        %2456 = vmatmul.mubr.f32.gmra.mrb[0].mxu0 %v2387
        %v2457 = vpop.f32.mrb[0].mxu0
        %v2458 = vadd.f32 0.0, %v2457
        %v2459 = vpop.f32.mrb[0].mxu0
        %2460 = vdwg.mxu0
        %v2461 = vmul.f32 %v2458, 0.35355338
        %v2462 = vadd.f32 %v2461, %v2316
        %v2463 = vsel %vm1305, %v2462, -inf
        %2464 = vmax.xlane.f32.xlu0 %v2463
        %v2465 = vpop.xlane.xlu0 %2464
        %v2466 = vsub.f32 %v2462, %v2465
        %v2467 = vmul.f32 %v2466, 1.442695
        %v2468 = vpow.pop %v2467
        %v2469 = vsel %vm1305, %v2468, 0.0
        %2470 = vadd.xlane.f32.xlu0 %v2469
        %v2471 = vpop.xlane.xlu0 %2470
        %v2472 = vrcp.pop %v2471
        %v2473 = vmul.f32 %v2468, %v2472
        %v2474 = vpack.c.bf16 %v2473, %v2473
        %2475 = vrot.lane.b32.xlu0 %v2331, 88
        %v2476 = vpop.permute.xlu0 %2475
        %v2478 = vsel %vm1305, %v2474, 0
        %v2481 = vsel %vm1401, %v2476, 0
        %2483 = vmatprep.subr.bf16.mxu0 0
        %2484 = vmatpush1.bf16.msra.mxu0 %v2481
        %2485 = vmatprep.subr.bf16.mxu0 0
        %2486 = vmatpush1.bf16.msra.mxu0 0
        %2487 = vmatprep.subr.bf16.mxu0 0
        %2488 = vmatpush1.bf16.msra.mxu0 0
        %2489 = vmatprep.subr.bf16.mxu0 0
        %2490 = vmatpush1.bf16.msra.mxu0 0
        %2491 = vmatprep.subr.bf16.mxu0 0
        %2492 = vmatpush1.bf16.msra.mxu0 0
        %2493 = vmatprep.subr.bf16.mxu0 0
        %2494 = vmatpush1.bf16.msra.mxu0 0
        %2495 = vmatprep.subr.bf16.mxu0 0
        %2496 = vmatpush1.bf16.msra.mxu0 0
        %2497 = vmatprep.subr.bf16.mxu0 0
        %2498 = vmatpush1.bf16.msra.mxu0 0
        %2499 = vmatprep.subr.bf16.mxu0 0
        %2500 = vmatpush1.bf16.msra.mxu0 0
        %2501 = vmatprep.subr.bf16.mxu0 0
        %2502 = vmatpush1.bf16.msra.mxu0 0
        %2503 = vmatprep.subr.bf16.mxu0 0
        %2504 = vmatpush1.bf16.msra.mxu0 0
        %2505 = vmatprep.subr.bf16.mxu0 0
        %2506 = vmatpush1.bf16.msra.mxu0 0
        %2507 = vmatprep.subr.bf16.mxu0 0
        %2508 = vmatpush1.bf16.msra.mxu0 0
        %2509 = vmatprep.subr.bf16.mxu0 0
        %2510 = vmatpush1.bf16.msra.mxu0 0
        %2511 = vmatprep.subr.bf16.mxu0 0
        %2512 = vmatpush1.bf16.msra.mxu0 0
        %2513 = vmatprep.subr.bf16.mxu0 0
        %2514 = vmatpush1.bf16.msra.mxu0 0
        %2515 = vmatprep.mubr.bf16.mxu0 0
        %2516 = vmatmul.mubr.bf16.gmra.mrb[0].mxu0 %v2478
        %v2517 = vpop.f32.mrb[0].mxu0
        %v2518 = vadd.f32 0.0, %v2517
        %v2519 = vpop.f32.mrb[0].mxu0
        %v2520 = vpop.f32.mrb[0].mxu0
        %v2521 = vpop.f32.mrb[0].mxu0
        %2522 = vdwg.mxu0
        %v2523 = vpack.c.bf16 %v2518, %v2518
        %s2524 = scalar_lea.vmem %s1178, 4
        %v2525 = vld [vmem:[%s2524] sm:$0xf]
        %v2527 = vsel %vm1305, %v2523, 0
        %v2530 = vsel %vm1401, %v2525, 0
        %2532 = vmatprep.subr.bf16.mxu0 0
        %2533 = vmatpush1.bf16.msra.mxu0 %v2530
        %2534 = vmatprep.subr.bf16.mxu0 0
        %2535 = vmatpush1.bf16.msra.mxu0 0
        %2536 = vmatprep.subr.bf16.mxu0 0
        %2537 = vmatpush1.bf16.msra.mxu0 0
        %2538 = vmatprep.subr.bf16.mxu0 0
        %2539 = vmatpush1.bf16.msra.mxu0 0
        %2540 = vmatprep.subr.bf16.mxu0 0
        %2541 = vmatpush1.bf16.msra.mxu0 0
        %2542 = vmatprep.subr.bf16.mxu0 0
        %2543 = vmatpush1.bf16.msra.mxu0 0
        %2544 = vmatprep.subr.bf16.mxu0 0
        %2545 = vmatpush1.bf16.msra.mxu0 0
        %2546 = vmatprep.subr.bf16.mxu0 0
        %2547 = vmatpush1.bf16.msra.mxu0 0
        %2548 = vmatprep.subr.bf16.mxu0 0
        %2549 = vmatpush1.bf16.msra.mxu0 0
        %2550 = vmatprep.subr.bf16.mxu0 0
        %2551 = vmatpush1.bf16.msra.mxu0 0
        %2552 = vmatprep.subr.bf16.mxu0 0
        %2553 = vmatpush1.bf16.msra.mxu0 0
        %2554 = vmatprep.subr.bf16.mxu0 0
        %2555 = vmatpush1.bf16.msra.mxu0 0
        %2556 = vmatprep.subr.bf16.mxu0 0
        %2557 = vmatpush1.bf16.msra.mxu0 0
        %2558 = vmatprep.subr.bf16.mxu0 0
        %2559 = vmatpush1.bf16.msra.mxu0 0
        %2560 = vmatprep.subr.bf16.mxu0 0
        %2561 = vmatpush1.bf16.msra.mxu0 0
        %2562 = vmatprep.subr.bf16.mxu0 0
        %2563 = vmatpush1.bf16.msra.mxu0 0
        %2564 = vmatprep.mubr.bf16.mxu0 0
        %2565 = vmatmul.mubr.bf16.gmra.mrb[0].mxu0 %v2527
        %v2566 = vpop.f32.mrb[0].mxu0
        %v2567 = vadd.f32 0.0, %v2566
        %v2568 = vpop.f32.mrb[0].mxu0
        %v2569 = vpop.f32.mrb[0].mxu0
        %v2570 = vpop.f32.mrb[0].mxu0
        %2571 = vdwg.mxu0
        %v2573 = vsel %vm1305, %v2381, 0
        %v2576 = vsel %vm1401, %v2382, 0
        %2578 = vmatprep.subr.bf16.mxu0 0
        %2579 = vmatpush1.bf16.msra.mxu0 %v2576
        %2580 = vmatprep.subr.bf16.mxu0 0
        %2581 = vmatpush1.bf16.msra.mxu0 0
        %2582 = vmatprep.subr.bf16.mxu0 0
        %2583 = vmatpush1.bf16.msra.mxu0 0
        %2584 = vmatprep.subr.bf16.mxu0 0
        %2585 = vmatpush1.bf16.msra.mxu0 0
        %2586 = vmatprep.subr.bf16.mxu0 0
        %2587 = vmatpush1.bf16.msra.mxu0 0
        %2588 = vmatprep.subr.bf16.mxu0 0
        %2589 = vmatpush1.bf16.msra.mxu0 0
        %2590 = vmatprep.subr.bf16.mxu0 0
        %2591 = vmatpush1.bf16.msra.mxu0 0
        %2592 = vmatprep.subr.bf16.mxu0 0
        %2593 = vmatpush1.bf16.msra.mxu0 0
        %2594 = vmatprep.subr.bf16.mxu0 0
        %2595 = vmatpush1.bf16.msra.mxu0 0
        %2596 = vmatprep.subr.bf16.mxu0 0
        %2597 = vmatpush1.bf16.msra.mxu0 0
        %2598 = vmatprep.subr.bf16.mxu0 0
        %2599 = vmatpush1.bf16.msra.mxu0 0
        %2600 = vmatprep.subr.bf16.mxu0 0
        %2601 = vmatpush1.bf16.msra.mxu0 0
        %2602 = vmatprep.subr.bf16.mxu0 0
        %2603 = vmatpush1.bf16.msra.mxu0 0
        %2604 = vmatprep.subr.bf16.mxu0 0
        %2605 = vmatpush1.bf16.msra.mxu0 0
        %2606 = vmatprep.subr.bf16.mxu0 0
        %2607 = vmatpush1.bf16.msra.mxu0 0
        %2608 = vmatprep.subr.bf16.mxu0 0
        %2609 = vmatpush1.bf16.msra.mxu0 0
        %2610 = vmatprep.mubr.bf16.mxu0 0
        %2611 = vmatmul.mubr.bf16.gmra.mrb[0].mxu0 %v2573
        %v2612 = vpop.f32.mrb[0].mxu0
        %v2613 = vadd.f32 %v2567, %v2612
        %v2614 = vpop.f32.mrb[0].mxu0
        %v2615 = vpop.f32.mrb[0].mxu0
        %v2616 = vpop.f32.mrb[0].mxu0
        %2617 = vdwg.mxu0
        %2618 = vrot.lane.b32.xlu0 %v2164, 112
        %v2619 = vpop.permute.xlu0 %2618
        %2620 = vrot.lane.b32.xlu0 %v2230, 112
        %v2621 = vpop.permute.xlu0 %2620
        %v2622 = vsel %vm1305, %v2619, 0
        %v2624 = vsel %vm1305, %v2621, 0
        %2626 = vmatprep.subr.mxu0 0.0
        %2627 = vmatpush1.xpose.msra.mxu0 %v2624
        %2628 = vmatprep.subr.mxu0 0.0
        %2629 = vmatpush1.xpose.msra.mxu0 0.0
        %2630 = vmatprep.subr.mxu0 0.0
        %2631 = vmatpush1.xpose.msra.mxu0 0.0
        %2632 = vmatprep.subr.mxu0 0.0
        %2633 = vmatpush1.xpose.msra.mxu0 0.0
        %2634 = vmatprep.subr.mxu0 0.0
        %2635 = vmatpush1.xpose.msra.mxu0 0.0
        %2636 = vmatprep.subr.mxu0 0.0
        %2637 = vmatpush1.xpose.msra.mxu0 0.0
        %2638 = vmatprep.subr.mxu0 0.0
        %2639 = vmatpush1.xpose.msra.mxu0 0.0
        %2640 = vmatprep.subr.mxu0 0.0
        %2641 = vmatpush1.xpose.msra.mxu0 0.0
        %2642 = vmatprep.subr.mxu0 0.0
        %2643 = vmatpush1.xpose.msra.mxu0 0.0
        %2644 = vmatprep.subr.mxu0 0.0
        %2645 = vmatpush1.xpose.msra.mxu0 0.0
        %2646 = vmatprep.subr.mxu0 0.0
        %2647 = vmatpush1.xpose.msra.mxu0 0.0
        %2648 = vmatprep.subr.mxu0 0.0
        %2649 = vmatpush1.xpose.msra.mxu0 0.0
        %2650 = vmatprep.subr.mxu0 0.0
        %2651 = vmatpush1.xpose.msra.mxu0 0.0
        %2652 = vmatprep.subr.mxu0 0.0
        %2653 = vmatpush1.xpose.msra.mxu0 0.0
        %2654 = vmatprep.subr.mxu0 0.0
        %2655 = vmatpush1.xpose.msra.mxu0 0.0
        %2656 = vmatprep.subr.mxu0 0.0
        %2657 = vmatpush1.xpose.msra.mxu0 0.0
        %2658 = vmatprep.subr.mxu0 0.0
        %2659 = vmatpush1.xpose.msra.mxu0 0.0
        %2660 = vmatprep.subr.mxu0 0.0
        %2661 = vmatpush1.xpose.msra.mxu0 0.0
        %2662 = vmatprep.subr.mxu0 0.0
        %2663 = vmatpush1.xpose.msra.mxu0 0.0
        %2664 = vmatprep.subr.mxu0 0.0
        %2665 = vmatpush1.xpose.msra.mxu0 0.0
        %2666 = vmatprep.subr.mxu0 0.0
        %2667 = vmatpush1.xpose.msra.mxu0 0.0
        %2668 = vmatprep.subr.mxu0 0.0
        %2669 = vmatpush1.xpose.msra.mxu0 0.0
        %2670 = vmatprep.subr.mxu0 0.0
        %2671 = vmatpush1.xpose.msra.mxu0 0.0
        %2672 = vmatprep.subr.mxu0 0.0
        %2673 = vmatpush1.xpose.msra.mxu0 0.0
        %2674 = vmatprep.subr.mxu0 0.0
        %2675 = vmatpush1.xpose.msra.mxu0 0.0
        %2676 = vmatprep.subr.mxu0 0.0
        %2677 = vmatpush1.xpose.msra.mxu0 0.0
        %2678 = vmatprep.subr.mxu0 0.0
        %2679 = vmatpush1.xpose.msra.mxu0 0.0
        %2680 = vmatprep.subr.mxu0 0.0
        %2681 = vmatpush1.xpose.msra.mxu0 0.0
        %2682 = vmatprep.subr.mxu0 0.0
        %2683 = vmatpush1.xpose.msra.mxu0 0.0
        %2684 = vmatprep.subr.mxu0 0.0
        %2685 = vmatpush1.xpose.msra.mxu0 0.0
        %2686 = vmatprep.subr.mxu0 0.0
        %2687 = vmatpush1.xpose.msra.mxu0 0.0
        %2688 = vmatprep.subr.mxu0 0.0
        %2689 = vmatpush1.xpose.msra.mxu0 0.0
        %2690 = vmatprep.mubr.f32.mxu0 0.0
        %2691 = vmatmul.mubr.f32.gmra.mrb[0].mxu0 %v2622
        %v2692 = vpop.f32.mrb[0].mxu0
        %v2693 = vadd.f32 0.0, %v2692
        %v2694 = vpop.f32.mrb[0].mxu0
        %2695 = vdwg.mxu0
        %v2696 = vmul.f32 %v2693, 0.35355338
        %v2697 = vadd.f32 %v2696, %v2316
        %v2698 = vsel %vm1305, %v2697, -inf
        %2699 = vmax.xlane.f32.xlu0 %v2698
        %v2700 = vpop.xlane.xlu0 %2699
        %v2701 = vsub.f32 %v2697, %v2700
        %v2702 = vmul.f32 %v2701, 1.442695
        %v2703 = vpow.pop %v2702
        %v2704 = vsel %vm1305, %v2703, 0.0
        %2705 = vadd.xlane.f32.xlu0 %v2704
        %v2706 = vpop.xlane.xlu0 %2705
        %v2707 = vrcp.pop %v2706
        %v2708 = vmul.f32 %v2703, %v2707
        %v2709 = vpack.c.bf16 %v2708, %v2708
        %2710 = vrot.lane.b32.xlu0 %v2331, 80
        %v2711 = vpop.permute.xlu0 %2710
        %v2713 = vsel %vm1305, %v2709, 0
        %v2716 = vsel %vm1401, %v2711, 0
        %2718 = vmatprep.subr.bf16.mxu0 0
        %2719 = vmatpush1.bf16.msra.mxu0 %v2716
        %2720 = vmatprep.subr.bf16.mxu0 0
        %2721 = vmatpush1.bf16.msra.mxu0 0
        %2722 = vmatprep.subr.bf16.mxu0 0
        %2723 = vmatpush1.bf16.msra.mxu0 0
        %2724 = vmatprep.subr.bf16.mxu0 0
        %2725 = vmatpush1.bf16.msra.mxu0 0
        %2726 = vmatprep.subr.bf16.mxu0 0
        %2727 = vmatpush1.bf16.msra.mxu0 0
        %2728 = vmatprep.subr.bf16.mxu0 0
        %2729 = vmatpush1.bf16.msra.mxu0 0
        %2730 = vmatprep.subr.bf16.mxu0 0
        %2731 = vmatpush1.bf16.msra.mxu0 0
        %2732 = vmatprep.subr.bf16.mxu0 0
        %2733 = vmatpush1.bf16.msra.mxu0 0
        %2734 = vmatprep.subr.bf16.mxu0 0
        %2735 = vmatpush1.bf16.msra.mxu0 0
        %2736 = vmatprep.subr.bf16.mxu0 0
        %2737 = vmatpush1.bf16.msra.mxu0 0
        %2738 = vmatprep.subr.bf16.mxu0 0
        %2739 = vmatpush1.bf16.msra.mxu0 0
        %2740 = vmatprep.subr.bf16.mxu0 0
        %2741 = vmatpush1.bf16.msra.mxu0 0
        %2742 = vmatprep.subr.bf16.mxu0 0
        %2743 = vmatpush1.bf16.msra.mxu0 0
        %2744 = vmatprep.subr.bf16.mxu0 0
        %2745 = vmatpush1.bf16.msra.mxu0 0
        %2746 = vmatprep.subr.bf16.mxu0 0
        %2747 = vmatpush1.bf16.msra.mxu0 0
        %2748 = vmatprep.subr.bf16.mxu0 0
        %2749 = vmatpush1.bf16.msra.mxu0 0
        %2750 = vmatprep.mubr.bf16.mxu0 0
        %2751 = vmatmul.mubr.bf16.gmra.mrb[0].mxu0 %v2713
        %v2752 = vpop.f32.mrb[0].mxu0
        %v2753 = vadd.f32 0.0, %v2752
        %v2754 = vpop.f32.mrb[0].mxu0
        %v2755 = vpop.f32.mrb[0].mxu0
        %v2756 = vpop.f32.mrb[0].mxu0
        %2757 = vdwg.mxu0
        %v2758 = vpack.c.bf16 %v2753, %v2753
        %s2759 = scalar_lea.vmem %s1178, 8
        %v2760 = vld [vmem:[%s2759] sm:$0xf]
        %v2762 = vsel %vm1305, %v2758, 0
        %v2765 = vsel %vm1401, %v2760, 0
        %2767 = vmatprep.subr.bf16.mxu0 0
        %2768 = vmatpush1.bf16.msra.mxu0 %v2765
        %2769 = vmatprep.subr.bf16.mxu0 0
        %2770 = vmatpush1.bf16.msra.mxu0 0
        %2771 = vmatprep.subr.bf16.mxu0 0
        %2772 = vmatpush1.bf16.msra.mxu0 0
        %2773 = vmatprep.subr.bf16.mxu0 0
        %2774 = vmatpush1.bf16.msra.mxu0 0
        %2775 = vmatprep.subr.bf16.mxu0 0
        %2776 = vmatpush1.bf16.msra.mxu0 0
        %2777 = vmatprep.subr.bf16.mxu0 0
        %2778 = vmatpush1.bf16.msra.mxu0 0
        %2779 = vmatprep.subr.bf16.mxu0 0
        %2780 = vmatpush1.bf16.msra.mxu0 0
        %2781 = vmatprep.subr.bf16.mxu0 0
        %2782 = vmatpush1.bf16.msra.mxu0 0
        %2783 = vmatprep.subr.bf16.mxu0 0
        %2784 = vmatpush1.bf16.msra.mxu0 0
        %2785 = vmatprep.subr.bf16.mxu0 0
        %2786 = vmatpush1.bf16.msra.mxu0 0
        %2787 = vmatprep.subr.bf16.mxu0 0
        %2788 = vmatpush1.bf16.msra.mxu0 0
        %2789 = vmatprep.subr.bf16.mxu0 0
        %2790 = vmatpush1.bf16.msra.mxu0 0
        %2791 = vmatprep.subr.bf16.mxu0 0
        %2792 = vmatpush1.bf16.msra.mxu0 0
        %2793 = vmatprep.subr.bf16.mxu0 0
        %2794 = vmatpush1.bf16.msra.mxu0 0
        %2795 = vmatprep.subr.bf16.mxu0 0
        %2796 = vmatpush1.bf16.msra.mxu0 0
        %2797 = vmatprep.subr.bf16.mxu0 0
        %2798 = vmatpush1.bf16.msra.mxu0 0
        %2799 = vmatprep.mubr.bf16.mxu0 0
        %2800 = vmatmul.mubr.bf16.gmra.mrb[0].mxu0 %v2762
        %v2801 = vpop.f32.mrb[0].mxu0
        %v2802 = vadd.f32 0.0, %v2801
        %v2803 = vpop.f32.mrb[0].mxu0
        %v2804 = vpop.f32.mrb[0].mxu0
        %v2805 = vpop.f32.mrb[0].mxu0
        %2806 = vdwg.mxu0
        %v2807 = vadd.f32 %v2613, %v2802
        %2808 = vrot.lane.b32.xlu0 %v2164, 104
        %v2809 = vpop.permute.xlu0 %2808
        %2810 = vrot.lane.b32.xlu0 %v2230, 104
        %v2811 = vpop.permute.xlu0 %2810
        %v2812 = vsel %vm1305, %v2809, 0
        %v2814 = vsel %vm1305, %v2811, 0
        %2816 = vmatprep.subr.mxu0 0.0
        %2817 = vmatpush1.xpose.msra.mxu0 %v2814
        %2818 = vmatprep.subr.mxu0 0.0
        %2819 = vmatpush1.xpose.msra.mxu0 0.0
        %2820 = vmatprep.subr.mxu0 0.0
        %2821 = vmatpush1.xpose.msra.mxu0 0.0
        %2822 = vmatprep.subr.mxu0 0.0
        %2823 = vmatpush1.xpose.msra.mxu0 0.0
        %2824 = vmatprep.subr.mxu0 0.0
        %2825 = vmatpush1.xpose.msra.mxu0 0.0
        %2826 = vmatprep.subr.mxu0 0.0
        %2827 = vmatpush1.xpose.msra.mxu0 0.0
        %2828 = vmatprep.subr.mxu0 0.0
        %2829 = vmatpush1.xpose.msra.mxu0 0.0
        %2830 = vmatprep.subr.mxu0 0.0
        %2831 = vmatpush1.xpose.msra.mxu0 0.0
        %2832 = vmatprep.subr.mxu0 0.0
        %2833 = vmatpush1.xpose.msra.mxu0 0.0
        %2834 = vmatprep.subr.mxu0 0.0
        %2835 = vmatpush1.xpose.msra.mxu0 0.0
        %2836 = vmatprep.subr.mxu0 0.0
        %2837 = vmatpush1.xpose.msra.mxu0 0.0
        %2838 = vmatprep.subr.mxu0 0.0
        %2839 = vmatpush1.xpose.msra.mxu0 0.0
        %2840 = vmatprep.subr.mxu0 0.0
        %2841 = vmatpush1.xpose.msra.mxu0 0.0
        %2842 = vmatprep.subr.mxu0 0.0
        %2843 = vmatpush1.xpose.msra.mxu0 0.0
        %2844 = vmatprep.subr.mxu0 0.0
        %2845 = vmatpush1.xpose.msra.mxu0 0.0
        %2846 = vmatprep.subr.mxu0 0.0
        %2847 = vmatpush1.xpose.msra.mxu0 0.0
        %2848 = vmatprep.subr.mxu0 0.0
        %2849 = vmatpush1.xpose.msra.mxu0 0.0
        %2850 = vmatprep.subr.mxu0 0.0
        %2851 = vmatpush1.xpose.msra.mxu0 0.0
        %2852 = vmatprep.subr.mxu0 0.0
        %2853 = vmatpush1.xpose.msra.mxu0 0.0
        %2854 = vmatprep.subr.mxu0 0.0
        %2855 = vmatpush1.xpose.msra.mxu0 0.0
        %2856 = vmatprep.subr.mxu0 0.0
        %2857 = vmatpush1.xpose.msra.mxu0 0.0
        %2858 = vmatprep.subr.mxu0 0.0
        %2859 = vmatpush1.xpose.msra.mxu0 0.0
        %2860 = vmatprep.subr.mxu0 0.0
        %2861 = vmatpush1.xpose.msra.mxu0 0.0
        %2862 = vmatprep.subr.mxu0 0.0
        %2863 = vmatpush1.xpose.msra.mxu0 0.0
        %2864 = vmatprep.subr.mxu0 0.0
        %2865 = vmatpush1.xpose.msra.mxu0 0.0
        %2866 = vmatprep.subr.mxu0 0.0
        %2867 = vmatpush1.xpose.msra.mxu0 0.0
        %2868 = vmatprep.subr.mxu0 0.0
        %2869 = vmatpush1.xpose.msra.mxu0 0.0
        %2870 = vmatprep.subr.mxu0 0.0
        %2871 = vmatpush1.xpose.msra.mxu0 0.0
        %2872 = vmatprep.subr.mxu0 0.0
        %2873 = vmatpush1.xpose.msra.mxu0 0.0
        %2874 = vmatprep.subr.mxu0 0.0
        %2875 = vmatpush1.xpose.msra.mxu0 0.0
        %2876 = vmatprep.subr.mxu0 0.0
        %2877 = vmatpush1.xpose.msra.mxu0 0.0
        %2878 = vmatprep.subr.mxu0 0.0
        %2879 = vmatpush1.xpose.msra.mxu0 0.0
        %2880 = vmatprep.mubr.f32.mxu0 0.0
        %2881 = vmatmul.mubr.f32.gmra.mrb[0].mxu0 %v2812
        %v2882 = vpop.f32.mrb[0].mxu0
        %v2883 = vadd.f32 0.0, %v2882
        %v2884 = vpop.f32.mrb[0].mxu0
        %2885 = vdwg.mxu0
        %v2886 = vmul.f32 %v2883, 0.35355338
        %v2887 = vadd.f32 %v2886, %v2316
        %v2888 = vsel %vm1305, %v2887, -inf
        %2889 = vmax.xlane.f32.xlu0 %v2888
        %v2890 = vpop.xlane.xlu0 %2889
        %v2891 = vsub.f32 %v2887, %v2890
        %v2892 = vmul.f32 %v2891, 1.442695
        %v2893 = vpow.pop %v2892
        %v2894 = vsel %vm1305, %v2893, 0.0
        %2895 = vadd.xlane.f32.xlu0 %v2894
        %v2896 = vpop.xlane.xlu0 %2895
        %v2897 = vrcp.pop %v2896
        %v2898 = vmul.f32 %v2893, %v2897
        %v2899 = vpack.c.bf16 %v2898, %v2898
        %2900 = vrot.lane.b32.xlu0 %v2331, 72
        %v2901 = vpop.permute.xlu0 %2900
        %v2903 = vsel %vm1305, %v2899, 0
        %v2906 = vsel %vm1401, %v2901, 0
        %2908 = vmatprep.subr.bf16.mxu0 0
        %2909 = vmatpush1.bf16.msra.mxu0 %v2906
        %2910 = vmatprep.subr.bf16.mxu0 0
        %2911 = vmatpush1.bf16.msra.mxu0 0
        %2912 = vmatprep.subr.bf16.mxu0 0
        %2913 = vmatpush1.bf16.msra.mxu0 0
        %2914 = vmatprep.subr.bf16.mxu0 0
        %2915 = vmatpush1.bf16.msra.mxu0 0
        %2916 = vmatprep.subr.bf16.mxu0 0
        %2917 = vmatpush1.bf16.msra.mxu0 0
        %2918 = vmatprep.subr.bf16.mxu0 0
        %2919 = vmatpush1.bf16.msra.mxu0 0
        %2920 = vmatprep.subr.bf16.mxu0 0
        %2921 = vmatpush1.bf16.msra.mxu0 0
        %2922 = vmatprep.subr.bf16.mxu0 0
        %2923 = vmatpush1.bf16.msra.mxu0 0
        %2924 = vmatprep.subr.bf16.mxu0 0
        %2925 = vmatpush1.bf16.msra.mxu0 0
        %2926 = vmatprep.subr.bf16.mxu0 0
        %2927 = vmatpush1.bf16.msra.mxu0 0
        %2928 = vmatprep.subr.bf16.mxu0 0
        %2929 = vmatpush1.bf16.msra.mxu0 0
        %2930 = vmatprep.subr.bf16.mxu0 0
        %2931 = vmatpush1.bf16.msra.mxu0 0
        %2932 = vmatprep.subr.bf16.mxu0 0
        %2933 = vmatpush1.bf16.msra.mxu0 0
        %2934 = vmatprep.subr.bf16.mxu0 0
        %2935 = vmatpush1.bf16.msra.mxu0 0
        %2936 = vmatprep.subr.bf16.mxu0 0
        %2937 = vmatpush1.bf16.msra.mxu0 0
        %2938 = vmatprep.subr.bf16.mxu0 0
        %2939 = vmatpush1.bf16.msra.mxu0 0
        %2940 = vmatprep.mubr.bf16.mxu0 0
        %2941 = vmatmul.mubr.bf16.gmra.mrb[0].mxu0 %v2903
        %v2942 = vpop.f32.mrb[0].mxu0
        %v2943 = vadd.f32 0.0, %v2942
        %v2944 = vpop.f32.mrb[0].mxu0
        %v2945 = vpop.f32.mrb[0].mxu0
        %v2946 = vpop.f32.mrb[0].mxu0
        %2947 = vdwg.mxu0
        %v2948 = vpack.c.bf16 %v2943, %v2943
        %s2949 = scalar_lea.vmem %s1178, 12
        %v2950 = vld [vmem:[%s2949] sm:$0xf]
        %v2952 = vsel %vm1305, %v2948, 0
        %v2955 = vsel %vm1401, %v2950, 0
        %2957 = vmatprep.subr.bf16.mxu0 0
        %2958 = vmatpush1.bf16.msra.mxu0 %v2955
        %2959 = vmatprep.subr.bf16.mxu0 0
        %2960 = vmatpush1.bf16.msra.mxu0 0
        %2961 = vmatprep.subr.bf16.mxu0 0
        %2962 = vmatpush1.bf16.msra.mxu0 0
        %2963 = vmatprep.subr.bf16.mxu0 0
        %2964 = vmatpush1.bf16.msra.mxu0 0
        %2965 = vmatprep.subr.bf16.mxu0 0
        %2966 = vmatpush1.bf16.msra.mxu0 0
        %2967 = vmatprep.subr.bf16.mxu0 0
        %2968 = vmatpush1.bf16.msra.mxu0 0
        %2969 = vmatprep.subr.bf16.mxu0 0
        %2970 = vmatpush1.bf16.msra.mxu0 0
        %2971 = vmatprep.subr.bf16.mxu0 0
        %2972 = vmatpush1.bf16.msra.mxu0 0
        %2973 = vmatprep.subr.bf16.mxu0 0
        %2974 = vmatpush1.bf16.msra.mxu0 0
        %2975 = vmatprep.subr.bf16.mxu0 0
        %2976 = vmatpush1.bf16.msra.mxu0 0
        %2977 = vmatprep.subr.bf16.mxu0 0
        %2978 = vmatpush1.bf16.msra.mxu0 0
        %2979 = vmatprep.subr.bf16.mxu0 0
        %2980 = vmatpush1.bf16.msra.mxu0 0
        %2981 = vmatprep.subr.bf16.mxu0 0
        %2982 = vmatpush1.bf16.msra.mxu0 0
        %2983 = vmatprep.subr.bf16.mxu0 0
        %2984 = vmatpush1.bf16.msra.mxu0 0
        %2985 = vmatprep.subr.bf16.mxu0 0
        %2986 = vmatpush1.bf16.msra.mxu0 0
        %2987 = vmatprep.subr.bf16.mxu0 0
        %2988 = vmatpush1.bf16.msra.mxu0 0
        %2989 = vmatprep.mubr.bf16.mxu0 0
        %2990 = vmatmul.mubr.bf16.gmra.mrb[0].mxu0 %v2952
        %v2991 = vpop.f32.mrb[0].mxu0
        %v2992 = vadd.f32 0.0, %v2991
        %v2993 = vpop.f32.mrb[0].mxu0
        %v2994 = vpop.f32.mrb[0].mxu0
        %v2995 = vpop.f32.mrb[0].mxu0
        %2996 = vdwg.mxu0
        %v2997 = vadd.f32 %v2807, %v2992
        %v2998 = vadd.f32 %v2070, %v2997
        %v2999 = vld [vmem:[%s971] sm:$0x1]
        %v3001 = vlaneseq
        %v3002 = vshrl.u32 %v3001, 7
        %v3003 = vsub.s32 0, %v3002
        %v3004 = vrot.slane %v2999, %v3003
        %v3006 = vadd.f32 %v2998, %v3004
        %s3007 = scalar_lea.vmem %s1182, 2
        %v3008 = vld [vmem:[%s3007] sm:$0x1]
        %s3009 = scalar_lea.vmem %s1186, 2
        %v3010 = vld [vmem:[%s3009] sm:$0x1]
        %v3011 = vsel %vm1206, %v3006, 0.0
        %3012 = vadd.xlane.f32.xlu0 %v3011
        %v3013 = vpop.xlane.xlu0 %3012
        %v3014 = vmul.f32 %v3013, %v1210
        %v3015 = vsub.f32 %v3006, %v3014
        %v3016 = vmul.f32 %v3015, %v3015
        %v3017 = vsel %vm1206, %v3016, 0.0
        %3018 = vadd.xlane.f32.xlu0 %v3017
        %v3019 = vpop.xlane.xlu0 %3018
        %v3020 = vmul.f32 %v3019, %v1210
        %v3021 = vadd.f32 %v3020, 1e-06
        %v3022 = vrsqrt.pop %v3021
        %v3023 = vmul.f32 %v3015, %v3022
        %v3025 = vlaneseq
        %v3026 = vshrl.u32 %v3025, 7
        %v3027 = vsub.s32 0, %v3026
        %v3028 = vrot.slane %v3008, %v3027
        %v3030 = vmul.f32 %v3023, %v3028
        %v3032 = vlaneseq
        %v3033 = vshrl.u32 %v3032, 7
        %v3034 = vsub.s32 0, %v3033
        %v3035 = vrot.slane %v3010, %v3034
        %v3037 = vadd.f32 %v3030, %v3035
        %v3038 = vpack.c.bf16 %v3037, %v3037
        %v3039 = vld [vmem:[%s980] sm:$0xf]
        %v3040 = vld [vmem:[%s980 + $0x4] sm:$0xf]
        %v3041 = vld [vmem:[%s980 + $0x8] sm:$0xf]
        %v3042 = vld [vmem:[%s980 + $0xc] sm:$0xf]
        %v3043 = vld [vmem:[%s988] sm:$0x1]
        %v3045 = vlaneseq
        %v3046 = vshrl.u32 %v3045, 7
        %v3047 = vsub.s32 0, %v3046
        %v3048 = vrot.slane %v3043, %v3047
        %v3054 = vunpack.c.l.b16 %v3039
        %v3055 = vunpack.c.l.b16 %v3040
        %v3056 = vunpack.c.l.b16 %v3041
        %v3057 = vunpack.c.l.b16 %v3042
        %v3058 = vpack.c.b16 %v3055, %v3054
        %v3059 = vpack.c.b16 %v3057, %v3056
        %v3063 = vsel %vm1206, %v3038, 0
        %3065 = vmatprep.subr.bf16.mxu0 0
        %3066 = vmatpush1.bf16.msra.mxu0 %v3058
        %3067 = vmatprep.subr.bf16.mxu0 0
        %3068 = vmatpush1.bf16.msra.mxu0 %v3059
        %3069 = vmatprep.subr.bf16.mxu0 0
        %3070 = vmatpush1.bf16.msra.mxu0 0
        %3071 = vmatprep.subr.bf16.mxu0 0
        %3072 = vmatpush1.bf16.msra.mxu0 0
        %3073 = vmatprep.subr.bf16.mxu0 0
        %3074 = vmatpush1.bf16.msra.mxu0 0
        %3075 = vmatprep.subr.bf16.mxu0 0
        %3076 = vmatpush1.bf16.msra.mxu0 0
        %3077 = vmatprep.subr.bf16.mxu0 0
        %3078 = vmatpush1.bf16.msra.mxu0 0
        %3079 = vmatprep.subr.bf16.mxu0 0
        %3080 = vmatpush1.bf16.msra.mxu0 0
        %3081 = vmatprep.subr.bf16.mxu0 0
        %3082 = vmatpush1.bf16.msra.mxu0 0
        %3083 = vmatprep.subr.bf16.mxu0 0
        %3084 = vmatpush1.bf16.msra.mxu0 0
        %3085 = vmatprep.subr.bf16.mxu0 0
        %3086 = vmatpush1.bf16.msra.mxu0 0
        %3087 = vmatprep.subr.bf16.mxu0 0
        %3088 = vmatpush1.bf16.msra.mxu0 0
        %3089 = vmatprep.subr.bf16.mxu0 0
        %3090 = vmatpush1.bf16.msra.mxu0 0
        %3091 = vmatprep.subr.bf16.mxu0 0
        %3092 = vmatpush1.bf16.msra.mxu0 0
        %3093 = vmatprep.subr.bf16.mxu0 0
        %3094 = vmatpush1.bf16.msra.mxu0 0
        %3095 = vmatprep.subr.bf16.mxu0 0
        %3096 = vmatpush1.bf16.msra.mxu0 0
        %3097 = vmatprep.mubr.bf16.mxu0 0
        %3098 = vmatmul.mubr.bf16.gmra.mrb[0].mxu0 %v3063
        %v3099 = vpop.f32.mrb[0].mxu0
        %v3100 = vadd.f32 %v3048, %v3099
        %v3101 = vpop.f32.mrb[0].mxu0
        %v3102 = vpop.f32.mrb[0].mxu0
        %v3103 = vpop.f32.mrb[0].mxu0
        %3104 = vdwg.mxu0
        %v3105 = vmax.f32 %v3100, 0.0
        %v3106 = vpack.c.bf16 %v3105, %v3105
        %v3107 = vld [vmem:[%s1191] sm:$0xf]
        %v3108 = vld [vmem:[%s1191 + $0x4] sm:$0xf]
        %v3109 = vld [vmem:[%s1191 + $0x8] sm:$0xf]
        %v3110 = vld [vmem:[%s1191 + $0xc] sm:$0xf]
        %v3111 = vld [vmem:[%s1191 + $0x10] sm:$0xf]
        %v3112 = vld [vmem:[%s1191 + $0x14] sm:$0xf]
        %v3113 = vld [vmem:[%s1191 + $0x18] sm:$0xf]
        %v3114 = vld [vmem:[%s1191 + $0x1c] sm:$0xf]
        %v3123 = vunpack.c.l.b16 %v3107
        %v3124 = vunpack.c.l.b16 %v3108
        %v3125 = vunpack.c.l.b16 %v3109
        %v3126 = vunpack.c.l.b16 %v3110
        %v3127 = vunpack.c.l.b16 %v3111
        %v3128 = vunpack.c.l.b16 %v3112
        %v3129 = vunpack.c.l.b16 %v3113
        %v3130 = vunpack.c.l.b16 %v3114
        %v3131 = vpack.c.b16 %v3124, %v3123
        %v3132 = vpack.c.b16 %v3126, %v3125
        %v3133 = vpack.c.b16 %v3128, %v3127
        %v3134 = vpack.c.b16 %v3130, %v3129
        %vm3139 = vcmask 523264
        %v3141 = vsel %vm3139, %v3106, 0
        %3143 = vmatprep.subr.bf16.mxu0 0
        %3144 = vmatpush1.bf16.msra.mxu0 %v3131
        %3145 = vmatprep.subr.bf16.mxu0 0
        %3146 = vmatpush1.bf16.msra.mxu0 %v3132
        %3147 = vmatprep.subr.bf16.mxu0 0
        %3148 = vmatpush1.bf16.msra.mxu0 %v3133
        %3149 = vmatprep.subr.bf16.mxu0 0
        %3150 = vmatpush1.bf16.msra.mxu0 %v3134
        %3151 = vmatprep.subr.bf16.mxu0 0
        %3152 = vmatpush1.bf16.msra.mxu0 0
        %3153 = vmatprep.subr.bf16.mxu0 0
        %3154 = vmatpush1.bf16.msra.mxu0 0
        %3155 = vmatprep.subr.bf16.mxu0 0
        %3156 = vmatpush1.bf16.msra.mxu0 0
        %3157 = vmatprep.subr.bf16.mxu0 0
        %3158 = vmatpush1.bf16.msra.mxu0 0
        %3159 = vmatprep.subr.bf16.mxu0 0
        %3160 = vmatpush1.bf16.msra.mxu0 0
        %3161 = vmatprep.subr.bf16.mxu0 0
        %3162 = vmatpush1.bf16.msra.mxu0 0
        %3163 = vmatprep.subr.bf16.mxu0 0
        %3164 = vmatpush1.bf16.msra.mxu0 0
        %3165 = vmatprep.subr.bf16.mxu0 0
        %3166 = vmatpush1.bf16.msra.mxu0 0
        %3167 = vmatprep.subr.bf16.mxu0 0
        %3168 = vmatpush1.bf16.msra.mxu0 0
        %3169 = vmatprep.subr.bf16.mxu0 0
        %3170 = vmatpush1.bf16.msra.mxu0 0
        %3171 = vmatprep.subr.bf16.mxu0 0
        %3172 = vmatpush1.bf16.msra.mxu0 0
        %3173 = vmatprep.subr.bf16.mxu0 0
        %3174 = vmatpush1.bf16.msra.mxu0 0
        %3175 = vmatprep.mubr.bf16.mxu0 0
        %3176 = vmatmul.mubr.bf16.gmra.mrb[0].mxu0 %v3141
        %v3177 = vpop.f32.mrb[0].mxu0
        %v3178 = vadd.f32 0.0, %v3177
        %v3179 = vpop.f32.mrb[0].mxu0
        %v3180 = vpop.f32.mrb[0].mxu0
        %v3181 = vpop.f32.mrb[0].mxu0
        %3182 = vdwg.mxu0
        %v3183 = vadd.f32 %v3006, %v3178
        %v3184 = vld [vmem:[%s996] sm:$0x1]
        %v3186 = vlaneseq
        %v3187 = vshrl.u32 %v3186, 7
        %v3188 = vsub.s32 0, %v3187
        %v3189 = vrot.slane %v3184, %v3188
        %v3191 = vadd.f32 %v3183, %v3189
        %3192 = vst.msk [vmem:[#allocation2] sm:$0xff] %vm1206, %v3191
        %p3193 = scmp.eq.s32.totalorder %s57, 1
        // Predicated region
        $region153: #{decoder_forward.1} parent=107 // pred_check
          %p3194 = pneg %p3193
        $region154: #{decoder_forward.1} parent=107 // pred_check_branch
          %3196 = sbr.rel (%p3194) target = $region156
        $region155: #{decoder_forward.1} parent=107 // pred_region
          %v3197 = vld [vmem:[%s20] sm:$0x1]
          %v3198 = vld [vmem:[#allocation18] sm:$0x1]
          %v3199 = vsel %vm1206, %v3191, 0.0
          %3200 = vadd.xlane.f32.xlu0 %v3199
          %v3201 = vpop.xlane.xlu0 %3200
          %v3202 = vmul.f32 %v3201, %v1210
          %v3203 = vsub.f32 %v3191, %v3202
          %v3204 = vmul.f32 %v3203, %v3203
          %v3205 = vsel %vm1206, %v3204, 0.0
          %3206 = vadd.xlane.f32.xlu0 %v3205
          %v3207 = vpop.xlane.xlu0 %3206
          %v3208 = vmul.f32 %v3207, %v1210
          %v3209 = vadd.f32 %v3208, 1e-06
          %v3210 = vrsqrt.pop %v3209
          %v3211 = vmul.f32 %v3203, %v3210
          %v3213 = vlaneseq
          %v3214 = vshrl.u32 %v3213, 7
          %v3215 = vsub.s32 0, %v3214
          %v3216 = vrot.slane %v3197, %v3215
          %v3218 = vmul.f32 %v3211, %v3216
          %v3220 = vlaneseq
          %v3221 = vshrl.u32 %v3220, 7
          %v3222 = vsub.s32 0, %v3221
          %v3223 = vrot.slane %v3198, %v3222
          %v3225 = vadd.f32 %v3218, %v3223
          %3226 = vst.msk [vmem:[%s1142] sm:$0xff] %vm1206, %v3225
        $region156: #{decoder_forward.1} parent=107 // pred_fallthru
          _
        %s3227 = sand.u32 %s634, 1
        %s3228 = scalar_lea.sflag [#allocation5], %s3227
        %s3229 = sand.u32 %s634, 1
        %s3230 = smul.addr %s3229, 8
        %s3231 = scalar_lea.vmem [#allocation20], %s3230
        // Predicated region
        $region157: #{decoder_forward.1} parent=107 // pred_check
          %p3232 = pneg %p644
        $region158: #{decoder_forward.1} parent=107 // pred_check_branch
          %3234 = sbr.rel (%p3232) target = $region160
        $region159: #{decoder_forward.1} parent=107 // pred_region
          %s3236 = ssub.s32 128, 128
          %3237 = vsyncadd %s3228, %s3236
          %s3238 = smul.addr %s56, 128
          %s3239 = scalar_lea.hbm %s22, %s3238
          %s3241 = sshll.u32 %s3231, 4
          %s3242 = int_to_ptr.vmem [resolvable:$true] %s3241
          %3244 = dma.vmem_to_hbm [thread:$0]  %s3242, 128, %s3239, %s3228
        $region160: #{decoder_forward.1} parent=107 // pred_fallthru
          _
      $region108: #{decoder_forward.1} parent=5 // pred_fallthru
        _
      %p3245 = scmp.le.s32.totalorder 2, %s47
      // Predicated region
      $region161: #{decoder_forward.1} parent=5 // pred_check
        %p3246 = pneg %p3245
      $region162: #{decoder_forward.1} parent=5 // pred_check_branch
        %3248 = sbr.rel (%p3246) target = $region164
      $region163: #{decoder_forward.1} parent=5 // pred_region
        %s3249 = ssub.s32 %s47, 2
        // Predicated region
        $region165: #{decoder_forward.1} parent=163 // pred_check
          %p3250 = pneg %p650
        $region166: #{decoder_forward.1} parent=163 // pred_check_branch
          %3252 = sbr.rel (%p3250) target = $region168
        $region167: #{decoder_forward.1} parent=163 // pred_region
          %s3253 = sand.u32 %s635, 1
          %s3254 = scalar_lea.sflag [#allocation5], %s3253
          %s3255 = sand.u32 %s635, 1
          %s3256 = smul.addr %s3255, 8
          %s3257 = scalar_lea.vmem [#allocation20], %s3256
          %3258 = dma.done %s3254, 128
        $region168: #{decoder_forward.1} parent=163 // pred_fallthru
          _
      $region164: #{decoder_forward.1} parent=5 // pred_fallthru
        _
    $region6: #{decoder_forward.1} parent=1 // loop_footer
      %s51 = sadd.s32 1, %s47
    $region7: #{decoder_forward.1} parent=1 // loop_footer_branch
      %46 = sbr.rel target = $region3
    $region8: #{decoder_forward.1} parent=1 // loop_exit
      _
    %3259 = vsyncpa [#allocation4], 1
    %s3260 = scalar_lea.sflag [#allocation4], 1
    %3261 = vsyncpa %s3260, 1
    %3262 = vsyncpa [#allocation7], 1
    %s3263 = scalar_lea.sflag [#allocation7], 1
    %3264 = vsyncpa %s3263, 1
    %3265 = vsyncpa [#allocation10], 1
    %s3266 = scalar_lea.sflag [#allocation10], 1
    %3267 = vsyncpa %s3266, 1
    %3268 = vsyncpa [#allocation13], 1
    %s3269 = scalar_lea.sflag [#allocation13], 1
    %3270 = vsyncpa %s3269, 1
    %3271 = vsyncpa [#allocation16], 1
    %s3272 = scalar_lea.sflag [#allocation16], 1
    %3273 = vsyncpa %s3272, 1
    %3274 = vsyncpa [#allocation19], 1
    %3275 = vsyncpa [#allocation5], 1
    %s3276 = scalar_lea.sflag [#allocation5], 1
    %3277 = vsyncpa %s3276, 1

</llo_original>
